<compile_context>
chip_gen: v7x
topology: tpu7x:2x2x1
jax: 0.10.0
libtpu: 0.0.40
codegen_flags: <defaults>
</compile_context>

<pallas_src>
import jax
import jax.numpy as jnp
from jax.experimental import pallas as pl
from jax.experimental.pallas import tpu as pltpu


def _uncertainty_head_kernel(x_ref, pooled_ref, mask_ref, w1_ref, w2_ref,
                             wfc_ref, wfc2_ref, bcat_ref, out_ref):
    """One block of b_blk batch rows per grid step (whole block in VMEM)."""
    b_blk, T_pad, d_in = x_ref.shape

    x = x_ref[...]                                              # (b, T_pad, d_in)

    # --- attention hidden: one flat 2-D MXU dot (tile-aligned flatten) ---
    x_flat = x.reshape(b_blk * T_pad, d_in)                     # (b*T, d_in)
    h_flat = jnp.tanh(jnp.dot(x_flat, w1_ref[...],
                              preferred_element_type=jnp.float32))  # (b*T, d_h)

    # --- scores: lane reduce per row; T remains on the sublane axis ---
    s_flat = jnp.sum(h_flat * w2_ref[...], axis=-1, keepdims=True)  # (b*T, 1)
    s = s_flat.reshape(b_blk, T_pad, 1) + mask_ref[...]             # (b, T_pad, 1)

    # --- softmax over T (axis 1, sublane direction; no T relayout) ---
    m = jnp.max(s, axis=1, keepdims=True)                       # (b, 1, 1)
    e = jnp.exp(s - m)                                          # (b, T_pad, 1)
    denom = jnp.sum(e, axis=1, keepdims=True)                   # (b, 1, 1)
    attn = e * pl.reciprocal(denom, approx=True)                # (b, T_pad, 1)

    # --- attention pooling: residual[b,:] = sum_t attn[b,t] * x[b,t,:] ---
    residual = jnp.sum(attn * x, axis=1)                        # (b, d_in) f32

    # --- fused head: fc(residual) + fc2(pooled) — two dots, no concat ---
    out = (jnp.dot(residual, wfc_ref[...], preferred_element_type=jnp.float32)
           + jnp.dot(pooled_ref[...], wfc2_ref[...],
                     preferred_element_type=jnp.float32)
           + bcat_ref[...])
    out_ref[...] = out.astype(out_ref.dtype)                    # dense (b, d_out_p) store


def uncertainty_head_pallas(x, pooled, params, pad_mask=None, b_blk=None,
                            compute_dtype=jnp.float32):
    """x: (B, T, d_in) pre-pool features, pooled: (B, d_in) -> (B, d_out).

    pad_mask: optional (B, T) with 1 = keep, 0 = mask (masked_fill(-inf) before
    the T-softmax, as in the reference attention module).
    """
    B, T, d_in = x.shape
    d_h = params["w1"].shape[1]
    d_out = params["wfc"].shape[1]

    # Pad T to a sublane multiple so the in-kernel (b,T,d)->(b*T,d) flatten is
    # tile-aligned; padded tokens are masked out of the softmax below.
    T_pad = 8 * pl.cdiv(T, 8)
    # Lane-dense output features (unmasked full-tile stores).
    d_out_p = 128 * pl.cdiv(d_out, 128)

    # Batch blocking: default to a SINGLE grid step (single-TC parts gain
    # nothing from splitting this overhead-bound kernel); only block when the
    # double-buffered per-step footprint approaches ~16 MiB (safe under the
    # 32 MiB scoped VMEM default on v7x; ~2x more headroom on v5e/v6e).
    Bp8 = 8 * pl.cdiv(B, 8)
    if b_blk is None:
        bytes_per_row = 2 * 4 * (T_pad * d_in + T_pad + d_in + d_out_p)
        cap = max(8, ((16 * 1024 * 1024) // bytes_per_row) // 8 * 8)
        b_blk = min(Bp8, cap)
    else:
        b_blk = 8 * max(1, pl.cdiv(b_blk, 8))
    n_blk = pl.cdiv(Bp8, b_blk)
    Bp = n_blk * b_blk

    # Zero-padded batch rows are harmless (sliced off below).
    x = jnp.pad(x, ((0, Bp - B), (0, T_pad - T), (0, 0)))
    pooled = jnp.pad(pooled, ((0, Bp - B), (0, 0)))

    # Additive score mask: 0 for valid tokens, -1e30 for T-padding and for
    # user-masked positions (pad_mask: 1 = keep, 0 = mask).
    valid = (jnp.arange(T_pad) < T)[None, :]                    # (1, T_pad)
    if pad_mask is not None:
        keep = jnp.pad(pad_mask.astype(bool), ((0, Bp - B), (0, T_pad - T)))
        valid = valid & keep                                    # (Bp, T_pad)
    else:
        valid = jnp.broadcast_to(valid, (Bp, T_pad))
    smask = jnp.where(valid, 0.0, -1e30).astype(jnp.float32)[:, :, None]

    # Head weights: pad output features; combine the two biases once here.
    wfc, wfc2 = params["wfc"], params["wfc2"]
    bcat = params["bfc"] + params["bfc2"]                       # (1, d_out)
    if d_out_p != d_out:
        wfc = jnp.pad(wfc, ((0, 0), (0, d_out_p - d_out)))
        wfc2 = jnp.pad(wfc2, ((0, 0), (0, d_out_p - d_out)))
        bcat = jnp.pad(bcat, ((0, 0), (0, d_out_p - d_out)))
    w2_row = params["w2"].reshape(1, d_h)

    cast = lambda a: a.astype(compute_dtype)

    out = pl.pallas_call(
        _uncertainty_head_kernel,
        out_shape=jax.ShapeDtypeStruct((Bp, d_out_p), jnp.float32),
        grid_spec=pltpu.PrefetchScalarGridSpec(
            num_scalar_prefetch=0,
            grid=(n_blk,),
            in_specs=[
                pl.BlockSpec((b_blk, T_pad, d_in), lambda b: (b, 0, 0)),  # x
                pl.BlockSpec((b_blk, d_in), lambda b: (b, 0)),            # pooled
                pl.BlockSpec((b_blk, T_pad, 1), lambda b: (b, 0, 0)),     # score mask
                pl.BlockSpec((d_in, d_h), lambda b: (0, 0)),              # attn w1
                pl.BlockSpec((1, d_h), lambda b: (0, 0)),                 # attn w2 row
                pl.BlockSpec((d_in, d_out_p), lambda b: (0, 0)),          # fc weight
                pl.BlockSpec((d_in, d_out_p), lambda b: (0, 0)),          # fc2 weight
                pl.BlockSpec((1, d_out_p), lambda b: (0, 0)),             # fused bias
            ],
            out_specs=pl.BlockSpec((b_blk, d_out_p), lambda b: (b, 0)),
        ),
        compiler_params=pltpu.CompilerParams(
            dimension_semantics=("parallel",)),
    )(cast(x), cast(pooled), smask, cast(params["w1"]), w2_row,
      cast(wfc), cast(wfc2), bcat)
    return out[:B, :d_out]


def uncertainty_head_ref(x, pooled, params, pad_mask=None):
    """Pure-JAX reference for correctness checks."""
    h = jnp.tanh(jnp.einsum("btd,dh->bth", x, params["w1"]))
    scores = jnp.einsum("bth,ho->bto", h, params["w2"])          # (B, T, 1)
    if pad_mask is not None:
        scores = jnp.where(pad_mask[:, :, None] > 0, scores, -1e30)
    attn = jax.nn.softmax(scores, axis=1)
    residual = jnp.einsum("bto,btd->bd", attn, x)                # (B, d_in)
    return (residual @ params["wfc"] + params["bfc"]
            + pooled @ params["wfc2"] + params["bfc2"])


def make_params(key, d_in, d_out, d_h):
    k1, k2, k3, k4, k5 = jax.random.split(key, 5)
    # fc: xavier_uniform weight, zero bias (init_weights in the module)
    lim_fc = (6.0 / (d_in + d_out)) ** 0.5
    wfc = jax.random.uniform(k1, (d_in, d_out), jnp.float32, -lim_fc, lim_fc)
    bfc = jnp.zeros((1, d_out), jnp.float32)
    # fc2: default torch Linear init
    lim2 = 1.0 / (d_in ** 0.5)
    wfc2 = jax.random.uniform(k2, (d_in, d_out), jnp.float32, -lim2, lim2)
    bfc2 = jax.random.uniform(k3, (1, d_out), jnp.float32, -lim2, lim2)
    # attention linears (bias-free)
    w1 = jax.random.uniform(k4, (d_in, d_h), jnp.float32, -lim2, lim2)
    lim_h = 1.0 / (d_h ** 0.5)
    w2 = jax.random.uniform(k5, (d_h, 1), jnp.float32, -lim_h, lim_h)
    return {"w1": w1, "w2": w2, "wfc": wfc, "bfc": bfc,
            "wfc2": wfc2, "bfc2": bfc2}


if __name__ == "__main__":
    # T = 7*7 = 49 (pre-avgpool spatial positions implied by AvgPool2d((7,7)))
    B, T, d_in, d_h, d_out = 16, 49, 32, 16, 8
    key = jax.random.PRNGKey(0)
    kx, kp, kw, km = jax.random.split(key, 4)
    x = jax.random.normal(kx, (B, T, d_in), jnp.float32)        # pre-pool features
    pooled = jax.random.normal(kp, (B, d_in), jnp.float32)      # pooled feature "out"
    params = make_params(kw, d_in, d_out, d_h)

    # --- pad_mask=None path ---
    y = jax.block_until_ready(uncertainty_head_pallas(x, pooled, params))
    y_ref = uncertainty_head_ref(x, pooled, params)
    # tolerance allows for the EUP approximate reciprocal in the softmax
    assert jnp.allclose(y, y_ref, atol=5e-3, rtol=5e-3), "mismatch (no mask)"

    # --- pad_mask path (1 = keep, 0 = mask; every row keeps >= 1 token) ---
    # TODO(synk): assumes the attention module's masked_fill(pad_mask == 0, -inf)
    #             convention; adjust the mask polarity if the module differs.
    lens = jax.random.randint(km, (B, 1), 1, T + 1)
    pad_mask = (jnp.arange(T)[None, :] < lens).astype(jnp.int32)
    y_m = jax.block_until_ready(
        uncertainty_head_pallas(x, pooled, params, pad_mask=pad_mask))
    y_m_ref = uncertainty_head_ref(x, pooled, params, pad_mask=pad_mask)
    assert jnp.allclose(y_m, y_m_ref, atol=5e-3, rtol=5e-3), "mismatch (pad_mask)"

    print("KERNEL_OK")
</pallas_src>

<mosaic_0001>
module attributes {stable_mosaic.version = 11 : i64} {
  func.func @_uncertainty_head_kernel(%arg0: i32, %arg1: memref<16x56x32xf32, #tpu.memory_space<vmem>>, %arg2: memref<16x32xf32, #tpu.memory_space<vmem>>, %arg3: memref<16x56x1xf32, #tpu.memory_space<vmem>>, %arg4: memref<32x16xf32, #tpu.memory_space<vmem>>, %arg5: memref<1x16xf32, #tpu.memory_space<vmem>>, %arg6: memref<32x128xf32, #tpu.memory_space<vmem>>, %arg7: memref<32x128xf32, #tpu.memory_space<vmem>>, %arg8: memref<1x128xf32, #tpu.memory_space<vmem>>, %arg9: memref<16x128xf32, #tpu.memory_space<vmem>>) attributes {dimension_semantics = [#tpu.dimension_semantics<parallel>], iteration_bounds = array<i64: 1>, scalar_prefetch = 0 : i64, scratch_operands = 0 : i64, tpu.core_type = #tpu.core_type<tc>, window_params = [{transform_indices = @transform_0, window_bounds = array<i64: 16, 56, 32>}, {transform_indices = @transform_1, window_bounds = array<i64: 16, 32>}, {transform_indices = @transform_2, window_bounds = array<i64: 16, 56, 1>}, {pipeline_mode = #tpu.pipeline_mode<synchronous>, transform_indices = @transform_3, window_bounds = array<i64: 32, 16>}, {pipeline_mode = #tpu.pipeline_mode<synchronous>, transform_indices = @transform_4, window_bounds = array<i64: 1, 16>}, {pipeline_mode = #tpu.pipeline_mode<synchronous>, transform_indices = @transform_5, window_bounds = array<i64: 32, 128>}, {pipeline_mode = #tpu.pipeline_mode<synchronous>, transform_indices = @transform_6, window_bounds = array<i64: 32, 128>}, {pipeline_mode = #tpu.pipeline_mode<synchronous>, transform_indices = @transform_7, window_bounds = array<i64: 1, 128>}, {transform_indices = @transform_8, window_bounds = array<i64: 16, 128>}]} {
    %c0 = arith.constant 0 : index
    %c0_0 = arith.constant 0 : index
    %c0_1 = arith.constant 0 : index
    %0 = vector.load %arg1[%c0, %c0_0, %c0_1] : memref<16x56x32xf32, #tpu.memory_space<vmem>>, vector<16x56x32xf32>
    %1 = vector.shape_cast %0 : vector<16x56x32xf32> to vector<896x32xf32>
    %c0_2 = arith.constant 0 : index
    %c0_3 = arith.constant 0 : index
    %2 = vector.load %arg4[%c0_2, %c0_3] : memref<32x16xf32, #tpu.memory_space<vmem>>, vector<32x16xf32>
    %cst = arith.constant dense<0.000000e+00> : vector<896x16xf32>
    %3 = tpu.matmul %1, %2, %cst {dimension_numbers = #tpu.dot_dimension_numbers<[1], [0], [0], [1], [0, 0, 1, 1], [], []>} : vector<896x32xf32>, vector<32x16xf32>, vector<896x16xf32> -> vector<896x16xf32>
    %4 = math.tanh %3 : vector<896x16xf32>
    %c0_4 = arith.constant 0 : index
    %c0_5 = arith.constant 0 : index
    %5 = vector.load %arg5[%c0_4, %c0_5] : memref<1x16xf32, #tpu.memory_space<vmem>>, vector<1x16xf32>
    %6 = vector.broadcast %5 : vector<1x16xf32> to vector<896x16xf32>
    %7 = arith.mulf %4, %6 : vector<896x16xf32>
    %cst_6 = arith.constant dense<0.000000e+00> : vector<896xf32>
    %8 = vector.multi_reduction <add>, %7, %cst_6 [1] : vector<896x16xf32> to vector<896xf32>
    %9 = vector.shape_cast %8 : vector<896xf32> to vector<896x1xf32>
    %10 = vector.shape_cast %9 : vector<896x1xf32> to vector<16x56x1xf32>
    %c0_7 = arith.constant 0 : index
    %c0_8 = arith.constant 0 : index
    %c0_9 = arith.constant 0 : index
    %11 = vector.load %arg3[%c0_7, %c0_8, %c0_9] : memref<16x56x1xf32, #tpu.memory_space<vmem>>, vector<16x56x1xf32>
    %12 = arith.addf %10, %11 : vector<16x56x1xf32>
    %cst_10 = arith.constant dense<0xFF800000> : vector<16x1xf32>
    %13 = vector.multi_reduction <maximumf>, %12, %cst_10 [1] : vector<16x56x1xf32> to vector<16x1xf32>
    %14 = vector.shape_cast %13 : vector<16x1xf32> to vector<16x1x1xf32>
    %15 = vector.broadcast %14 : vector<16x1x1xf32> to vector<16x56x1xf32>
    %16 = arith.subf %12, %15 : vector<16x56x1xf32>
    %17 = math.exp %16 : vector<16x56x1xf32>
    %cst_11 = arith.constant dense<0.000000e+00> : vector<16x1xf32>
    %18 = vector.multi_reduction <add>, %17, %cst_11 [1] : vector<16x56x1xf32> to vector<16x1xf32>
    %19 = vector.shape_cast %18 : vector<16x1xf32> to vector<16x1x1xf32>
    %20 = tpu.reciprocal %19 {approx = true} : vector<16x1x1xf32> -> vector<16x1x1xf32>
    %21 = vector.broadcast %20 : vector<16x1x1xf32> to vector<16x56x1xf32>
    %22 = arith.mulf %17, %21 : vector<16x56x1xf32>
    %23 = vector.broadcast %22 : vector<16x56x1xf32> to vector<16x56x32xf32>
    %24 = arith.mulf %23, %0 : vector<16x56x32xf32>
    %cst_12 = arith.constant dense<0.000000e+00> : vector<16x32xf32>
    %25 = vector.multi_reduction <add>, %24, %cst_12 [1] : vector<16x56x32xf32> to vector<16x32xf32>
    %c0_13 = arith.constant 0 : index
    %c0_14 = arith.constant 0 : index
    %26 = vector.load %arg6[%c0_13, %c0_14] : memref<32x128xf32, #tpu.memory_space<vmem>>, vector<32x128xf32>
    %cst_15 = arith.constant dense<0.000000e+00> : vector<16x128xf32>
    %27 = tpu.matmul %25, %26, %cst_15 {dimension_numbers = #tpu.dot_dimension_numbers<[1], [0], [0], [1], [0, 0, 1, 1], [], []>} : vector<16x32xf32>, vector<32x128xf32>, vector<16x128xf32> -> vector<16x128xf32>
    %c0_16 = arith.constant 0 : index
    %c0_17 = arith.constant 0 : index
    %28 = vector.load %arg2[%c0_16, %c0_17] : memref<16x32xf32, #tpu.memory_space<vmem>>, vector<16x32xf32>
    %c0_18 = arith.constant 0 : index
    %c0_19 = arith.constant 0 : index
    %29 = vector.load %arg7[%c0_18, %c0_19] : memref<32x128xf32, #tpu.memory_space<vmem>>, vector<32x128xf32>
    %cst_20 = arith.constant dense<0.000000e+00> : vector<16x128xf32>
    %30 = tpu.matmul %28, %29, %cst_20 {dimension_numbers = #tpu.dot_dimension_numbers<[1], [0], [0], [1], [0, 0, 1, 1], [], []>} : vector<16x32xf32>, vector<32x128xf32>, vector<16x128xf32> -> vector<16x128xf32>
    %31 = arith.addf %27, %30 : vector<16x128xf32>
    %c0_21 = arith.constant 0 : index
    %c0_22 = arith.constant 0 : index
    %32 = vector.load %arg8[%c0_21, %c0_22] : memref<1x128xf32, #tpu.memory_space<vmem>>, vector<1x128xf32>
    %33 = vector.broadcast %32 : vector<1x128xf32> to vector<16x128xf32>
    %34 = arith.addf %31, %33 : vector<16x128xf32>
    %c0_23 = arith.constant 0 : index
    %c0_24 = arith.constant 0 : index
    %35 = vector.load %arg9[%c0_23, %c0_24] : memref<16x128xf32, #tpu.memory_space<vmem>>, vector<16x128xf32>
    tpu.vector_store %arg9[%c0_23, %c0_24], %34 {strides = array<i32>} : memref<16x128xf32, #tpu.memory_space<vmem>>, vector<16x128xf32>,
    return
  }
  func.func @transform_0(%arg0: i32) -> (i32, i32, i32) {
    %c0_i32 = arith.constant 0 : i32
    %c0_i32_0 = arith.constant 0 : i32
    %c0_i32_1 = arith.constant 0 : i32
    return %arg0, %c0_i32, %c0_i32_0 : i32, i32, i32
  }
  func.func @transform_1(%arg0: i32) -> (i32, i32) {
    %c0_i32 = arith.constant 0 : i32
    %c0_i32_0 = arith.constant 0 : i32
    return %arg0, %c0_i32 : i32, i32
  }
  func.func @transform_2(%arg0: i32) -> (i32, i32, i32) {
    %c0_i32 = arith.constant 0 : i32
    %c0_i32_0 = arith.constant 0 : i32
    %c0_i32_1 = arith.constant 0 : i32
    return %arg0, %c0_i32, %c0_i32_0 : i32, i32, i32
  }
  func.func @transform_3(%arg0: i32) -> (i32, i32) {
    %c0_i32 = arith.constant 0 : i32
    %c0_i32_0 = arith.constant 0 : i32
    %c0_i32_1 = arith.constant 0 : i32
    return %c0_i32, %c0_i32_0 : i32, i32
  }
  func.func @transform_4(%arg0: i32) -> (i32, i32) {
    %c0_i32 = arith.constant 0 : i32
    %c0_i32_0 = arith.constant 0 : i32
    %c0_i32_1 = arith.constant 0 : i32
    return %c0_i32, %c0_i32_0 : i32, i32
  }
  func.func @transform_5(%arg0: i32) -> (i32, i32) {
    %c0_i32 = arith.constant 0 : i32
    %c0_i32_0 = arith.constant 0 : i32
    %c0_i32_1 = arith.constant 0 : i32
    return %c0_i32, %c0_i32_0 : i32, i32
  }
  func.func @transform_6(%arg0: i32) -> (i32, i32) {
    %c0_i32 = arith.constant 0 : i32
    %c0_i32_0 = arith.constant 0 : i32
    %c0_i32_1 = arith.constant 0 : i32
    return %c0_i32, %c0_i32_0 : i32, i32
  }
  func.func @transform_7(%arg0: i32) -> (i32, i32) {
    %c0_i32 = arith.constant 0 : i32
    %c0_i32_0 = arith.constant 0 : i32
    %c0_i32_1 = arith.constant 0 : i32
    return %c0_i32, %c0_i32_0 : i32, i32
  }
  func.func @transform_8(%arg0: i32) -> (i32, i32) {
    %c0_i32 = arith.constant 0 : i32
    %c0_i32_0 = arith.constant 0 : i32
    return %arg0, %c0_i32 : i32, i32
  }
}

</mosaic_0001>

<llo_original>
// kernel: tpu_custom_call.1
$region0: #{tpu_custom_call.1}
  #allocation0 [shape = 'u32[]', space=smem, size = 0x4, offset = 0x4, fixed_abs, tag = 'smem constant byte address 0x4 - core index']
  #allocation1 [shape = 'u32[144,128]{1,0:T(1,128)}', space=vmem, size = 0x12000, scoped, tag = 'internal scratch']
  %s0 = inlined_call_operand.vmem [shape: f32[16,56,32], index: 0, kind: input, shape index: {}]
  %s1 = inlined_call_operand.vmem [shape: f32[16,32], index: 1, kind: input, shape index: {}]
  %s2 = inlined_call_operand.vmem [shape: f32[16,56,1], index: 2, kind: input, shape index: {}]
  %s3 = inlined_call_operand.vmem [shape: f32[32,16], index: 3, kind: input, shape index: {}]
  %s4 = inlined_call_operand.vmem [shape: f32[1,16], index: 4, kind: input, shape index: {}]
  %s5 = inlined_call_operand.vmem [shape: f32[32,128], index: 5, kind: input, shape index: {}]
  %s6 = inlined_call_operand.vmem [shape: f32[32,128], index: 6, kind: input, shape index: {}]
  %s7 = inlined_call_operand.vmem [shape: f32[1,128], index: 7, kind: input, shape index: {}]
  %s8 = inlined_call_operand.hbm [shape: f32[16,128], index: 8, kind: output, shape index: {}]
  %s9 = sld [smem:[#allocation0]]
  $region42: #{tpu_custom_call.1} parent=0
    _
  %s11 = ssub.s32 1, %s9
  %s12 = scalar_select 0, %s11, %s9
  $region1: #{tpu_custom_call.1} parent=0
    #allocation2 [shape = 'u8[8192]{0}', space=vmem, size = 0x2000, scoped, tag = 'output window, operand 0, single buffered']
    #allocation3 [shape = 's32[1]{0}', space=sflag, size = 0x4, scoped, tag = 'scoped memory for tpu_custom_call.1']
    %13 = vsyncpa [#allocation3], 0
    // Predicated region
    $region2: #{tpu_custom_call.1} parent=1 // pred_check
      _
    $region3: #{tpu_custom_call.1} parent=1 // pred_check_branch
      %15 = sbr.rel (0) target = $region5
    $region4: #{tpu_custom_call.1} parent=1 // pred_region
      _
    $region5: #{tpu_custom_call.1} parent=1 // pred_fallthru
      _
    // Predicated region
    $region6: #{tpu_custom_call.1} parent=1 // pred_check
      _
    $region7: #{tpu_custom_call.1} parent=1 // pred_check_branch
      %17 = sbr.rel (0) target = $region9
    $region8: #{tpu_custom_call.1} parent=1 // pred_region
      _
    $region9: #{tpu_custom_call.1} parent=1 // pred_fallthru
      _
    // Predicated region
    $region10: #{tpu_custom_call.1} parent=1 // pred_check
      _
    $region11: #{tpu_custom_call.1} parent=1 // pred_check_branch
      %19 = sbr.rel (0) target = $region13
    $region12: #{tpu_custom_call.1} parent=1 // pred_region
      _
    $region13: #{tpu_custom_call.1} parent=1 // pred_fallthru
      _
    // Predicated region
    $region14: #{tpu_custom_call.1} parent=1 // pred_check
      _
    $region15: #{tpu_custom_call.1} parent=1 // pred_check_branch
      %21 = sbr.rel (0) target = $region17
    $region16: #{tpu_custom_call.1} parent=1 // pred_region
      _
    $region17: #{tpu_custom_call.1} parent=1 // pred_fallthru
      _
    // Predicated region
    $region18: #{tpu_custom_call.1} parent=1 // pred_check
      _
    $region19: #{tpu_custom_call.1} parent=1 // pred_check_branch
      %23 = sbr.rel (0) target = $region21
    $region20: #{tpu_custom_call.1} parent=1 // pred_region
      _
    $region21: #{tpu_custom_call.1} parent=1 // pred_fallthru
      _
    // Predicated region
    $region22: #{tpu_custom_call.1} parent=1 // pred_check
      _
    $region23: #{tpu_custom_call.1} parent=1 // pred_check_branch
      %25 = sbr.rel (0) target = $region25
    $region24: #{tpu_custom_call.1} parent=1 // pred_region
      _
    $region25: #{tpu_custom_call.1} parent=1 // pred_fallthru
      _
    // Predicated region
    $region26: #{tpu_custom_call.1} parent=1 // pred_check
      _
    $region27: #{tpu_custom_call.1} parent=1 // pred_check_branch
      %27 = sbr.rel (0) target = $region29
    $region28: #{tpu_custom_call.1} parent=1 // pred_region
      _
    $region29: #{tpu_custom_call.1} parent=1 // pred_fallthru
      _
    // Predicated region
    $region30: #{tpu_custom_call.1} parent=1 // pred_check
      _
    $region31: #{tpu_custom_call.1} parent=1 // pred_check_branch
      %29 = sbr.rel (0) target = $region33
    $region32: #{tpu_custom_call.1} parent=1 // pred_region
      _
    $region33: #{tpu_custom_call.1} parent=1 // pred_fallthru
      _
    %v30 = vld [vmem:[%s0] sm:$0xff]
    %v31 = vld [vmem:[%s0 + $0x8] sm:$0xff]
    %v32 = vld [vmem:[%s0 + $0x10] sm:$0xff]
    %v33 = vld [vmem:[%s0 + $0x18] sm:$0xff]
    %v34 = vld [vmem:[%s0 + $0x20] sm:$0xff]
    %v35 = vld [vmem:[%s0 + $0x28] sm:$0xff]
    %v36 = vld [vmem:[%s0 + $0x30] sm:$0xff]
    %v37 = vld [vmem:[%s0 + $0x38] sm:$0xff]
    %v38 = vld [vmem:[%s0 + $0x40] sm:$0xff]
    %v39 = vld [vmem:[%s0 + $0x48] sm:$0xff]
    %v40 = vld [vmem:[%s0 + $0x50] sm:$0xff]
    %v41 = vld [vmem:[%s0 + $0x58] sm:$0xff]
    %v42 = vld [vmem:[%s0 + $0x60] sm:$0xff]
    %v43 = vld [vmem:[%s0 + $0x68] sm:$0xff]
    %v44 = vld [vmem:[%s0 + $0x70] sm:$0xff]
    %v45 = vld [vmem:[%s0 + $0x78] sm:$0xff]
    %v46 = vld [vmem:[%s0 + $0x80] sm:$0xff]
    %v47 = vld [vmem:[%s0 + $0x88] sm:$0xff]
    %v48 = vld [vmem:[%s0 + $0x90] sm:$0xff]
    %v49 = vld [vmem:[%s0 + $0x98] sm:$0xff]
    %v50 = vld [vmem:[%s0 + $0xa0] sm:$0xff]
    %v51 = vld [vmem:[%s0 + $0xa8] sm:$0xff]
    %v52 = vld [vmem:[%s0 + $0xb0] sm:$0xff]
    %v53 = vld [vmem:[%s0 + $0xb8] sm:$0xff]
    %v54 = vld [vmem:[%s0 + $0xc0] sm:$0xff]
    %v55 = vld [vmem:[%s0 + $0xc8] sm:$0xff]
    %v56 = vld [vmem:[%s0 + $0xd0] sm:$0xff]
    %v57 = vld [vmem:[%s0 + $0xd8] sm:$0xff]
    %v58 = vld [vmem:[%s0 + $0xe0] sm:$0xff]
    %v59 = vld [vmem:[%s0 + $0xe8] sm:$0xff]
    %v60 = vld [vmem:[%s0 + $0xf0] sm:$0xff]
    %v61 = vld [vmem:[%s0 + $0xf8] sm:$0xff]
    %v62 = vld [vmem:[%s0 + $0x100] sm:$0xff]
    %v63 = vld [vmem:[%s0 + $0x108] sm:$0xff]
    %v64 = vld [vmem:[%s0 + $0x110] sm:$0xff]
    %v65 = vld [vmem:[%s0 + $0x118] sm:$0xff]
    %v66 = vld [vmem:[%s0 + $0x120] sm:$0xff]
    %v67 = vld [vmem:[%s0 + $0x128] sm:$0xff]
    %v68 = vld [vmem:[%s0 + $0x130] sm:$0xff]
    %v69 = vld [vmem:[%s0 + $0x138] sm:$0xff]
    %v70 = vld [vmem:[%s0 + $0x140] sm:$0xff]
    %v71 = vld [vmem:[%s0 + $0x148] sm:$0xff]
    %v72 = vld [vmem:[%s0 + $0x150] sm:$0xff]
    %v73 = vld [vmem:[%s0 + $0x158] sm:$0xff]
    %v74 = vld [vmem:[%s0 + $0x160] sm:$0xff]
    %v75 = vld [vmem:[%s0 + $0x168] sm:$0xff]
    %v76 = vld [vmem:[%s0 + $0x170] sm:$0xff]
    %v77 = vld [vmem:[%s0 + $0x178] sm:$0xff]
    %v78 = vld [vmem:[%s0 + $0x180] sm:$0xff]
    %v79 = vld [vmem:[%s0 + $0x188] sm:$0xff]
    %v80 = vld [vmem:[%s0 + $0x190] sm:$0xff]
    %v81 = vld [vmem:[%s0 + $0x198] sm:$0xff]
    %v82 = vld [vmem:[%s0 + $0x1a0] sm:$0xff]
    %v83 = vld [vmem:[%s0 + $0x1a8] sm:$0xff]
    %v84 = vld [vmem:[%s0 + $0x1b0] sm:$0xff]
    %v85 = vld [vmem:[%s0 + $0x1b8] sm:$0xff]
    %v86 = vld [vmem:[%s0 + $0x1c0] sm:$0xff]
    %v87 = vld [vmem:[%s0 + $0x1c8] sm:$0xff]
    %v88 = vld [vmem:[%s0 + $0x1d0] sm:$0xff]
    %v89 = vld [vmem:[%s0 + $0x1d8] sm:$0xff]
    %v90 = vld [vmem:[%s0 + $0x1e0] sm:$0xff]
    %v91 = vld [vmem:[%s0 + $0x1e8] sm:$0xff]
    %v92 = vld [vmem:[%s0 + $0x1f0] sm:$0xff]
    %v93 = vld [vmem:[%s0 + $0x1f8] sm:$0xff]
    %v94 = vld [vmem:[%s0 + $0x200] sm:$0xff]
    %v95 = vld [vmem:[%s0 + $0x208] sm:$0xff]
    %v96 = vld [vmem:[%s0 + $0x210] sm:$0xff]
    %v97 = vld [vmem:[%s0 + $0x218] sm:$0xff]
    %v98 = vld [vmem:[%s0 + $0x220] sm:$0xff]
    %v99 = vld [vmem:[%s0 + $0x228] sm:$0xff]
    %v100 = vld [vmem:[%s0 + $0x230] sm:$0xff]
    %v101 = vld [vmem:[%s0 + $0x238] sm:$0xff]
    %v102 = vld [vmem:[%s0 + $0x240] sm:$0xff]
    %v103 = vld [vmem:[%s0 + $0x248] sm:$0xff]
    %v104 = vld [vmem:[%s0 + $0x250] sm:$0xff]
    %v105 = vld [vmem:[%s0 + $0x258] sm:$0xff]
    %v106 = vld [vmem:[%s0 + $0x260] sm:$0xff]
    %v107 = vld [vmem:[%s0 + $0x268] sm:$0xff]
    %v108 = vld [vmem:[%s0 + $0x270] sm:$0xff]
    %v109 = vld [vmem:[%s0 + $0x278] sm:$0xff]
    %v110 = vld [vmem:[%s0 + $0x280] sm:$0xff]
    %v111 = vld [vmem:[%s0 + $0x288] sm:$0xff]
    %v112 = vld [vmem:[%s0 + $0x290] sm:$0xff]
    %v113 = vld [vmem:[%s0 + $0x298] sm:$0xff]
    %v114 = vld [vmem:[%s0 + $0x2a0] sm:$0xff]
    %v115 = vld [vmem:[%s0 + $0x2a8] sm:$0xff]
    %v116 = vld [vmem:[%s0 + $0x2b0] sm:$0xff]
    %v117 = vld [vmem:[%s0 + $0x2b8] sm:$0xff]
    %v118 = vld [vmem:[%s0 + $0x2c0] sm:$0xff]
    %v119 = vld [vmem:[%s0 + $0x2c8] sm:$0xff]
    %v120 = vld [vmem:[%s0 + $0x2d0] sm:$0xff]
    %v121 = vld [vmem:[%s0 + $0x2d8] sm:$0xff]
    %v122 = vld [vmem:[%s0 + $0x2e0] sm:$0xff]
    %v123 = vld [vmem:[%s0 + $0x2e8] sm:$0xff]
    %v124 = vld [vmem:[%s0 + $0x2f0] sm:$0xff]
    %v125 = vld [vmem:[%s0 + $0x2f8] sm:$0xff]
    %v126 = vld [vmem:[%s0 + $0x300] sm:$0xff]
    %v127 = vld [vmem:[%s0 + $0x308] sm:$0xff]
    %v128 = vld [vmem:[%s0 + $0x310] sm:$0xff]
    %v129 = vld [vmem:[%s0 + $0x318] sm:$0xff]
    %v130 = vld [vmem:[%s0 + $0x320] sm:$0xff]
    %v131 = vld [vmem:[%s0 + $0x328] sm:$0xff]
    %v132 = vld [vmem:[%s0 + $0x330] sm:$0xff]
    %v133 = vld [vmem:[%s0 + $0x338] sm:$0xff]
    %v134 = vld [vmem:[%s0 + $0x340] sm:$0xff]
    %v135 = vld [vmem:[%s0 + $0x348] sm:$0xff]
    %v136 = vld [vmem:[%s0 + $0x350] sm:$0xff]
    %v137 = vld [vmem:[%s0 + $0x358] sm:$0xff]
    %v138 = vld [vmem:[%s0 + $0x360] sm:$0xff]
    %v139 = vld [vmem:[%s0 + $0x368] sm:$0xff]
    %v140 = vld [vmem:[%s0 + $0x370] sm:$0xff]
    %v141 = vld [vmem:[%s0 + $0x378] sm:$0xff]
    %v142 = vld [vmem:[%s3] sm:$0xff]
    %v143 = vld [vmem:[%s3 + $0x8] sm:$0xff]
    %v144 = vld [vmem:[%s3 + $0x10] sm:$0xff]
    %v145 = vld [vmem:[%s3 + $0x18] sm:$0xff]
    %vm146 = vcmask 261120
    %v148 = vsel %vm146, %v30, 0
    %v151 = vsel %vm146, %v31, 0
    %v154 = vsel %vm146, %v32, 0
    %v157 = vsel %vm146, %v33, 0
    %v160 = vsel %vm146, %v34, 0
    %v163 = vsel %vm146, %v35, 0
    %v166 = vsel %vm146, %v36, 0
    %v169 = vsel %vm146, %v37, 0
    %v172 = vsel %vm146, %v38, 0
    %v175 = vsel %vm146, %v39, 0
    %v178 = vsel %vm146, %v40, 0
    %v181 = vsel %vm146, %v41, 0
    %v184 = vsel %vm146, %v42, 0
    %v187 = vsel %vm146, %v43, 0
    %v190 = vsel %vm146, %v44, 0
    %v193 = vsel %vm146, %v45, 0
    %v196 = vsel %vm146, %v46, 0
    %v199 = vsel %vm146, %v47, 0
    %v202 = vsel %vm146, %v48, 0
    %v205 = vsel %vm146, %v49, 0
    %v208 = vsel %vm146, %v50, 0
    %v211 = vsel %vm146, %v51, 0
    %v214 = vsel %vm146, %v52, 0
    %v217 = vsel %vm146, %v53, 0
    %v220 = vsel %vm146, %v54, 0
    %v223 = vsel %vm146, %v55, 0
    %v226 = vsel %vm146, %v56, 0
    %v229 = vsel %vm146, %v57, 0
    %v232 = vsel %vm146, %v58, 0
    %v235 = vsel %vm146, %v59, 0
    %v238 = vsel %vm146, %v60, 0
    %v241 = vsel %vm146, %v61, 0
    %v244 = vsel %vm146, %v62, 0
    %v247 = vsel %vm146, %v63, 0
    %v250 = vsel %vm146, %v64, 0
    %v253 = vsel %vm146, %v65, 0
    %v256 = vsel %vm146, %v66, 0
    %v259 = vsel %vm146, %v67, 0
    %v262 = vsel %vm146, %v68, 0
    %v265 = vsel %vm146, %v69, 0
    %v268 = vsel %vm146, %v70, 0
    %v271 = vsel %vm146, %v71, 0
    %v274 = vsel %vm146, %v72, 0
    %v277 = vsel %vm146, %v73, 0
    %v280 = vsel %vm146, %v74, 0
    %v283 = vsel %vm146, %v75, 0
    %v286 = vsel %vm146, %v76, 0
    %v289 = vsel %vm146, %v77, 0
    %v292 = vsel %vm146, %v78, 0
    %v295 = vsel %vm146, %v79, 0
    %v298 = vsel %vm146, %v80, 0
    %v301 = vsel %vm146, %v81, 0
    %v304 = vsel %vm146, %v82, 0
    %v307 = vsel %vm146, %v83, 0
    %v310 = vsel %vm146, %v84, 0
    %v313 = vsel %vm146, %v85, 0
    %v316 = vsel %vm146, %v86, 0
    %v319 = vsel %vm146, %v87, 0
    %v322 = vsel %vm146, %v88, 0
    %v325 = vsel %vm146, %v89, 0
    %v328 = vsel %vm146, %v90, 0
    %v331 = vsel %vm146, %v91, 0
    %v334 = vsel %vm146, %v92, 0
    %v337 = vsel %vm146, %v93, 0
    %v340 = vsel %vm146, %v94, 0
    %v343 = vsel %vm146, %v95, 0
    %v346 = vsel %vm146, %v96, 0
    %v349 = vsel %vm146, %v97, 0
    %v352 = vsel %vm146, %v98, 0
    %v355 = vsel %vm146, %v99, 0
    %v358 = vsel %vm146, %v100, 0
    %v361 = vsel %vm146, %v101, 0
    %v364 = vsel %vm146, %v102, 0
    %v367 = vsel %vm146, %v103, 0
    %v370 = vsel %vm146, %v104, 0
    %v373 = vsel %vm146, %v105, 0
    %v376 = vsel %vm146, %v106, 0
    %v379 = vsel %vm146, %v107, 0
    %v382 = vsel %vm146, %v108, 0
    %v385 = vsel %vm146, %v109, 0
    %v388 = vsel %vm146, %v110, 0
    %v391 = vsel %vm146, %v111, 0
    %v394 = vsel %vm146, %v112, 0
    %v397 = vsel %vm146, %v113, 0
    %v400 = vsel %vm146, %v114, 0
    %v403 = vsel %vm146, %v115, 0
    %v406 = vsel %vm146, %v116, 0
    %v409 = vsel %vm146, %v117, 0
    %v412 = vsel %vm146, %v118, 0
    %v415 = vsel %vm146, %v119, 0
    %v418 = vsel %vm146, %v120, 0
    %v421 = vsel %vm146, %v121, 0
    %v424 = vsel %vm146, %v122, 0
    %v427 = vsel %vm146, %v123, 0
    %v430 = vsel %vm146, %v124, 0
    %v433 = vsel %vm146, %v125, 0
    %v436 = vsel %vm146, %v126, 0
    %v439 = vsel %vm146, %v127, 0
    %v442 = vsel %vm146, %v128, 0
    %v445 = vsel %vm146, %v129, 0
    %v448 = vsel %vm146, %v130, 0
    %v451 = vsel %vm146, %v131, 0
    %v454 = vsel %vm146, %v132, 0
    %v457 = vsel %vm146, %v133, 0
    %v460 = vsel %vm146, %v134, 0
    %v463 = vsel %vm146, %v135, 0
    %v466 = vsel %vm146, %v136, 0
    %v469 = vsel %vm146, %v137, 0
    %v472 = vsel %vm146, %v138, 0
    %v475 = vsel %vm146, %v139, 0
    %v478 = vsel %vm146, %v140, 0
    %v481 = vsel %vm146, %v141, 0
    %483 = vmatprep.subr.mxu0 0.0
    %484 = vmatpush1.msra.mxu0 %v142
    %485 = vmatprep.subr.mxu0 0.0
    %486 = vmatpush1.msra.mxu0 %v143
    %487 = vmatprep.subr.mxu0 0.0
    %488 = vmatpush1.msra.mxu0 %v144
    %489 = vmatprep.subr.mxu0 0.0
    %490 = vmatpush1.msra.mxu0 %v145
    %491 = vmatprep.subr.mxu0 0.0
    %492 = vmatpush1.msra.mxu0 0.0
    %493 = vmatprep.subr.mxu0 0.0
    %494 = vmatpush1.msra.mxu0 0.0
    %495 = vmatprep.subr.mxu0 0.0
    %496 = vmatpush1.msra.mxu0 0.0
    %497 = vmatprep.subr.mxu0 0.0
    %498 = vmatpush1.msra.mxu0 0.0
    %499 = vmatprep.subr.mxu0 0.0
    %500 = vmatpush1.msra.mxu0 0.0
    %501 = vmatprep.subr.mxu0 0.0
    %502 = vmatpush1.msra.mxu0 0.0
    %503 = vmatprep.subr.mxu0 0.0
    %504 = vmatpush1.msra.mxu0 0.0
    %505 = vmatprep.subr.mxu0 0.0
    %506 = vmatpush1.msra.mxu0 0.0
    %507 = vmatprep.subr.mxu0 0.0
    %508 = vmatpush1.msra.mxu0 0.0
    %509 = vmatprep.subr.mxu0 0.0
    %510 = vmatpush1.msra.mxu0 0.0
    %511 = vmatprep.subr.mxu0 0.0
    %512 = vmatpush1.msra.mxu0 0.0
    %513 = vmatprep.subr.mxu0 0.0
    %514 = vmatpush1.msra.mxu0 0.0
    %515 = vmatprep.subr.mxu0 0.0
    %516 = vmatpush1.msra.mxu0 0.0
    %517 = vmatprep.subr.mxu0 0.0
    %518 = vmatpush1.msra.mxu0 0.0
    %519 = vmatprep.subr.mxu0 0.0
    %520 = vmatpush1.msra.mxu0 0.0
    %521 = vmatprep.subr.mxu0 0.0
    %522 = vmatpush1.msra.mxu0 0.0
    %523 = vmatprep.subr.mxu0 0.0
    %524 = vmatpush1.msra.mxu0 0.0
    %525 = vmatprep.subr.mxu0 0.0
    %526 = vmatpush1.msra.mxu0 0.0
    %527 = vmatprep.subr.mxu0 0.0
    %528 = vmatpush1.msra.mxu0 0.0
    %529 = vmatprep.subr.mxu0 0.0
    %530 = vmatpush1.msra.mxu0 0.0
    %531 = vmatprep.subr.mxu0 0.0
    %532 = vmatpush1.msra.mxu0 0.0
    %533 = vmatprep.subr.mxu0 0.0
    %534 = vmatpush1.msra.mxu0 0.0
    %535 = vmatprep.subr.mxu0 0.0
    %536 = vmatpush1.msra.mxu0 0.0
    %537 = vmatprep.subr.mxu0 0.0
    %538 = vmatpush1.msra.mxu0 0.0
    %539 = vmatprep.subr.mxu0 0.0
    %540 = vmatpush1.msra.mxu0 0.0
    %541 = vmatprep.subr.mxu0 0.0
    %542 = vmatpush1.msra.mxu0 0.0
    %543 = vmatprep.subr.mxu0 0.0
    %544 = vmatpush1.msra.mxu0 0.0
    %545 = vmatprep.subr.mxu0 0.0
    %546 = vmatpush1.msra.mxu0 0.0
    %547 = vmatprep.mubr.f32.mxu0 0.0
    %548 = vmatmul.mubr.f32.gmra.mrb[0].mxu0 %v148
    %v549 = vpop.f32.mrb[0].mxu0
    %v550 = vadd.f32 0.0, %v549
    %v551 = vpop.f32.mrb[0].mxu0
    %552 = vmatprep.mubr.f32.mxu0 0.0
    %553 = vmatmul.mubr.f32.gmra.mrb[0].mxu0 %v151
    %v554 = vpop.f32.mrb[0].mxu0
    %v555 = vadd.f32 0.0, %v554
    %v556 = vpop.f32.mrb[0].mxu0
    %557 = vmatprep.mubr.f32.mxu0 0.0
    %558 = vmatmul.mubr.f32.gmra.mrb[0].mxu0 %v154
    %v559 = vpop.f32.mrb[0].mxu0
    %v560 = vadd.f32 0.0, %v559
    %v561 = vpop.f32.mrb[0].mxu0
    %562 = vmatprep.mubr.f32.mxu0 0.0
    %563 = vmatmul.mubr.f32.gmra.mrb[0].mxu0 %v157
    %v564 = vpop.f32.mrb[0].mxu0
    %v565 = vadd.f32 0.0, %v564
    %v566 = vpop.f32.mrb[0].mxu0
    %567 = vmatprep.mubr.f32.mxu0 0.0
    %568 = vmatmul.mubr.f32.gmra.mrb[0].mxu0 %v160
    %v569 = vpop.f32.mrb[0].mxu0
    %v570 = vadd.f32 0.0, %v569
    %v571 = vpop.f32.mrb[0].mxu0
    %572 = vmatprep.mubr.f32.mxu0 0.0
    %573 = vmatmul.mubr.f32.gmra.mrb[0].mxu0 %v163
    %v574 = vpop.f32.mrb[0].mxu0
    %v575 = vadd.f32 0.0, %v574
    %v576 = vpop.f32.mrb[0].mxu0
    %577 = vmatprep.mubr.f32.mxu0 0.0
    %578 = vmatmul.mubr.f32.gmra.mrb[0].mxu0 %v166
    %v579 = vpop.f32.mrb[0].mxu0
    %v580 = vadd.f32 0.0, %v579
    %v581 = vpop.f32.mrb[0].mxu0
    %582 = vmatprep.mubr.f32.mxu0 0.0
    %583 = vmatmul.mubr.f32.gmra.mrb[0].mxu0 %v169
    %v584 = vpop.f32.mrb[0].mxu0
    %v585 = vadd.f32 0.0, %v584
    %v586 = vpop.f32.mrb[0].mxu0
    %587 = vmatprep.mubr.f32.mxu0 0.0
    %588 = vmatmul.mubr.f32.gmra.mrb[0].mxu0 %v172
    %v589 = vpop.f32.mrb[0].mxu0
    %v590 = vadd.f32 0.0, %v589
    %v591 = vpop.f32.mrb[0].mxu0
    %592 = vmatprep.mubr.f32.mxu0 0.0
    %593 = vmatmul.mubr.f32.gmra.mrb[0].mxu0 %v175
    %v594 = vpop.f32.mrb[0].mxu0
    %v595 = vadd.f32 0.0, %v594
    %v596 = vpop.f32.mrb[0].mxu0
    %597 = vmatprep.mubr.f32.mxu0 0.0
    %598 = vmatmul.mubr.f32.gmra.mrb[0].mxu0 %v178
    %v599 = vpop.f32.mrb[0].mxu0
    %v600 = vadd.f32 0.0, %v599
    %v601 = vpop.f32.mrb[0].mxu0
    %602 = vmatprep.mubr.f32.mxu0 0.0
    %603 = vmatmul.mubr.f32.gmra.mrb[0].mxu0 %v181
    %v604 = vpop.f32.mrb[0].mxu0
    %v605 = vadd.f32 0.0, %v604
    %v606 = vpop.f32.mrb[0].mxu0
    %607 = vmatprep.mubr.f32.mxu0 0.0
    %608 = vmatmul.mubr.f32.gmra.mrb[0].mxu0 %v184
    %v609 = vpop.f32.mrb[0].mxu0
    %v610 = vadd.f32 0.0, %v609
    %v611 = vpop.f32.mrb[0].mxu0
    %612 = vmatprep.mubr.f32.mxu0 0.0
    %613 = vmatmul.mubr.f32.gmra.mrb[0].mxu0 %v187
    %v614 = vpop.f32.mrb[0].mxu0
    %v615 = vadd.f32 0.0, %v614
    %v616 = vpop.f32.mrb[0].mxu0
    %617 = vmatprep.mubr.f32.mxu0 0.0
    %618 = vmatmul.mubr.f32.gmra.mrb[0].mxu0 %v190
    %v619 = vpop.f32.mrb[0].mxu0
    %v620 = vadd.f32 0.0, %v619
    %v621 = vpop.f32.mrb[0].mxu0
    %622 = vmatprep.mubr.f32.mxu0 0.0
    %623 = vmatmul.mubr.f32.gmra.mrb[0].mxu0 %v193
    %v624 = vpop.f32.mrb[0].mxu0
    %v625 = vadd.f32 0.0, %v624
    %v626 = vpop.f32.mrb[0].mxu0
    %627 = vmatprep.mubr.f32.mxu0 0.0
    %628 = vmatmul.mubr.f32.gmra.mrb[0].mxu0 %v196
    %v629 = vpop.f32.mrb[0].mxu0
    %v630 = vadd.f32 0.0, %v629
    %v631 = vpop.f32.mrb[0].mxu0
    %632 = vmatprep.mubr.f32.mxu0 0.0
    %633 = vmatmul.mubr.f32.gmra.mrb[0].mxu0 %v199
    %v634 = vpop.f32.mrb[0].mxu0
    %v635 = vadd.f32 0.0, %v634
    %v636 = vpop.f32.mrb[0].mxu0
    %637 = vmatprep.mubr.f32.mxu0 0.0
    %638 = vmatmul.mubr.f32.gmra.mrb[0].mxu0 %v202
    %v639 = vpop.f32.mrb[0].mxu0
    %v640 = vadd.f32 0.0, %v639
    %v641 = vpop.f32.mrb[0].mxu0
    %642 = vmatprep.mubr.f32.mxu0 0.0
    %643 = vmatmul.mubr.f32.gmra.mrb[0].mxu0 %v205
    %v644 = vpop.f32.mrb[0].mxu0
    %v645 = vadd.f32 0.0, %v644
    %v646 = vpop.f32.mrb[0].mxu0
    %647 = vmatprep.mubr.f32.mxu0 0.0
    %648 = vmatmul.mubr.f32.gmra.mrb[0].mxu0 %v208
    %v649 = vpop.f32.mrb[0].mxu0
    %v650 = vadd.f32 0.0, %v649
    %v651 = vpop.f32.mrb[0].mxu0
    %652 = vmatprep.mubr.f32.mxu0 0.0
    %653 = vmatmul.mubr.f32.gmra.mrb[0].mxu0 %v211
    %v654 = vpop.f32.mrb[0].mxu0
    %v655 = vadd.f32 0.0, %v654
    %v656 = vpop.f32.mrb[0].mxu0
    %657 = vmatprep.mubr.f32.mxu0 0.0
    %658 = vmatmul.mubr.f32.gmra.mrb[0].mxu0 %v214
    %v659 = vpop.f32.mrb[0].mxu0
    %v660 = vadd.f32 0.0, %v659
    %v661 = vpop.f32.mrb[0].mxu0
    %662 = vmatprep.mubr.f32.mxu0 0.0
    %663 = vmatmul.mubr.f32.gmra.mrb[0].mxu0 %v217
    %v664 = vpop.f32.mrb[0].mxu0
    %v665 = vadd.f32 0.0, %v664
    %v666 = vpop.f32.mrb[0].mxu0
    %667 = vmatprep.mubr.f32.mxu0 0.0
    %668 = vmatmul.mubr.f32.gmra.mrb[0].mxu0 %v220
    %v669 = vpop.f32.mrb[0].mxu0
    %v670 = vadd.f32 0.0, %v669
    %v671 = vpop.f32.mrb[0].mxu0
    %672 = vmatprep.mubr.f32.mxu0 0.0
    %673 = vmatmul.mubr.f32.gmra.mrb[0].mxu0 %v223
    %v674 = vpop.f32.mrb[0].mxu0
    %v675 = vadd.f32 0.0, %v674
    %v676 = vpop.f32.mrb[0].mxu0
    %677 = vmatprep.mubr.f32.mxu0 0.0
    %678 = vmatmul.mubr.f32.gmra.mrb[0].mxu0 %v226
    %v679 = vpop.f32.mrb[0].mxu0
    %v680 = vadd.f32 0.0, %v679
    %v681 = vpop.f32.mrb[0].mxu0
    %682 = vmatprep.mubr.f32.mxu0 0.0
    %683 = vmatmul.mubr.f32.gmra.mrb[0].mxu0 %v229
    %v684 = vpop.f32.mrb[0].mxu0
    %v685 = vadd.f32 0.0, %v684
    %v686 = vpop.f32.mrb[0].mxu0
    %687 = vmatprep.mubr.f32.mxu0 0.0
    %688 = vmatmul.mubr.f32.gmra.mrb[0].mxu0 %v232
    %v689 = vpop.f32.mrb[0].mxu0
    %v690 = vadd.f32 0.0, %v689
    %v691 = vpop.f32.mrb[0].mxu0
    %692 = vmatprep.mubr.f32.mxu0 0.0
    %693 = vmatmul.mubr.f32.gmra.mrb[0].mxu0 %v235
    %v694 = vpop.f32.mrb[0].mxu0
    %v695 = vadd.f32 0.0, %v694
    %v696 = vpop.f32.mrb[0].mxu0
    %697 = vmatprep.mubr.f32.mxu0 0.0
    %698 = vmatmul.mubr.f32.gmra.mrb[0].mxu0 %v238
    %v699 = vpop.f32.mrb[0].mxu0
    %v700 = vadd.f32 0.0, %v699
    %v701 = vpop.f32.mrb[0].mxu0
    %702 = vmatprep.mubr.f32.mxu0 0.0
    %703 = vmatmul.mubr.f32.gmra.mrb[0].mxu0 %v241
    %v704 = vpop.f32.mrb[0].mxu0
    %v705 = vadd.f32 0.0, %v704
    %v706 = vpop.f32.mrb[0].mxu0
    %707 = vmatprep.mubr.f32.mxu0 0.0
    %708 = vmatmul.mubr.f32.gmra.mrb[0].mxu0 %v244
    %v709 = vpop.f32.mrb[0].mxu0
    %v710 = vadd.f32 0.0, %v709
    %v711 = vpop.f32.mrb[0].mxu0
    %712 = vmatprep.mubr.f32.mxu0 0.0
    %713 = vmatmul.mubr.f32.gmra.mrb[0].mxu0 %v247
    %v714 = vpop.f32.mrb[0].mxu0
    %v715 = vadd.f32 0.0, %v714
    %v716 = vpop.f32.mrb[0].mxu0
    %717 = vmatprep.mubr.f32.mxu0 0.0
    %718 = vmatmul.mubr.f32.gmra.mrb[0].mxu0 %v250
    %v719 = vpop.f32.mrb[0].mxu0
    %v720 = vadd.f32 0.0, %v719
    %v721 = vpop.f32.mrb[0].mxu0
    %722 = vmatprep.mubr.f32.mxu0 0.0
    %723 = vmatmul.mubr.f32.gmra.mrb[0].mxu0 %v253
    %v724 = vpop.f32.mrb[0].mxu0
    %v725 = vadd.f32 0.0, %v724
    %v726 = vpop.f32.mrb[0].mxu0
    %727 = vmatprep.mubr.f32.mxu0 0.0
    %728 = vmatmul.mubr.f32.gmra.mrb[0].mxu0 %v256
    %v729 = vpop.f32.mrb[0].mxu0
    %v730 = vadd.f32 0.0, %v729
    %v731 = vpop.f32.mrb[0].mxu0
    %732 = vmatprep.mubr.f32.mxu0 0.0
    %733 = vmatmul.mubr.f32.gmra.mrb[0].mxu0 %v259
    %v734 = vpop.f32.mrb[0].mxu0
    %v735 = vadd.f32 0.0, %v734
    %v736 = vpop.f32.mrb[0].mxu0
    %737 = vmatprep.mubr.f32.mxu0 0.0
    %738 = vmatmul.mubr.f32.gmra.mrb[0].mxu0 %v262
    %v739 = vpop.f32.mrb[0].mxu0
    %v740 = vadd.f32 0.0, %v739
    %v741 = vpop.f32.mrb[0].mxu0
    %742 = vmatprep.mubr.f32.mxu0 0.0
    %743 = vmatmul.mubr.f32.gmra.mrb[0].mxu0 %v265
    %v744 = vpop.f32.mrb[0].mxu0
    %v745 = vadd.f32 0.0, %v744
    %v746 = vpop.f32.mrb[0].mxu0
    %747 = vmatprep.mubr.f32.mxu0 0.0
    %748 = vmatmul.mubr.f32.gmra.mrb[0].mxu0 %v268
    %v749 = vpop.f32.mrb[0].mxu0
    %v750 = vadd.f32 0.0, %v749
    %v751 = vpop.f32.mrb[0].mxu0
    %752 = vmatprep.mubr.f32.mxu0 0.0
    %753 = vmatmul.mubr.f32.gmra.mrb[0].mxu0 %v271
    %v754 = vpop.f32.mrb[0].mxu0
    %v755 = vadd.f32 0.0, %v754
    %v756 = vpop.f32.mrb[0].mxu0
    %757 = vmatprep.mubr.f32.mxu0 0.0
    %758 = vmatmul.mubr.f32.gmra.mrb[0].mxu0 %v274
    %v759 = vpop.f32.mrb[0].mxu0
    %v760 = vadd.f32 0.0, %v759
    %v761 = vpop.f32.mrb[0].mxu0
    %762 = vmatprep.mubr.f32.mxu0 0.0
    %763 = vmatmul.mubr.f32.gmra.mrb[0].mxu0 %v277
    %v764 = vpop.f32.mrb[0].mxu0
    %v765 = vadd.f32 0.0, %v764
    %v766 = vpop.f32.mrb[0].mxu0
    %767 = vmatprep.mubr.f32.mxu0 0.0
    %768 = vmatmul.mubr.f32.gmra.mrb[0].mxu0 %v280
    %v769 = vpop.f32.mrb[0].mxu0
    %v770 = vadd.f32 0.0, %v769
    %v771 = vpop.f32.mrb[0].mxu0
    %772 = vmatprep.mubr.f32.mxu0 0.0
    %773 = vmatmul.mubr.f32.gmra.mrb[0].mxu0 %v283
    %v774 = vpop.f32.mrb[0].mxu0
    %v775 = vadd.f32 0.0, %v774
    %v776 = vpop.f32.mrb[0].mxu0
    %777 = vmatprep.mubr.f32.mxu0 0.0
    %778 = vmatmul.mubr.f32.gmra.mrb[0].mxu0 %v286
    %v779 = vpop.f32.mrb[0].mxu0
    %v780 = vadd.f32 0.0, %v779
    %v781 = vpop.f32.mrb[0].mxu0
    %782 = vmatprep.mubr.f32.mxu0 0.0
    %783 = vmatmul.mubr.f32.gmra.mrb[0].mxu0 %v289
    %v784 = vpop.f32.mrb[0].mxu0
    %v785 = vadd.f32 0.0, %v784
    %v786 = vpop.f32.mrb[0].mxu0
    %787 = vmatprep.mubr.f32.mxu0 0.0
    %788 = vmatmul.mubr.f32.gmra.mrb[0].mxu0 %v292
    %v789 = vpop.f32.mrb[0].mxu0
    %v790 = vadd.f32 0.0, %v789
    %v791 = vpop.f32.mrb[0].mxu0
    %792 = vmatprep.mubr.f32.mxu0 0.0
    %793 = vmatmul.mubr.f32.gmra.mrb[0].mxu0 %v295
    %v794 = vpop.f32.mrb[0].mxu0
    %v795 = vadd.f32 0.0, %v794
    %v796 = vpop.f32.mrb[0].mxu0
    %797 = vmatprep.mubr.f32.mxu0 0.0
    %798 = vmatmul.mubr.f32.gmra.mrb[0].mxu0 %v298
    %v799 = vpop.f32.mrb[0].mxu0
    %v800 = vadd.f32 0.0, %v799
    %v801 = vpop.f32.mrb[0].mxu0
    %802 = vmatprep.mubr.f32.mxu0 0.0
    %803 = vmatmul.mubr.f32.gmra.mrb[0].mxu0 %v301
    %v804 = vpop.f32.mrb[0].mxu0
    %v805 = vadd.f32 0.0, %v804
    %v806 = vpop.f32.mrb[0].mxu0
    %807 = vmatprep.mubr.f32.mxu0 0.0
    %808 = vmatmul.mubr.f32.gmra.mrb[0].mxu0 %v304
    %v809 = vpop.f32.mrb[0].mxu0
    %v810 = vadd.f32 0.0, %v809
    %v811 = vpop.f32.mrb[0].mxu0
    %812 = vmatprep.mubr.f32.mxu0 0.0
    %813 = vmatmul.mubr.f32.gmra.mrb[0].mxu0 %v307
    %v814 = vpop.f32.mrb[0].mxu0
    %v815 = vadd.f32 0.0, %v814
    %v816 = vpop.f32.mrb[0].mxu0
    %817 = vmatprep.mubr.f32.mxu0 0.0
    %818 = vmatmul.mubr.f32.gmra.mrb[0].mxu0 %v310
    %v819 = vpop.f32.mrb[0].mxu0
    %v820 = vadd.f32 0.0, %v819
    %v821 = vpop.f32.mrb[0].mxu0
    %822 = vmatprep.mubr.f32.mxu0 0.0
    %823 = vmatmul.mubr.f32.gmra.mrb[0].mxu0 %v313
    %v824 = vpop.f32.mrb[0].mxu0
    %v825 = vadd.f32 0.0, %v824
    %v826 = vpop.f32.mrb[0].mxu0
    %827 = vmatprep.mubr.f32.mxu0 0.0
    %828 = vmatmul.mubr.f32.gmra.mrb[0].mxu0 %v316
    %v829 = vpop.f32.mrb[0].mxu0
    %v830 = vadd.f32 0.0, %v829
    %v831 = vpop.f32.mrb[0].mxu0
    %832 = vmatprep.mubr.f32.mxu0 0.0
    %833 = vmatmul.mubr.f32.gmra.mrb[0].mxu0 %v319
    %v834 = vpop.f32.mrb[0].mxu0
    %v835 = vadd.f32 0.0, %v834
    %v836 = vpop.f32.mrb[0].mxu0
    %837 = vmatprep.mubr.f32.mxu0 0.0
    %838 = vmatmul.mubr.f32.gmra.mrb[0].mxu0 %v322
    %v839 = vpop.f32.mrb[0].mxu0
    %v840 = vadd.f32 0.0, %v839
    %v841 = vpop.f32.mrb[0].mxu0
    %842 = vmatprep.mubr.f32.mxu0 0.0
    %843 = vmatmul.mubr.f32.gmra.mrb[0].mxu0 %v325
    %v844 = vpop.f32.mrb[0].mxu0
    %v845 = vadd.f32 0.0, %v844
    %v846 = vpop.f32.mrb[0].mxu0
    %847 = vmatprep.mubr.f32.mxu0 0.0
    %848 = vmatmul.mubr.f32.gmra.mrb[0].mxu0 %v328
    %v849 = vpop.f32.mrb[0].mxu0
    %v850 = vadd.f32 0.0, %v849
    %v851 = vpop.f32.mrb[0].mxu0
    %852 = vmatprep.mubr.f32.mxu0 0.0
    %853 = vmatmul.mubr.f32.gmra.mrb[0].mxu0 %v331
    %v854 = vpop.f32.mrb[0].mxu0
    %v855 = vadd.f32 0.0, %v854
    %v856 = vpop.f32.mrb[0].mxu0
    %857 = vmatprep.mubr.f32.mxu0 0.0
    %858 = vmatmul.mubr.f32.gmra.mrb[0].mxu0 %v334
    %v859 = vpop.f32.mrb[0].mxu0
    %v860 = vadd.f32 0.0, %v859
    %v861 = vpop.f32.mrb[0].mxu0
    %862 = vmatprep.mubr.f32.mxu0 0.0
    %863 = vmatmul.mubr.f32.gmra.mrb[0].mxu0 %v337
    %v864 = vpop.f32.mrb[0].mxu0
    %v865 = vadd.f32 0.0, %v864
    %v866 = vpop.f32.mrb[0].mxu0
    %867 = vmatprep.mubr.f32.mxu0 0.0
    %868 = vmatmul.mubr.f32.gmra.mrb[0].mxu0 %v340
    %v869 = vpop.f32.mrb[0].mxu0
    %v870 = vadd.f32 0.0, %v869
    %v871 = vpop.f32.mrb[0].mxu0
    %872 = vmatprep.mubr.f32.mxu0 0.0
    %873 = vmatmul.mubr.f32.gmra.mrb[0].mxu0 %v343
    %v874 = vpop.f32.mrb[0].mxu0
    %v875 = vadd.f32 0.0, %v874
    %v876 = vpop.f32.mrb[0].mxu0
    %877 = vmatprep.mubr.f32.mxu0 0.0
    %878 = vmatmul.mubr.f32.gmra.mrb[0].mxu0 %v346
    %v879 = vpop.f32.mrb[0].mxu0
    %v880 = vadd.f32 0.0, %v879
    %v881 = vpop.f32.mrb[0].mxu0
    %882 = vmatprep.mubr.f32.mxu0 0.0
    %883 = vmatmul.mubr.f32.gmra.mrb[0].mxu0 %v349
    %v884 = vpop.f32.mrb[0].mxu0
    %v885 = vadd.f32 0.0, %v884
    %v886 = vpop.f32.mrb[0].mxu0
    %887 = vmatprep.mubr.f32.mxu0 0.0
    %888 = vmatmul.mubr.f32.gmra.mrb[0].mxu0 %v352
    %v889 = vpop.f32.mrb[0].mxu0
    %v890 = vadd.f32 0.0, %v889
    %v891 = vpop.f32.mrb[0].mxu0
    %892 = vmatprep.mubr.f32.mxu0 0.0
    %893 = vmatmul.mubr.f32.gmra.mrb[0].mxu0 %v355
    %v894 = vpop.f32.mrb[0].mxu0
    %v895 = vadd.f32 0.0, %v894
    %v896 = vpop.f32.mrb[0].mxu0
    %897 = vmatprep.mubr.f32.mxu0 0.0
    %898 = vmatmul.mubr.f32.gmra.mrb[0].mxu0 %v358
    %v899 = vpop.f32.mrb[0].mxu0
    %v900 = vadd.f32 0.0, %v899
    %v901 = vpop.f32.mrb[0].mxu0
    %902 = vmatprep.mubr.f32.mxu0 0.0
    %903 = vmatmul.mubr.f32.gmra.mrb[0].mxu0 %v361
    %v904 = vpop.f32.mrb[0].mxu0
    %v905 = vadd.f32 0.0, %v904
    %v906 = vpop.f32.mrb[0].mxu0
    %907 = vmatprep.mubr.f32.mxu0 0.0
    %908 = vmatmul.mubr.f32.gmra.mrb[0].mxu0 %v364
    %v909 = vpop.f32.mrb[0].mxu0
    %v910 = vadd.f32 0.0, %v909
    %v911 = vpop.f32.mrb[0].mxu0
    %912 = vmatprep.mubr.f32.mxu0 0.0
    %913 = vmatmul.mubr.f32.gmra.mrb[0].mxu0 %v367
    %v914 = vpop.f32.mrb[0].mxu0
    %v915 = vadd.f32 0.0, %v914
    %v916 = vpop.f32.mrb[0].mxu0
    %917 = vmatprep.mubr.f32.mxu0 0.0
    %918 = vmatmul.mubr.f32.gmra.mrb[0].mxu0 %v370
    %v919 = vpop.f32.mrb[0].mxu0
    %v920 = vadd.f32 0.0, %v919
    %v921 = vpop.f32.mrb[0].mxu0
    %922 = vmatprep.mubr.f32.mxu0 0.0
    %923 = vmatmul.mubr.f32.gmra.mrb[0].mxu0 %v373
    %v924 = vpop.f32.mrb[0].mxu0
    %v925 = vadd.f32 0.0, %v924
    %v926 = vpop.f32.mrb[0].mxu0
    %927 = vmatprep.mubr.f32.mxu0 0.0
    %928 = vmatmul.mubr.f32.gmra.mrb[0].mxu0 %v376
    %v929 = vpop.f32.mrb[0].mxu0
    %v930 = vadd.f32 0.0, %v929
    %v931 = vpop.f32.mrb[0].mxu0
    %932 = vmatprep.mubr.f32.mxu0 0.0
    %933 = vmatmul.mubr.f32.gmra.mrb[0].mxu0 %v379
    %v934 = vpop.f32.mrb[0].mxu0
    %v935 = vadd.f32 0.0, %v934
    %v936 = vpop.f32.mrb[0].mxu0
    %937 = vmatprep.mubr.f32.mxu0 0.0
    %938 = vmatmul.mubr.f32.gmra.mrb[0].mxu0 %v382
    %v939 = vpop.f32.mrb[0].mxu0
    %v940 = vadd.f32 0.0, %v939
    %v941 = vpop.f32.mrb[0].mxu0
    %942 = vmatprep.mubr.f32.mxu0 0.0
    %943 = vmatmul.mubr.f32.gmra.mrb[0].mxu0 %v385
    %v944 = vpop.f32.mrb[0].mxu0
    %v945 = vadd.f32 0.0, %v944
    %v946 = vpop.f32.mrb[0].mxu0
    %947 = vmatprep.mubr.f32.mxu0 0.0
    %948 = vmatmul.mubr.f32.gmra.mrb[0].mxu0 %v388
    %v949 = vpop.f32.mrb[0].mxu0
    %v950 = vadd.f32 0.0, %v949
    %v951 = vpop.f32.mrb[0].mxu0
    %952 = vmatprep.mubr.f32.mxu0 0.0
    %953 = vmatmul.mubr.f32.gmra.mrb[0].mxu0 %v391
    %v954 = vpop.f32.mrb[0].mxu0
    %v955 = vadd.f32 0.0, %v954
    %v956 = vpop.f32.mrb[0].mxu0
    %957 = vmatprep.mubr.f32.mxu0 0.0
    %958 = vmatmul.mubr.f32.gmra.mrb[0].mxu0 %v394
    %v959 = vpop.f32.mrb[0].mxu0
    %v960 = vadd.f32 0.0, %v959
    %v961 = vpop.f32.mrb[0].mxu0
    %962 = vmatprep.mubr.f32.mxu0 0.0
    %963 = vmatmul.mubr.f32.gmra.mrb[0].mxu0 %v397
    %v964 = vpop.f32.mrb[0].mxu0
    %v965 = vadd.f32 0.0, %v964
    %v966 = vpop.f32.mrb[0].mxu0
    %967 = vmatprep.mubr.f32.mxu0 0.0
    %968 = vmatmul.mubr.f32.gmra.mrb[0].mxu0 %v400
    %v969 = vpop.f32.mrb[0].mxu0
    %v970 = vadd.f32 0.0, %v969
    %v971 = vpop.f32.mrb[0].mxu0
    %972 = vmatprep.mubr.f32.mxu0 0.0
    %973 = vmatmul.mubr.f32.gmra.mrb[0].mxu0 %v403
    %v974 = vpop.f32.mrb[0].mxu0
    %v975 = vadd.f32 0.0, %v974
    %v976 = vpop.f32.mrb[0].mxu0
    %977 = vmatprep.mubr.f32.mxu0 0.0
    %978 = vmatmul.mubr.f32.gmra.mrb[0].mxu0 %v406
    %v979 = vpop.f32.mrb[0].mxu0
    %v980 = vadd.f32 0.0, %v979
    %v981 = vpop.f32.mrb[0].mxu0
    %982 = vmatprep.mubr.f32.mxu0 0.0
    %983 = vmatmul.mubr.f32.gmra.mrb[0].mxu0 %v409
    %v984 = vpop.f32.mrb[0].mxu0
    %v985 = vadd.f32 0.0, %v984
    %v986 = vpop.f32.mrb[0].mxu0
    %987 = vmatprep.mubr.f32.mxu0 0.0
    %988 = vmatmul.mubr.f32.gmra.mrb[0].mxu0 %v412
    %v989 = vpop.f32.mrb[0].mxu0
    %v990 = vadd.f32 0.0, %v989
    %v991 = vpop.f32.mrb[0].mxu0
    %992 = vmatprep.mubr.f32.mxu0 0.0
    %993 = vmatmul.mubr.f32.gmra.mrb[0].mxu0 %v415
    %v994 = vpop.f32.mrb[0].mxu0
    %v995 = vadd.f32 0.0, %v994
    %v996 = vpop.f32.mrb[0].mxu0
    %997 = vmatprep.mubr.f32.mxu0 0.0
    %998 = vmatmul.mubr.f32.gmra.mrb[0].mxu0 %v418
    %v999 = vpop.f32.mrb[0].mxu0
    %v1000 = vadd.f32 0.0, %v999
    %v1001 = vpop.f32.mrb[0].mxu0
    %1002 = vmatprep.mubr.f32.mxu0 0.0
    %1003 = vmatmul.mubr.f32.gmra.mrb[0].mxu0 %v421
    %v1004 = vpop.f32.mrb[0].mxu0
    %v1005 = vadd.f32 0.0, %v1004
    %v1006 = vpop.f32.mrb[0].mxu0
    %1007 = vmatprep.mubr.f32.mxu0 0.0
    %1008 = vmatmul.mubr.f32.gmra.mrb[0].mxu0 %v424
    %v1009 = vpop.f32.mrb[0].mxu0
    %v1010 = vadd.f32 0.0, %v1009
    %v1011 = vpop.f32.mrb[0].mxu0
    %1012 = vmatprep.mubr.f32.mxu0 0.0
    %1013 = vmatmul.mubr.f32.gmra.mrb[0].mxu0 %v427
    %v1014 = vpop.f32.mrb[0].mxu0
    %v1015 = vadd.f32 0.0, %v1014
    %v1016 = vpop.f32.mrb[0].mxu0
    %1017 = vmatprep.mubr.f32.mxu0 0.0
    %1018 = vmatmul.mubr.f32.gmra.mrb[0].mxu0 %v430
    %v1019 = vpop.f32.mrb[0].mxu0
    %v1020 = vadd.f32 0.0, %v1019
    %v1021 = vpop.f32.mrb[0].mxu0
    %1022 = vmatprep.mubr.f32.mxu0 0.0
    %1023 = vmatmul.mubr.f32.gmra.mrb[0].mxu0 %v433
    %v1024 = vpop.f32.mrb[0].mxu0
    %v1025 = vadd.f32 0.0, %v1024
    %v1026 = vpop.f32.mrb[0].mxu0
    %1027 = vmatprep.mubr.f32.mxu0 0.0
    %1028 = vmatmul.mubr.f32.gmra.mrb[0].mxu0 %v436
    %v1029 = vpop.f32.mrb[0].mxu0
    %v1030 = vadd.f32 0.0, %v1029
    %v1031 = vpop.f32.mrb[0].mxu0
    %1032 = vmatprep.mubr.f32.mxu0 0.0
    %1033 = vmatmul.mubr.f32.gmra.mrb[0].mxu0 %v439
    %v1034 = vpop.f32.mrb[0].mxu0
    %v1035 = vadd.f32 0.0, %v1034
    %v1036 = vpop.f32.mrb[0].mxu0
    %1037 = vmatprep.mubr.f32.mxu0 0.0
    %1038 = vmatmul.mubr.f32.gmra.mrb[0].mxu0 %v442
    %v1039 = vpop.f32.mrb[0].mxu0
    %v1040 = vadd.f32 0.0, %v1039
    %v1041 = vpop.f32.mrb[0].mxu0
    %1042 = vmatprep.mubr.f32.mxu0 0.0
    %1043 = vmatmul.mubr.f32.gmra.mrb[0].mxu0 %v445
    %v1044 = vpop.f32.mrb[0].mxu0
    %v1045 = vadd.f32 0.0, %v1044
    %v1046 = vpop.f32.mrb[0].mxu0
    %1047 = vmatprep.mubr.f32.mxu0 0.0
    %1048 = vmatmul.mubr.f32.gmra.mrb[0].mxu0 %v448
    %v1049 = vpop.f32.mrb[0].mxu0
    %v1050 = vadd.f32 0.0, %v1049
    %v1051 = vpop.f32.mrb[0].mxu0
    %1052 = vmatprep.mubr.f32.mxu0 0.0
    %1053 = vmatmul.mubr.f32.gmra.mrb[0].mxu0 %v451
    %v1054 = vpop.f32.mrb[0].mxu0
    %v1055 = vadd.f32 0.0, %v1054
    %v1056 = vpop.f32.mrb[0].mxu0
    %1057 = vmatprep.mubr.f32.mxu0 0.0
    %1058 = vmatmul.mubr.f32.gmra.mrb[0].mxu0 %v454
    %v1059 = vpop.f32.mrb[0].mxu0
    %v1060 = vadd.f32 0.0, %v1059
    %v1061 = vpop.f32.mrb[0].mxu0
    %1062 = vmatprep.mubr.f32.mxu0 0.0
    %1063 = vmatmul.mubr.f32.gmra.mrb[0].mxu0 %v457
    %v1064 = vpop.f32.mrb[0].mxu0
    %v1065 = vadd.f32 0.0, %v1064
    %v1066 = vpop.f32.mrb[0].mxu0
    %1067 = vmatprep.mubr.f32.mxu0 0.0
    %1068 = vmatmul.mubr.f32.gmra.mrb[0].mxu0 %v460
    %v1069 = vpop.f32.mrb[0].mxu0
    %v1070 = vadd.f32 0.0, %v1069
    %v1071 = vpop.f32.mrb[0].mxu0
    %1072 = vmatprep.mubr.f32.mxu0 0.0
    %1073 = vmatmul.mubr.f32.gmra.mrb[0].mxu0 %v463
    %v1074 = vpop.f32.mrb[0].mxu0
    %v1075 = vadd.f32 0.0, %v1074
    %v1076 = vpop.f32.mrb[0].mxu0
    %1077 = vmatprep.mubr.f32.mxu0 0.0
    %1078 = vmatmul.mubr.f32.gmra.mrb[0].mxu0 %v466
    %v1079 = vpop.f32.mrb[0].mxu0
    %v1080 = vadd.f32 0.0, %v1079
    %v1081 = vpop.f32.mrb[0].mxu0
    %1082 = vmatprep.mubr.f32.mxu0 0.0
    %1083 = vmatmul.mubr.f32.gmra.mrb[0].mxu0 %v469
    %v1084 = vpop.f32.mrb[0].mxu0
    %v1085 = vadd.f32 0.0, %v1084
    %v1086 = vpop.f32.mrb[0].mxu0
    %1087 = vmatprep.mubr.f32.mxu0 0.0
    %1088 = vmatmul.mubr.f32.gmra.mrb[0].mxu0 %v472
    %v1089 = vpop.f32.mrb[0].mxu0
    %v1090 = vadd.f32 0.0, %v1089
    %v1091 = vpop.f32.mrb[0].mxu0
    %1092 = vmatprep.mubr.f32.mxu0 0.0
    %1093 = vmatmul.mubr.f32.gmra.mrb[0].mxu0 %v475
    %v1094 = vpop.f32.mrb[0].mxu0
    %v1095 = vadd.f32 0.0, %v1094
    %v1096 = vpop.f32.mrb[0].mxu0
    %1097 = vmatprep.mubr.f32.mxu0 0.0
    %1098 = vmatmul.mubr.f32.gmra.mrb[0].mxu0 %v478
    %v1099 = vpop.f32.mrb[0].mxu0
    %v1100 = vadd.f32 0.0, %v1099
    %v1101 = vpop.f32.mrb[0].mxu0
    %1102 = vmatprep.mubr.f32.mxu0 0.0
    %1103 = vmatmul.mubr.f32.gmra.mrb[0].mxu0 %v481
    %v1104 = vpop.f32.mrb[0].mxu0
    %v1105 = vadd.f32 0.0, %v1104
    %v1106 = vpop.f32.mrb[0].mxu0
    %1107 = vdwg.mxu0
    %v1108 = vtanh.pop %v550
    %v1109 = vtanh.pop %v555
    %v1110 = vtanh.pop %v560
    %v1111 = vtanh.pop %v565
    %v1112 = vtanh.pop %v570
    %v1113 = vtanh.pop %v575
    %v1114 = vtanh.pop %v580
    %v1115 = vtanh.pop %v585
    %v1116 = vtanh.pop %v590
    %v1117 = vtanh.pop %v595
    %v1118 = vtanh.pop %v600
    %v1119 = vtanh.pop %v605
    %v1120 = vtanh.pop %v610
    %v1121 = vtanh.pop %v615
    %v1122 = vtanh.pop %v620
    %v1123 = vtanh.pop %v625
    %v1124 = vtanh.pop %v630
    %v1125 = vtanh.pop %v635
    %v1126 = vtanh.pop %v640
    %v1127 = vtanh.pop %v645
    %v1128 = vtanh.pop %v650
    %v1129 = vtanh.pop %v655
    %v1130 = vtanh.pop %v660
    %v1131 = vtanh.pop %v665
    %v1132 = vtanh.pop %v670
    %v1133 = vtanh.pop %v675
    %v1134 = vtanh.pop %v680
    %v1135 = vtanh.pop %v685
    %v1136 = vtanh.pop %v690
    %v1137 = vtanh.pop %v695
    %v1138 = vtanh.pop %v700
    %v1139 = vtanh.pop %v705
    %v1140 = vtanh.pop %v710
    %v1141 = vtanh.pop %v715
    %v1142 = vtanh.pop %v720
    %v1143 = vtanh.pop %v725
    %v1144 = vtanh.pop %v730
    %v1145 = vtanh.pop %v735
    %v1146 = vtanh.pop %v740
    %v1147 = vtanh.pop %v745
    %v1148 = vtanh.pop %v750
    %v1149 = vtanh.pop %v755
    %v1150 = vtanh.pop %v760
    %v1151 = vtanh.pop %v765
    %v1152 = vtanh.pop %v770
    %v1153 = vtanh.pop %v775
    %v1154 = vtanh.pop %v780
    %v1155 = vtanh.pop %v785
    %v1156 = vtanh.pop %v790
    %v1157 = vtanh.pop %v795
    %v1158 = vtanh.pop %v800
    %v1159 = vtanh.pop %v805
    %v1160 = vtanh.pop %v810
    %v1161 = vtanh.pop %v815
    %v1162 = vtanh.pop %v820
    %v1163 = vtanh.pop %v825
    %v1164 = vtanh.pop %v830
    %v1165 = vtanh.pop %v835
    %v1166 = vtanh.pop %v840
    %v1167 = vtanh.pop %v845
    %v1168 = vtanh.pop %v850
    %v1169 = vtanh.pop %v855
    %v1170 = vtanh.pop %v860
    %v1171 = vtanh.pop %v865
    %v1172 = vtanh.pop %v870
    %v1173 = vtanh.pop %v875
    %v1174 = vtanh.pop %v880
    %v1175 = vtanh.pop %v885
    %v1176 = vtanh.pop %v890
    %v1177 = vtanh.pop %v895
    %v1178 = vtanh.pop %v900
    %v1179 = vtanh.pop %v905
    %v1180 = vtanh.pop %v910
    %v1181 = vtanh.pop %v915
    %v1182 = vtanh.pop %v920
    %v1183 = vtanh.pop %v925
    %v1184 = vtanh.pop %v930
    %v1185 = vtanh.pop %v935
    %v1186 = vtanh.pop %v940
    %v1187 = vtanh.pop %v945
    %v1188 = vtanh.pop %v950
    %v1189 = vtanh.pop %v955
    %v1190 = vtanh.pop %v960
    %v1191 = vtanh.pop %v965
    %v1192 = vtanh.pop %v970
    %v1193 = vtanh.pop %v975
    %v1194 = vtanh.pop %v980
    %v1195 = vtanh.pop %v985
    %v1196 = vtanh.pop %v990
    %v1197 = vtanh.pop %v995
    %v1198 = vtanh.pop %v1000
    %v1199 = vtanh.pop %v1005
    %v1200 = vtanh.pop %v1010
    %v1201 = vtanh.pop %v1015
    %v1202 = vtanh.pop %v1020
    %v1203 = vtanh.pop %v1025
    %v1204 = vtanh.pop %v1030
    %v1205 = vtanh.pop %v1035
    %v1206 = vtanh.pop %v1040
    %v1207 = vtanh.pop %v1045
    %v1208 = vtanh.pop %v1050
    %v1209 = vtanh.pop %v1055
    %v1210 = vtanh.pop %v1060
    %v1211 = vtanh.pop %v1065
    %v1212 = vtanh.pop %v1070
    %v1213 = vtanh.pop %v1075
    %v1214 = vtanh.pop %v1080
    %v1215 = vtanh.pop %v1085
    %v1216 = vtanh.pop %v1090
    %v1217 = vtanh.pop %v1095
    %v1218 = vtanh.pop %v1100
    %v1219 = vtanh.pop %v1105
    %v1220 = vld [vmem:[%s4] sm:$0x1]
    %v1222 = vlaneseq
    %v1223 = vshrl.u32 %v1222, 7
    %v1224 = vsub.s32 0, %v1223
    %v1225 = vrot.slane %v1220, %v1224
    %v1227 = vmul.f32 %v1108, %v1225
    %v1228 = vmul.f32 %v1109, %v1225
    %v1229 = vmul.f32 %v1110, %v1225
    %v1230 = vmul.f32 %v1111, %v1225
    %v1231 = vmul.f32 %v1112, %v1225
    %v1232 = vmul.f32 %v1113, %v1225
    %v1233 = vmul.f32 %v1114, %v1225
    %v1234 = vmul.f32 %v1115, %v1225
    %v1235 = vmul.f32 %v1116, %v1225
    %v1236 = vmul.f32 %v1117, %v1225
    %v1237 = vmul.f32 %v1118, %v1225
    %v1238 = vmul.f32 %v1119, %v1225
    %v1239 = vmul.f32 %v1120, %v1225
    %v1240 = vmul.f32 %v1121, %v1225
    %v1241 = vmul.f32 %v1122, %v1225
    %v1242 = vmul.f32 %v1123, %v1225
    %v1243 = vmul.f32 %v1124, %v1225
    %v1244 = vmul.f32 %v1125, %v1225
    %v1245 = vmul.f32 %v1126, %v1225
    %v1246 = vmul.f32 %v1127, %v1225
    %v1247 = vmul.f32 %v1128, %v1225
    %v1248 = vmul.f32 %v1129, %v1225
    %v1249 = vmul.f32 %v1130, %v1225
    %v1250 = vmul.f32 %v1131, %v1225
    %v1251 = vmul.f32 %v1132, %v1225
    %v1252 = vmul.f32 %v1133, %v1225
    %v1253 = vmul.f32 %v1134, %v1225
    %v1254 = vmul.f32 %v1135, %v1225
    %v1255 = vmul.f32 %v1136, %v1225
    %v1256 = vmul.f32 %v1137, %v1225
    %v1257 = vmul.f32 %v1138, %v1225
    %v1258 = vmul.f32 %v1139, %v1225
    %v1259 = vmul.f32 %v1140, %v1225
    %v1260 = vmul.f32 %v1141, %v1225
    %v1261 = vmul.f32 %v1142, %v1225
    %v1262 = vmul.f32 %v1143, %v1225
    %v1263 = vmul.f32 %v1144, %v1225
    %v1264 = vmul.f32 %v1145, %v1225
    %v1265 = vmul.f32 %v1146, %v1225
    %v1266 = vmul.f32 %v1147, %v1225
    %v1267 = vmul.f32 %v1148, %v1225
    %v1268 = vmul.f32 %v1149, %v1225
    %v1269 = vmul.f32 %v1150, %v1225
    %v1270 = vmul.f32 %v1151, %v1225
    %v1271 = vmul.f32 %v1152, %v1225
    %v1272 = vmul.f32 %v1153, %v1225
    %v1273 = vmul.f32 %v1154, %v1225
    %v1274 = vmul.f32 %v1155, %v1225
    %v1275 = vmul.f32 %v1156, %v1225
    %v1276 = vmul.f32 %v1157, %v1225
    %v1277 = vmul.f32 %v1158, %v1225
    %v1278 = vmul.f32 %v1159, %v1225
    %v1279 = vmul.f32 %v1160, %v1225
    %v1280 = vmul.f32 %v1161, %v1225
    %v1281 = vmul.f32 %v1162, %v1225
    %v1282 = vmul.f32 %v1163, %v1225
    %v1283 = vmul.f32 %v1164, %v1225
    %v1284 = vmul.f32 %v1165, %v1225
    %v1285 = vmul.f32 %v1166, %v1225
    %v1286 = vmul.f32 %v1167, %v1225
    %v1287 = vmul.f32 %v1168, %v1225
    %v1288 = vmul.f32 %v1169, %v1225
    %v1289 = vmul.f32 %v1170, %v1225
    %v1290 = vmul.f32 %v1171, %v1225
    %v1291 = vmul.f32 %v1172, %v1225
    %v1292 = vmul.f32 %v1173, %v1225
    %v1293 = vmul.f32 %v1174, %v1225
    %v1294 = vmul.f32 %v1175, %v1225
    %v1295 = vmul.f32 %v1176, %v1225
    %v1296 = vmul.f32 %v1177, %v1225
    %v1297 = vmul.f32 %v1178, %v1225
    %v1298 = vmul.f32 %v1179, %v1225
    %v1299 = vmul.f32 %v1180, %v1225
    %v1300 = vmul.f32 %v1181, %v1225
    %v1301 = vmul.f32 %v1182, %v1225
    %v1302 = vmul.f32 %v1183, %v1225
    %v1303 = vmul.f32 %v1184, %v1225
    %v1304 = vmul.f32 %v1185, %v1225
    %v1305 = vmul.f32 %v1186, %v1225
    %v1306 = vmul.f32 %v1187, %v1225
    %v1307 = vmul.f32 %v1188, %v1225
    %v1308 = vmul.f32 %v1189, %v1225
    %v1309 = vmul.f32 %v1190, %v1225
    %v1310 = vmul.f32 %v1191, %v1225
    %v1311 = vmul.f32 %v1192, %v1225
    %v1312 = vmul.f32 %v1193, %v1225
    %v1313 = vmul.f32 %v1194, %v1225
    %v1314 = vmul.f32 %v1195, %v1225
    %v1315 = vmul.f32 %v1196, %v1225
    %v1316 = vmul.f32 %v1197, %v1225
    %v1317 = vmul.f32 %v1198, %v1225
    %v1318 = vmul.f32 %v1199, %v1225
    %v1319 = vmul.f32 %v1200, %v1225
    %v1320 = vmul.f32 %v1201, %v1225
    %v1321 = vmul.f32 %v1202, %v1225
    %v1322 = vmul.f32 %v1203, %v1225
    %v1323 = vmul.f32 %v1204, %v1225
    %v1324 = vmul.f32 %v1205, %v1225
    %v1325 = vmul.f32 %v1206, %v1225
    %v1326 = vmul.f32 %v1207, %v1225
    %v1327 = vmul.f32 %v1208, %v1225
    %v1328 = vmul.f32 %v1209, %v1225
    %v1329 = vmul.f32 %v1210, %v1225
    %v1330 = vmul.f32 %v1211, %v1225
    %v1331 = vmul.f32 %v1212, %v1225
    %v1332 = vmul.f32 %v1213, %v1225
    %v1333 = vmul.f32 %v1214, %v1225
    %v1334 = vmul.f32 %v1215, %v1225
    %v1335 = vmul.f32 %v1216, %v1225
    %v1336 = vmul.f32 %v1217, %v1225
    %v1337 = vmul.f32 %v1218, %v1225
    %v1338 = vmul.f32 %v1219, %v1225
    %vm1339 = vcmask 130048
    %v1340 = vsel %vm1339, %v1227, 0.0
    %1341 = vadd.xlane.f32.xlu0 %v1340
    %v1342 = vpop.xlane.xlu0 %1341
    %v1343 = vsel %vm1339, %v1228, 0.0
    %1344 = vadd.xlane.f32.xlu0 %v1343
    %v1345 = vpop.xlane.xlu0 %1344
    %v1346 = vsel %vm1339, %v1229, 0.0
    %1347 = vadd.xlane.f32.xlu0 %v1346
    %v1348 = vpop.xlane.xlu0 %1347
    %v1349 = vsel %vm1339, %v1230, 0.0
    %1350 = vadd.xlane.f32.xlu0 %v1349
    %v1351 = vpop.xlane.xlu0 %1350
    %v1352 = vsel %vm1339, %v1231, 0.0
    %1353 = vadd.xlane.f32.xlu0 %v1352
    %v1354 = vpop.xlane.xlu0 %1353
    %v1355 = vsel %vm1339, %v1232, 0.0
    %1356 = vadd.xlane.f32.xlu0 %v1355
    %v1357 = vpop.xlane.xlu0 %1356
    %v1358 = vsel %vm1339, %v1233, 0.0
    %1359 = vadd.xlane.f32.xlu0 %v1358
    %v1360 = vpop.xlane.xlu0 %1359
    %v1361 = vsel %vm1339, %v1234, 0.0
    %1362 = vadd.xlane.f32.xlu0 %v1361
    %v1363 = vpop.xlane.xlu0 %1362
    %v1364 = vsel %vm1339, %v1235, 0.0
    %1365 = vadd.xlane.f32.xlu0 %v1364
    %v1366 = vpop.xlane.xlu0 %1365
    %v1367 = vsel %vm1339, %v1236, 0.0
    %1368 = vadd.xlane.f32.xlu0 %v1367
    %v1369 = vpop.xlane.xlu0 %1368
    %v1370 = vsel %vm1339, %v1237, 0.0
    %1371 = vadd.xlane.f32.xlu0 %v1370
    %v1372 = vpop.xlane.xlu0 %1371
    %v1373 = vsel %vm1339, %v1238, 0.0
    %1374 = vadd.xlane.f32.xlu0 %v1373
    %v1375 = vpop.xlane.xlu0 %1374
    %v1376 = vsel %vm1339, %v1239, 0.0
    %1377 = vadd.xlane.f32.xlu0 %v1376
    %v1378 = vpop.xlane.xlu0 %1377
    %v1379 = vsel %vm1339, %v1240, 0.0
    %1380 = vadd.xlane.f32.xlu0 %v1379
    %v1381 = vpop.xlane.xlu0 %1380
    %v1382 = vsel %vm1339, %v1241, 0.0
    %1383 = vadd.xlane.f32.xlu0 %v1382
    %v1384 = vpop.xlane.xlu0 %1383
    %v1385 = vsel %vm1339, %v1242, 0.0
    %1386 = vadd.xlane.f32.xlu0 %v1385
    %v1387 = vpop.xlane.xlu0 %1386
    %v1388 = vsel %vm1339, %v1243, 0.0
    %1389 = vadd.xlane.f32.xlu0 %v1388
    %v1390 = vpop.xlane.xlu0 %1389
    %v1391 = vsel %vm1339, %v1244, 0.0
    %1392 = vadd.xlane.f32.xlu0 %v1391
    %v1393 = vpop.xlane.xlu0 %1392
    %v1394 = vsel %vm1339, %v1245, 0.0
    %1395 = vadd.xlane.f32.xlu0 %v1394
    %v1396 = vpop.xlane.xlu0 %1395
    %v1397 = vsel %vm1339, %v1246, 0.0
    %1398 = vadd.xlane.f32.xlu0 %v1397
    %v1399 = vpop.xlane.xlu0 %1398
    %v1400 = vsel %vm1339, %v1247, 0.0
    %1401 = vadd.xlane.f32.xlu0 %v1400
    %v1402 = vpop.xlane.xlu0 %1401
    %v1403 = vsel %vm1339, %v1248, 0.0
    %1404 = vadd.xlane.f32.xlu0 %v1403
    %v1405 = vpop.xlane.xlu0 %1404
    %v1406 = vsel %vm1339, %v1249, 0.0
    %1407 = vadd.xlane.f32.xlu0 %v1406
    %v1408 = vpop.xlane.xlu0 %1407
    %v1409 = vsel %vm1339, %v1250, 0.0
    %1410 = vadd.xlane.f32.xlu0 %v1409
    %v1411 = vpop.xlane.xlu0 %1410
    %v1412 = vsel %vm1339, %v1251, 0.0
    %1413 = vadd.xlane.f32.xlu0 %v1412
    %v1414 = vpop.xlane.xlu0 %1413
    %v1415 = vsel %vm1339, %v1252, 0.0
    %1416 = vadd.xlane.f32.xlu0 %v1415
    %v1417 = vpop.xlane.xlu0 %1416
    %v1418 = vsel %vm1339, %v1253, 0.0
    %1419 = vadd.xlane.f32.xlu0 %v1418
    %v1420 = vpop.xlane.xlu0 %1419
    %v1421 = vsel %vm1339, %v1254, 0.0
    %1422 = vadd.xlane.f32.xlu0 %v1421
    %v1423 = vpop.xlane.xlu0 %1422
    %v1424 = vsel %vm1339, %v1255, 0.0
    %1425 = vadd.xlane.f32.xlu0 %v1424
    %v1426 = vpop.xlane.xlu0 %1425
    %v1427 = vsel %vm1339, %v1256, 0.0
    %1428 = vadd.xlane.f32.xlu0 %v1427
    %v1429 = vpop.xlane.xlu0 %1428
    %v1430 = vsel %vm1339, %v1257, 0.0
    %1431 = vadd.xlane.f32.xlu0 %v1430
    %v1432 = vpop.xlane.xlu0 %1431
    %v1433 = vsel %vm1339, %v1258, 0.0
    %1434 = vadd.xlane.f32.xlu0 %v1433
    %v1435 = vpop.xlane.xlu0 %1434
    %v1436 = vsel %vm1339, %v1259, 0.0
    %1437 = vadd.xlane.f32.xlu0 %v1436
    %v1438 = vpop.xlane.xlu0 %1437
    %v1439 = vsel %vm1339, %v1260, 0.0
    %1440 = vadd.xlane.f32.xlu0 %v1439
    %v1441 = vpop.xlane.xlu0 %1440
    %v1442 = vsel %vm1339, %v1261, 0.0
    %1443 = vadd.xlane.f32.xlu0 %v1442
    %v1444 = vpop.xlane.xlu0 %1443
    %v1445 = vsel %vm1339, %v1262, 0.0
    %1446 = vadd.xlane.f32.xlu0 %v1445
    %v1447 = vpop.xlane.xlu0 %1446
    %v1448 = vsel %vm1339, %v1263, 0.0
    %1449 = vadd.xlane.f32.xlu0 %v1448
    %v1450 = vpop.xlane.xlu0 %1449
    %v1451 = vsel %vm1339, %v1264, 0.0
    %1452 = vadd.xlane.f32.xlu0 %v1451
    %v1453 = vpop.xlane.xlu0 %1452
    %v1454 = vsel %vm1339, %v1265, 0.0
    %1455 = vadd.xlane.f32.xlu0 %v1454
    %v1456 = vpop.xlane.xlu0 %1455
    %v1457 = vsel %vm1339, %v1266, 0.0
    %1458 = vadd.xlane.f32.xlu0 %v1457
    %v1459 = vpop.xlane.xlu0 %1458
    %v1460 = vsel %vm1339, %v1267, 0.0
    %1461 = vadd.xlane.f32.xlu0 %v1460
    %v1462 = vpop.xlane.xlu0 %1461
    %v1463 = vsel %vm1339, %v1268, 0.0
    %1464 = vadd.xlane.f32.xlu0 %v1463
    %v1465 = vpop.xlane.xlu0 %1464
    %v1466 = vsel %vm1339, %v1269, 0.0
    %1467 = vadd.xlane.f32.xlu0 %v1466
    %v1468 = vpop.xlane.xlu0 %1467
    %v1469 = vsel %vm1339, %v1270, 0.0
    %1470 = vadd.xlane.f32.xlu0 %v1469
    %v1471 = vpop.xlane.xlu0 %1470
    %v1472 = vsel %vm1339, %v1271, 0.0
    %1473 = vadd.xlane.f32.xlu0 %v1472
    %v1474 = vpop.xlane.xlu0 %1473
    %v1475 = vsel %vm1339, %v1272, 0.0
    %1476 = vadd.xlane.f32.xlu0 %v1475
    %v1477 = vpop.xlane.xlu0 %1476
    %v1478 = vsel %vm1339, %v1273, 0.0
    %1479 = vadd.xlane.f32.xlu0 %v1478
    %v1480 = vpop.xlane.xlu0 %1479
    %v1481 = vsel %vm1339, %v1274, 0.0
    %1482 = vadd.xlane.f32.xlu0 %v1481
    %v1483 = vpop.xlane.xlu0 %1482
    %v1484 = vsel %vm1339, %v1275, 0.0
    %1485 = vadd.xlane.f32.xlu0 %v1484
    %v1486 = vpop.xlane.xlu0 %1485
    %v1487 = vsel %vm1339, %v1276, 0.0
    %1488 = vadd.xlane.f32.xlu0 %v1487
    %v1489 = vpop.xlane.xlu0 %1488
    %v1490 = vsel %vm1339, %v1277, 0.0
    %1491 = vadd.xlane.f32.xlu0 %v1490
    %v1492 = vpop.xlane.xlu0 %1491
    %v1493 = vsel %vm1339, %v1278, 0.0
    %1494 = vadd.xlane.f32.xlu0 %v1493
    %v1495 = vpop.xlane.xlu0 %1494
    %v1496 = vsel %vm1339, %v1279, 0.0
    %1497 = vadd.xlane.f32.xlu0 %v1496
    %v1498 = vpop.xlane.xlu0 %1497
    %v1499 = vsel %vm1339, %v1280, 0.0
    %1500 = vadd.xlane.f32.xlu0 %v1499
    %v1501 = vpop.xlane.xlu0 %1500
    %v1502 = vsel %vm1339, %v1281, 0.0
    %1503 = vadd.xlane.f32.xlu0 %v1502
    %v1504 = vpop.xlane.xlu0 %1503
    %v1505 = vsel %vm1339, %v1282, 0.0
    %1506 = vadd.xlane.f32.xlu0 %v1505
    %v1507 = vpop.xlane.xlu0 %1506
    %v1508 = vsel %vm1339, %v1283, 0.0
    %1509 = vadd.xlane.f32.xlu0 %v1508
    %v1510 = vpop.xlane.xlu0 %1509
    %v1511 = vsel %vm1339, %v1284, 0.0
    %1512 = vadd.xlane.f32.xlu0 %v1511
    %v1513 = vpop.xlane.xlu0 %1512
    %v1514 = vsel %vm1339, %v1285, 0.0
    %1515 = vadd.xlane.f32.xlu0 %v1514
    %v1516 = vpop.xlane.xlu0 %1515
    %v1517 = vsel %vm1339, %v1286, 0.0
    %1518 = vadd.xlane.f32.xlu0 %v1517
    %v1519 = vpop.xlane.xlu0 %1518
    %v1520 = vsel %vm1339, %v1287, 0.0
    %1521 = vadd.xlane.f32.xlu0 %v1520
    %v1522 = vpop.xlane.xlu0 %1521
    %v1523 = vsel %vm1339, %v1288, 0.0
    %1524 = vadd.xlane.f32.xlu0 %v1523
    %v1525 = vpop.xlane.xlu0 %1524
    %v1526 = vsel %vm1339, %v1289, 0.0
    %1527 = vadd.xlane.f32.xlu0 %v1526
    %v1528 = vpop.xlane.xlu0 %1527
    %v1529 = vsel %vm1339, %v1290, 0.0
    %1530 = vadd.xlane.f32.xlu0 %v1529
    %v1531 = vpop.xlane.xlu0 %1530
    %v1532 = vsel %vm1339, %v1291, 0.0
    %1533 = vadd.xlane.f32.xlu0 %v1532
    %v1534 = vpop.xlane.xlu0 %1533
    %v1535 = vsel %vm1339, %v1292, 0.0
    %1536 = vadd.xlane.f32.xlu0 %v1535
    %v1537 = vpop.xlane.xlu0 %1536
    %v1538 = vsel %vm1339, %v1293, 0.0
    %1539 = vadd.xlane.f32.xlu0 %v1538
    %v1540 = vpop.xlane.xlu0 %1539
    %v1541 = vsel %vm1339, %v1294, 0.0
    %1542 = vadd.xlane.f32.xlu0 %v1541
    %v1543 = vpop.xlane.xlu0 %1542
    %v1544 = vsel %vm1339, %v1295, 0.0
    %1545 = vadd.xlane.f32.xlu0 %v1544
    %v1546 = vpop.xlane.xlu0 %1545
    %v1547 = vsel %vm1339, %v1296, 0.0
    %1548 = vadd.xlane.f32.xlu0 %v1547
    %v1549 = vpop.xlane.xlu0 %1548
    %v1550 = vsel %vm1339, %v1297, 0.0
    %1551 = vadd.xlane.f32.xlu0 %v1550
    %v1552 = vpop.xlane.xlu0 %1551
    %v1553 = vsel %vm1339, %v1298, 0.0
    %1554 = vadd.xlane.f32.xlu0 %v1553
    %v1555 = vpop.xlane.xlu0 %1554
    %v1556 = vsel %vm1339, %v1299, 0.0
    %1557 = vadd.xlane.f32.xlu0 %v1556
    %v1558 = vpop.xlane.xlu0 %1557
    %v1559 = vsel %vm1339, %v1300, 0.0
    %1560 = vadd.xlane.f32.xlu0 %v1559
    %v1561 = vpop.xlane.xlu0 %1560
    %v1562 = vsel %vm1339, %v1301, 0.0
    %1563 = vadd.xlane.f32.xlu0 %v1562
    %v1564 = vpop.xlane.xlu0 %1563
    %v1565 = vsel %vm1339, %v1302, 0.0
    %1566 = vadd.xlane.f32.xlu0 %v1565
    %v1567 = vpop.xlane.xlu0 %1566
    %v1568 = vsel %vm1339, %v1303, 0.0
    %1569 = vadd.xlane.f32.xlu0 %v1568
    %v1570 = vpop.xlane.xlu0 %1569
    %v1571 = vsel %vm1339, %v1304, 0.0
    %1572 = vadd.xlane.f32.xlu0 %v1571
    %v1573 = vpop.xlane.xlu0 %1572
    %v1574 = vsel %vm1339, %v1305, 0.0
    %1575 = vadd.xlane.f32.xlu0 %v1574
    %v1576 = vpop.xlane.xlu0 %1575
    %v1577 = vsel %vm1339, %v1306, 0.0
    %1578 = vadd.xlane.f32.xlu0 %v1577
    %v1579 = vpop.xlane.xlu0 %1578
    %v1580 = vsel %vm1339, %v1307, 0.0
    %1581 = vadd.xlane.f32.xlu0 %v1580
    %v1582 = vpop.xlane.xlu0 %1581
    %v1583 = vsel %vm1339, %v1308, 0.0
    %1584 = vadd.xlane.f32.xlu0 %v1583
    %v1585 = vpop.xlane.xlu0 %1584
    %v1586 = vsel %vm1339, %v1309, 0.0
    %1587 = vadd.xlane.f32.xlu0 %v1586
    %v1588 = vpop.xlane.xlu0 %1587
    %v1589 = vsel %vm1339, %v1310, 0.0
    %1590 = vadd.xlane.f32.xlu0 %v1589
    %v1591 = vpop.xlane.xlu0 %1590
    %v1592 = vsel %vm1339, %v1311, 0.0
    %1593 = vadd.xlane.f32.xlu0 %v1592
    %v1594 = vpop.xlane.xlu0 %1593
    %v1595 = vsel %vm1339, %v1312, 0.0
    %1596 = vadd.xlane.f32.xlu0 %v1595
    %v1597 = vpop.xlane.xlu0 %1596
    %v1598 = vsel %vm1339, %v1313, 0.0
    %1599 = vadd.xlane.f32.xlu0 %v1598
    %v1600 = vpop.xlane.xlu0 %1599
    %v1601 = vsel %vm1339, %v1314, 0.0
    %1602 = vadd.xlane.f32.xlu0 %v1601
    %v1603 = vpop.xlane.xlu0 %1602
    %v1604 = vsel %vm1339, %v1315, 0.0
    %1605 = vadd.xlane.f32.xlu0 %v1604
    %v1606 = vpop.xlane.xlu0 %1605
    %v1607 = vsel %vm1339, %v1316, 0.0
    %1608 = vadd.xlane.f32.xlu0 %v1607
    %v1609 = vpop.xlane.xlu0 %1608
    %v1610 = vsel %vm1339, %v1317, 0.0
    %1611 = vadd.xlane.f32.xlu0 %v1610
    %v1612 = vpop.xlane.xlu0 %1611
    %v1613 = vsel %vm1339, %v1318, 0.0
    %1614 = vadd.xlane.f32.xlu0 %v1613
    %v1615 = vpop.xlane.xlu0 %1614
    %v1616 = vsel %vm1339, %v1319, 0.0
    %1617 = vadd.xlane.f32.xlu0 %v1616
    %v1618 = vpop.xlane.xlu0 %1617
    %v1619 = vsel %vm1339, %v1320, 0.0
    %1620 = vadd.xlane.f32.xlu0 %v1619
    %v1621 = vpop.xlane.xlu0 %1620
    %v1622 = vsel %vm1339, %v1321, 0.0
    %1623 = vadd.xlane.f32.xlu0 %v1622
    %v1624 = vpop.xlane.xlu0 %1623
    %v1625 = vsel %vm1339, %v1322, 0.0
    %1626 = vadd.xlane.f32.xlu0 %v1625
    %v1627 = vpop.xlane.xlu0 %1626
    %v1628 = vsel %vm1339, %v1323, 0.0
    %1629 = vadd.xlane.f32.xlu0 %v1628
    %v1630 = vpop.xlane.xlu0 %1629
    %v1631 = vsel %vm1339, %v1324, 0.0
    %1632 = vadd.xlane.f32.xlu0 %v1631
    %v1633 = vpop.xlane.xlu0 %1632
    %v1634 = vsel %vm1339, %v1325, 0.0
    %1635 = vadd.xlane.f32.xlu0 %v1634
    %v1636 = vpop.xlane.xlu0 %1635
    %v1637 = vsel %vm1339, %v1326, 0.0
    %1638 = vadd.xlane.f32.xlu0 %v1637
    %v1639 = vpop.xlane.xlu0 %1638
    %v1640 = vsel %vm1339, %v1327, 0.0
    %1641 = vadd.xlane.f32.xlu0 %v1640
    %v1642 = vpop.xlane.xlu0 %1641
    %v1643 = vsel %vm1339, %v1328, 0.0
    %1644 = vadd.xlane.f32.xlu0 %v1643
    %v1645 = vpop.xlane.xlu0 %1644
    %v1646 = vsel %vm1339, %v1329, 0.0
    %1647 = vadd.xlane.f32.xlu0 %v1646
    %v1648 = vpop.xlane.xlu0 %1647
    %v1649 = vsel %vm1339, %v1330, 0.0
    %1650 = vadd.xlane.f32.xlu0 %v1649
    %v1651 = vpop.xlane.xlu0 %1650
    %v1652 = vsel %vm1339, %v1331, 0.0
    %1653 = vadd.xlane.f32.xlu0 %v1652
    %v1654 = vpop.xlane.xlu0 %1653
    %v1655 = vsel %vm1339, %v1332, 0.0
    %1656 = vadd.xlane.f32.xlu0 %v1655
    %v1657 = vpop.xlane.xlu0 %1656
    %v1658 = vsel %vm1339, %v1333, 0.0
    %1659 = vadd.xlane.f32.xlu0 %v1658
    %v1660 = vpop.xlane.xlu0 %1659
    %v1661 = vsel %vm1339, %v1334, 0.0
    %1662 = vadd.xlane.f32.xlu0 %v1661
    %v1663 = vpop.xlane.xlu0 %1662
    %v1664 = vsel %vm1339, %v1335, 0.0
    %1665 = vadd.xlane.f32.xlu0 %v1664
    %v1666 = vpop.xlane.xlu0 %1665
    %v1667 = vsel %vm1339, %v1336, 0.0
    %1668 = vadd.xlane.f32.xlu0 %v1667
    %v1669 = vpop.xlane.xlu0 %1668
    %v1670 = vsel %vm1339, %v1337, 0.0
    %1671 = vadd.xlane.f32.xlu0 %v1670
    %v1672 = vpop.xlane.xlu0 %1671
    %v1673 = vsel %vm1339, %v1338, 0.0
    %1674 = vadd.xlane.f32.xlu0 %v1673
    %v1675 = vpop.xlane.xlu0 %1674
    %v1676 = vld [vmem:[%s2] sm:$0xff]
    %v1677 = vld [vmem:[%s2 + $0x8] sm:$0xff]
    %v1678 = vld [vmem:[%s2 + $0x10] sm:$0xff]
    %v1679 = vld [vmem:[%s2 + $0x18] sm:$0xff]
    %v1680 = vld [vmem:[%s2 + $0x20] sm:$0xff]
    %v1681 = vld [vmem:[%s2 + $0x28] sm:$0xff]
    %v1682 = vld [vmem:[%s2 + $0x30] sm:$0xff]
    %v1683 = vld [vmem:[%s2 + $0x38] sm:$0xff]
    %v1684 = vld [vmem:[%s2 + $0x40] sm:$0xff]
    %v1685 = vld [vmem:[%s2 + $0x48] sm:$0xff]
    %v1686 = vld [vmem:[%s2 + $0x50] sm:$0xff]
    %v1687 = vld [vmem:[%s2 + $0x58] sm:$0xff]
    %v1688 = vld [vmem:[%s2 + $0x60] sm:$0xff]
    %v1689 = vld [vmem:[%s2 + $0x68] sm:$0xff]
    %v1690 = vld [vmem:[%s2 + $0x70] sm:$0xff]
    %v1691 = vld [vmem:[%s2 + $0x78] sm:$0xff]
    %v1692 = vld [vmem:[%s2 + $0x80] sm:$0xff]
    %v1693 = vld [vmem:[%s2 + $0x88] sm:$0xff]
    %v1694 = vld [vmem:[%s2 + $0x90] sm:$0xff]
    %v1695 = vld [vmem:[%s2 + $0x98] sm:$0xff]
    %v1696 = vld [vmem:[%s2 + $0xa0] sm:$0xff]
    %v1697 = vld [vmem:[%s2 + $0xa8] sm:$0xff]
    %v1698 = vld [vmem:[%s2 + $0xb0] sm:$0xff]
    %v1699 = vld [vmem:[%s2 + $0xb8] sm:$0xff]
    %v1700 = vld [vmem:[%s2 + $0xc0] sm:$0xff]
    %v1701 = vld [vmem:[%s2 + $0xc8] sm:$0xff]
    %v1702 = vld [vmem:[%s2 + $0xd0] sm:$0xff]
    %v1703 = vld [vmem:[%s2 + $0xd8] sm:$0xff]
    %v1704 = vld [vmem:[%s2 + $0xe0] sm:$0xff]
    %v1705 = vld [vmem:[%s2 + $0xe8] sm:$0xff]
    %v1706 = vld [vmem:[%s2 + $0xf0] sm:$0xff]
    %v1707 = vld [vmem:[%s2 + $0xf8] sm:$0xff]
    %v1708 = vld [vmem:[%s2 + $0x100] sm:$0xff]
    %v1709 = vld [vmem:[%s2 + $0x108] sm:$0xff]
    %v1710 = vld [vmem:[%s2 + $0x110] sm:$0xff]
    %v1711 = vld [vmem:[%s2 + $0x118] sm:$0xff]
    %v1712 = vld [vmem:[%s2 + $0x120] sm:$0xff]
    %v1713 = vld [vmem:[%s2 + $0x128] sm:$0xff]
    %v1714 = vld [vmem:[%s2 + $0x130] sm:$0xff]
    %v1715 = vld [vmem:[%s2 + $0x138] sm:$0xff]
    %v1716 = vld [vmem:[%s2 + $0x140] sm:$0xff]
    %v1717 = vld [vmem:[%s2 + $0x148] sm:$0xff]
    %v1718 = vld [vmem:[%s2 + $0x150] sm:$0xff]
    %v1719 = vld [vmem:[%s2 + $0x158] sm:$0xff]
    %v1720 = vld [vmem:[%s2 + $0x160] sm:$0xff]
    %v1721 = vld [vmem:[%s2 + $0x168] sm:$0xff]
    %v1722 = vld [vmem:[%s2 + $0x170] sm:$0xff]
    %v1723 = vld [vmem:[%s2 + $0x178] sm:$0xff]
    %v1724 = vld [vmem:[%s2 + $0x180] sm:$0xff]
    %v1725 = vld [vmem:[%s2 + $0x188] sm:$0xff]
    %v1726 = vld [vmem:[%s2 + $0x190] sm:$0xff]
    %v1727 = vld [vmem:[%s2 + $0x198] sm:$0xff]
    %v1728 = vld [vmem:[%s2 + $0x1a0] sm:$0xff]
    %v1729 = vld [vmem:[%s2 + $0x1a8] sm:$0xff]
    %v1730 = vld [vmem:[%s2 + $0x1b0] sm:$0xff]
    %v1731 = vld [vmem:[%s2 + $0x1b8] sm:$0xff]
    %v1732 = vld [vmem:[%s2 + $0x1c0] sm:$0xff]
    %v1733 = vld [vmem:[%s2 + $0x1c8] sm:$0xff]
    %v1734 = vld [vmem:[%s2 + $0x1d0] sm:$0xff]
    %v1735 = vld [vmem:[%s2 + $0x1d8] sm:$0xff]
    %v1736 = vld [vmem:[%s2 + $0x1e0] sm:$0xff]
    %v1737 = vld [vmem:[%s2 + $0x1e8] sm:$0xff]
    %v1738 = vld [vmem:[%s2 + $0x1f0] sm:$0xff]
    %v1739 = vld [vmem:[%s2 + $0x1f8] sm:$0xff]
    %v1740 = vld [vmem:[%s2 + $0x200] sm:$0xff]
    %v1741 = vld [vmem:[%s2 + $0x208] sm:$0xff]
    %v1742 = vld [vmem:[%s2 + $0x210] sm:$0xff]
    %v1743 = vld [vmem:[%s2 + $0x218] sm:$0xff]
    %v1744 = vld [vmem:[%s2 + $0x220] sm:$0xff]
    %v1745 = vld [vmem:[%s2 + $0x228] sm:$0xff]
    %v1746 = vld [vmem:[%s2 + $0x230] sm:$0xff]
    %v1747 = vld [vmem:[%s2 + $0x238] sm:$0xff]
    %v1748 = vld [vmem:[%s2 + $0x240] sm:$0xff]
    %v1749 = vld [vmem:[%s2 + $0x248] sm:$0xff]
    %v1750 = vld [vmem:[%s2 + $0x250] sm:$0xff]
    %v1751 = vld [vmem:[%s2 + $0x258] sm:$0xff]
    %v1752 = vld [vmem:[%s2 + $0x260] sm:$0xff]
    %v1753 = vld [vmem:[%s2 + $0x268] sm:$0xff]
    %v1754 = vld [vmem:[%s2 + $0x270] sm:$0xff]
    %v1755 = vld [vmem:[%s2 + $0x278] sm:$0xff]
    %v1756 = vld [vmem:[%s2 + $0x280] sm:$0xff]
    %v1757 = vld [vmem:[%s2 + $0x288] sm:$0xff]
    %v1758 = vld [vmem:[%s2 + $0x290] sm:$0xff]
    %v1759 = vld [vmem:[%s2 + $0x298] sm:$0xff]
    %v1760 = vld [vmem:[%s2 + $0x2a0] sm:$0xff]
    %v1761 = vld [vmem:[%s2 + $0x2a8] sm:$0xff]
    %v1762 = vld [vmem:[%s2 + $0x2b0] sm:$0xff]
    %v1763 = vld [vmem:[%s2 + $0x2b8] sm:$0xff]
    %v1764 = vld [vmem:[%s2 + $0x2c0] sm:$0xff]
    %v1765 = vld [vmem:[%s2 + $0x2c8] sm:$0xff]
    %v1766 = vld [vmem:[%s2 + $0x2d0] sm:$0xff]
    %v1767 = vld [vmem:[%s2 + $0x2d8] sm:$0xff]
    %v1768 = vld [vmem:[%s2 + $0x2e0] sm:$0xff]
    %v1769 = vld [vmem:[%s2 + $0x2e8] sm:$0xff]
    %v1770 = vld [vmem:[%s2 + $0x2f0] sm:$0xff]
    %v1771 = vld [vmem:[%s2 + $0x2f8] sm:$0xff]
    %v1772 = vld [vmem:[%s2 + $0x300] sm:$0xff]
    %v1773 = vld [vmem:[%s2 + $0x308] sm:$0xff]
    %v1774 = vld [vmem:[%s2 + $0x310] sm:$0xff]
    %v1775 = vld [vmem:[%s2 + $0x318] sm:$0xff]
    %v1776 = vld [vmem:[%s2 + $0x320] sm:$0xff]
    %v1777 = vld [vmem:[%s2 + $0x328] sm:$0xff]
    %v1778 = vld [vmem:[%s2 + $0x330] sm:$0xff]
    %v1779 = vld [vmem:[%s2 + $0x338] sm:$0xff]
    %v1780 = vld [vmem:[%s2 + $0x340] sm:$0xff]
    %v1781 = vld [vmem:[%s2 + $0x348] sm:$0xff]
    %v1782 = vld [vmem:[%s2 + $0x350] sm:$0xff]
    %v1783 = vld [vmem:[%s2 + $0x358] sm:$0xff]
    %v1784 = vld [vmem:[%s2 + $0x360] sm:$0xff]
    %v1785 = vld [vmem:[%s2 + $0x368] sm:$0xff]
    %v1786 = vld [vmem:[%s2 + $0x370] sm:$0xff]
    %v1787 = vld [vmem:[%s2 + $0x378] sm:$0xff]
    %v1788 = vadd.f32 %v1342, %v1676
    %v1789 = vadd.f32 %v1345, %v1677
    %v1790 = vadd.f32 %v1348, %v1678
    %v1791 = vadd.f32 %v1351, %v1679
    %v1792 = vadd.f32 %v1354, %v1680
    %v1793 = vadd.f32 %v1357, %v1681
    %v1794 = vadd.f32 %v1360, %v1682
    %v1795 = vadd.f32 %v1363, %v1683
    %v1796 = vadd.f32 %v1366, %v1684
    %v1797 = vadd.f32 %v1369, %v1685
    %v1798 = vadd.f32 %v1372, %v1686
    %v1799 = vadd.f32 %v1375, %v1687
    %v1800 = vadd.f32 %v1378, %v1688
    %v1801 = vadd.f32 %v1381, %v1689
    %v1802 = vadd.f32 %v1384, %v1690
    %v1803 = vadd.f32 %v1387, %v1691
    %v1804 = vadd.f32 %v1390, %v1692
    %v1805 = vadd.f32 %v1393, %v1693
    %v1806 = vadd.f32 %v1396, %v1694
    %v1807 = vadd.f32 %v1399, %v1695
    %v1808 = vadd.f32 %v1402, %v1696
    %v1809 = vadd.f32 %v1405, %v1697
    %v1810 = vadd.f32 %v1408, %v1698
    %v1811 = vadd.f32 %v1411, %v1699
    %v1812 = vadd.f32 %v1414, %v1700
    %v1813 = vadd.f32 %v1417, %v1701
    %v1814 = vadd.f32 %v1420, %v1702
    %v1815 = vadd.f32 %v1423, %v1703
    %v1816 = vadd.f32 %v1426, %v1704
    %v1817 = vadd.f32 %v1429, %v1705
    %v1818 = vadd.f32 %v1432, %v1706
    %v1819 = vadd.f32 %v1435, %v1707
    %v1820 = vadd.f32 %v1438, %v1708
    %v1821 = vadd.f32 %v1441, %v1709
    %v1822 = vadd.f32 %v1444, %v1710
    %v1823 = vadd.f32 %v1447, %v1711
    %v1824 = vadd.f32 %v1450, %v1712
    %v1825 = vadd.f32 %v1453, %v1713
    %v1826 = vadd.f32 %v1456, %v1714
    %v1827 = vadd.f32 %v1459, %v1715
    %v1828 = vadd.f32 %v1462, %v1716
    %v1829 = vadd.f32 %v1465, %v1717
    %v1830 = vadd.f32 %v1468, %v1718
    %v1831 = vadd.f32 %v1471, %v1719
    %v1832 = vadd.f32 %v1474, %v1720
    %v1833 = vadd.f32 %v1477, %v1721
    %v1834 = vadd.f32 %v1480, %v1722
    %v1835 = vadd.f32 %v1483, %v1723
    %v1836 = vadd.f32 %v1486, %v1724
    %v1837 = vadd.f32 %v1489, %v1725
    %v1838 = vadd.f32 %v1492, %v1726
    %v1839 = vadd.f32 %v1495, %v1727
    %v1840 = vadd.f32 %v1498, %v1728
    %v1841 = vadd.f32 %v1501, %v1729
    %v1842 = vadd.f32 %v1504, %v1730
    %v1843 = vadd.f32 %v1507, %v1731
    %v1844 = vadd.f32 %v1510, %v1732
    %v1845 = vadd.f32 %v1513, %v1733
    %v1846 = vadd.f32 %v1516, %v1734
    %v1847 = vadd.f32 %v1519, %v1735
    %v1848 = vadd.f32 %v1522, %v1736
    %v1849 = vadd.f32 %v1525, %v1737
    %v1850 = vadd.f32 %v1528, %v1738
    %v1851 = vadd.f32 %v1531, %v1739
    %v1852 = vadd.f32 %v1534, %v1740
    %v1853 = vadd.f32 %v1537, %v1741
    %v1854 = vadd.f32 %v1540, %v1742
    %v1855 = vadd.f32 %v1543, %v1743
    %v1856 = vadd.f32 %v1546, %v1744
    %v1857 = vadd.f32 %v1549, %v1745
    %v1858 = vadd.f32 %v1552, %v1746
    %v1859 = vadd.f32 %v1555, %v1747
    %v1860 = vadd.f32 %v1558, %v1748
    %v1861 = vadd.f32 %v1561, %v1749
    %v1862 = vadd.f32 %v1564, %v1750
    %v1863 = vadd.f32 %v1567, %v1751
    %v1864 = vadd.f32 %v1570, %v1752
    %v1865 = vadd.f32 %v1573, %v1753
    %v1866 = vadd.f32 %v1576, %v1754
    %v1867 = vadd.f32 %v1579, %v1755
    %v1868 = vadd.f32 %v1582, %v1756
    %v1869 = vadd.f32 %v1585, %v1757
    %v1870 = vadd.f32 %v1588, %v1758
    %v1871 = vadd.f32 %v1591, %v1759
    %v1872 = vadd.f32 %v1594, %v1760
    %v1873 = vadd.f32 %v1597, %v1761
    %v1874 = vadd.f32 %v1600, %v1762
    %v1875 = vadd.f32 %v1603, %v1763
    %v1876 = vadd.f32 %v1606, %v1764
    %v1877 = vadd.f32 %v1609, %v1765
    %v1878 = vadd.f32 %v1612, %v1766
    %v1879 = vadd.f32 %v1615, %v1767
    %v1880 = vadd.f32 %v1618, %v1768
    %v1881 = vadd.f32 %v1621, %v1769
    %v1882 = vadd.f32 %v1624, %v1770
    %v1883 = vadd.f32 %v1627, %v1771
    %v1884 = vadd.f32 %v1630, %v1772
    %v1885 = vadd.f32 %v1633, %v1773
    %v1886 = vadd.f32 %v1636, %v1774
    %v1887 = vadd.f32 %v1639, %v1775
    %v1888 = vadd.f32 %v1642, %v1776
    %v1889 = vadd.f32 %v1645, %v1777
    %v1890 = vadd.f32 %v1648, %v1778
    %v1891 = vadd.f32 %v1651, %v1779
    %v1892 = vadd.f32 %v1654, %v1780
    %v1893 = vadd.f32 %v1657, %v1781
    %v1894 = vadd.f32 %v1660, %v1782
    %v1895 = vadd.f32 %v1663, %v1783
    %v1896 = vadd.f32 %v1666, %v1784
    %v1897 = vadd.f32 %v1669, %v1785
    %v1898 = vadd.f32 %v1672, %v1786
    %v1899 = vadd.f32 %v1675, %v1787
    %vm1900 = vcmask 7168
    %v1901 = vsel %vm1900, %v1788, -inf
    %v1902 = vsel %vm1900, %v1789, -inf
    %v1903 = vmax.f32 %v1901, %v1902
    %v1904 = vsel %vm1900, %v1790, -inf
    %v1905 = vmax.f32 %v1903, %v1904
    %v1906 = vsel %vm1900, %v1791, -inf
    %v1907 = vmax.f32 %v1905, %v1906
    %v1908 = vsel %vm1900, %v1792, -inf
    %v1909 = vmax.f32 %v1907, %v1908
    %v1910 = vsel %vm1900, %v1793, -inf
    %v1911 = vmax.f32 %v1909, %v1910
    %v1912 = vsel %vm1900, %v1794, -inf
    %v1913 = vmax.f32 %v1911, %v1912
    %v1914 = vrot.slane %v1913, 4
    %v1915 = vmax.f32 %v1913, %v1914
    %v1916 = vrot.slane %v1915, 2
    %v1917 = vmax.f32 %v1915, %v1916
    %v1918 = vrot.slane %v1917, 1
    %v1919 = vmax.f32 %v1917, %v1918
    %v1920 = vsel %vm1900, %v1795, -inf
    %v1921 = vsel %vm1900, %v1796, -inf
    %v1922 = vmax.f32 %v1920, %v1921
    %v1923 = vsel %vm1900, %v1797, -inf
    %v1924 = vmax.f32 %v1922, %v1923
    %v1925 = vsel %vm1900, %v1798, -inf
    %v1926 = vmax.f32 %v1924, %v1925
    %v1927 = vsel %vm1900, %v1799, -inf
    %v1928 = vmax.f32 %v1926, %v1927
    %v1929 = vsel %vm1900, %v1800, -inf
    %v1930 = vmax.f32 %v1928, %v1929
    %v1931 = vsel %vm1900, %v1801, -inf
    %v1932 = vmax.f32 %v1930, %v1931
    %v1933 = vrot.slane %v1932, 4
    %v1934 = vmax.f32 %v1932, %v1933
    %v1935 = vrot.slane %v1934, 2
    %v1936 = vmax.f32 %v1934, %v1935
    %v1937 = vrot.slane %v1936, 1
    %v1938 = vmax.f32 %v1936, %v1937
    %v1939 = vsel %vm1900, %v1802, -inf
    %v1940 = vsel %vm1900, %v1803, -inf
    %v1941 = vmax.f32 %v1939, %v1940
    %v1942 = vsel %vm1900, %v1804, -inf
    %v1943 = vmax.f32 %v1941, %v1942
    %v1944 = vsel %vm1900, %v1805, -inf
    %v1945 = vmax.f32 %v1943, %v1944
    %v1946 = vsel %vm1900, %v1806, -inf
    %v1947 = vmax.f32 %v1945, %v1946
    %v1948 = vsel %vm1900, %v1807, -inf
    %v1949 = vmax.f32 %v1947, %v1948
    %v1950 = vsel %vm1900, %v1808, -inf
    %v1951 = vmax.f32 %v1949, %v1950
    %v1952 = vrot.slane %v1951, 4
    %v1953 = vmax.f32 %v1951, %v1952
    %v1954 = vrot.slane %v1953, 2
    %v1955 = vmax.f32 %v1953, %v1954
    %v1956 = vrot.slane %v1955, 1
    %v1957 = vmax.f32 %v1955, %v1956
    %v1958 = vsel %vm1900, %v1809, -inf
    %v1959 = vsel %vm1900, %v1810, -inf
    %v1960 = vmax.f32 %v1958, %v1959
    %v1961 = vsel %vm1900, %v1811, -inf
    %v1962 = vmax.f32 %v1960, %v1961
    %v1963 = vsel %vm1900, %v1812, -inf
    %v1964 = vmax.f32 %v1962, %v1963
    %v1965 = vsel %vm1900, %v1813, -inf
    %v1966 = vmax.f32 %v1964, %v1965
    %v1967 = vsel %vm1900, %v1814, -inf
    %v1968 = vmax.f32 %v1966, %v1967
    %v1969 = vsel %vm1900, %v1815, -inf
    %v1970 = vmax.f32 %v1968, %v1969
    %v1971 = vrot.slane %v1970, 4
    %v1972 = vmax.f32 %v1970, %v1971
    %v1973 = vrot.slane %v1972, 2
    %v1974 = vmax.f32 %v1972, %v1973
    %v1975 = vrot.slane %v1974, 1
    %v1976 = vmax.f32 %v1974, %v1975
    %v1977 = vsel %vm1900, %v1816, -inf
    %v1978 = vsel %vm1900, %v1817, -inf
    %v1979 = vmax.f32 %v1977, %v1978
    %v1980 = vsel %vm1900, %v1818, -inf
    %v1981 = vmax.f32 %v1979, %v1980
    %v1982 = vsel %vm1900, %v1819, -inf
    %v1983 = vmax.f32 %v1981, %v1982
    %v1984 = vsel %vm1900, %v1820, -inf
    %v1985 = vmax.f32 %v1983, %v1984
    %v1986 = vsel %vm1900, %v1821, -inf
    %v1987 = vmax.f32 %v1985, %v1986
    %v1988 = vsel %vm1900, %v1822, -inf
    %v1989 = vmax.f32 %v1987, %v1988
    %v1990 = vrot.slane %v1989, 4
    %v1991 = vmax.f32 %v1989, %v1990
    %v1992 = vrot.slane %v1991, 2
    %v1993 = vmax.f32 %v1991, %v1992
    %v1994 = vrot.slane %v1993, 1
    %v1995 = vmax.f32 %v1993, %v1994
    %v1996 = vsel %vm1900, %v1823, -inf
    %v1997 = vsel %vm1900, %v1824, -inf
    %v1998 = vmax.f32 %v1996, %v1997
    %v1999 = vsel %vm1900, %v1825, -inf
    %v2000 = vmax.f32 %v1998, %v1999
    %v2001 = vsel %vm1900, %v1826, -inf
    %v2002 = vmax.f32 %v2000, %v2001
    %v2003 = vsel %vm1900, %v1827, -inf
    %v2004 = vmax.f32 %v2002, %v2003
    %v2005 = vsel %vm1900, %v1828, -inf
    %v2006 = vmax.f32 %v2004, %v2005
    %v2007 = vsel %vm1900, %v1829, -inf
    %v2008 = vmax.f32 %v2006, %v2007
    %v2009 = vrot.slane %v2008, 4
    %v2010 = vmax.f32 %v2008, %v2009
    %v2011 = vrot.slane %v2010, 2
    %v2012 = vmax.f32 %v2010, %v2011
    %v2013 = vrot.slane %v2012, 1
    %v2014 = vmax.f32 %v2012, %v2013
    %v2015 = vsel %vm1900, %v1830, -inf
    %v2016 = vsel %vm1900, %v1831, -inf
    %v2017 = vmax.f32 %v2015, %v2016
    %v2018 = vsel %vm1900, %v1832, -inf
    %v2019 = vmax.f32 %v2017, %v2018
    %v2020 = vsel %vm1900, %v1833, -inf
    %v2021 = vmax.f32 %v2019, %v2020
    %v2022 = vsel %vm1900, %v1834, -inf
    %v2023 = vmax.f32 %v2021, %v2022
    %v2024 = vsel %vm1900, %v1835, -inf
    %v2025 = vmax.f32 %v2023, %v2024
    %v2026 = vsel %vm1900, %v1836, -inf
    %v2027 = vmax.f32 %v2025, %v2026
    %v2028 = vrot.slane %v2027, 4
    %v2029 = vmax.f32 %v2027, %v2028
    %v2030 = vrot.slane %v2029, 2
    %v2031 = vmax.f32 %v2029, %v2030
    %v2032 = vrot.slane %v2031, 1
    %v2033 = vmax.f32 %v2031, %v2032
    %v2034 = vsel %vm1900, %v1837, -inf
    %v2035 = vsel %vm1900, %v1838, -inf
    %v2036 = vmax.f32 %v2034, %v2035
    %v2037 = vsel %vm1900, %v1839, -inf
    %v2038 = vmax.f32 %v2036, %v2037
    %v2039 = vsel %vm1900, %v1840, -inf
    %v2040 = vmax.f32 %v2038, %v2039
    %v2041 = vsel %vm1900, %v1841, -inf
    %v2042 = vmax.f32 %v2040, %v2041
    %v2043 = vsel %vm1900, %v1842, -inf
    %v2044 = vmax.f32 %v2042, %v2043
    %v2045 = vsel %vm1900, %v1843, -inf
    %v2046 = vmax.f32 %v2044, %v2045
    %v2047 = vrot.slane %v2046, 4
    %v2048 = vmax.f32 %v2046, %v2047
    %v2049 = vrot.slane %v2048, 2
    %v2050 = vmax.f32 %v2048, %v2049
    %v2051 = vrot.slane %v2050, 1
    %v2052 = vmax.f32 %v2050, %v2051
    %v2053 = vsel %vm1900, %v1844, -inf
    %v2054 = vsel %vm1900, %v1845, -inf
    %v2055 = vmax.f32 %v2053, %v2054
    %v2056 = vsel %vm1900, %v1846, -inf
    %v2057 = vmax.f32 %v2055, %v2056
    %v2058 = vsel %vm1900, %v1847, -inf
    %v2059 = vmax.f32 %v2057, %v2058
    %v2060 = vsel %vm1900, %v1848, -inf
    %v2061 = vmax.f32 %v2059, %v2060
    %v2062 = vsel %vm1900, %v1849, -inf
    %v2063 = vmax.f32 %v2061, %v2062
    %v2064 = vsel %vm1900, %v1850, -inf
    %v2065 = vmax.f32 %v2063, %v2064
    %v2066 = vrot.slane %v2065, 4
    %v2067 = vmax.f32 %v2065, %v2066
    %v2068 = vrot.slane %v2067, 2
    %v2069 = vmax.f32 %v2067, %v2068
    %v2070 = vrot.slane %v2069, 1
    %v2071 = vmax.f32 %v2069, %v2070
    %v2072 = vsel %vm1900, %v1851, -inf
    %v2073 = vsel %vm1900, %v1852, -inf
    %v2074 = vmax.f32 %v2072, %v2073
    %v2075 = vsel %vm1900, %v1853, -inf
    %v2076 = vmax.f32 %v2074, %v2075
    %v2077 = vsel %vm1900, %v1854, -inf
    %v2078 = vmax.f32 %v2076, %v2077
    %v2079 = vsel %vm1900, %v1855, -inf
    %v2080 = vmax.f32 %v2078, %v2079
    %v2081 = vsel %vm1900, %v1856, -inf
    %v2082 = vmax.f32 %v2080, %v2081
    %v2083 = vsel %vm1900, %v1857, -inf
    %v2084 = vmax.f32 %v2082, %v2083
    %v2085 = vrot.slane %v2084, 4
    %v2086 = vmax.f32 %v2084, %v2085
    %v2087 = vrot.slane %v2086, 2
    %v2088 = vmax.f32 %v2086, %v2087
    %v2089 = vrot.slane %v2088, 1
    %v2090 = vmax.f32 %v2088, %v2089
    %v2091 = vsel %vm1900, %v1858, -inf
    %v2092 = vsel %vm1900, %v1859, -inf
    %v2093 = vmax.f32 %v2091, %v2092
    %v2094 = vsel %vm1900, %v1860, -inf
    %v2095 = vmax.f32 %v2093, %v2094
    %v2096 = vsel %vm1900, %v1861, -inf
    %v2097 = vmax.f32 %v2095, %v2096
    %v2098 = vsel %vm1900, %v1862, -inf
    %v2099 = vmax.f32 %v2097, %v2098
    %v2100 = vsel %vm1900, %v1863, -inf
    %v2101 = vmax.f32 %v2099, %v2100
    %v2102 = vsel %vm1900, %v1864, -inf
    %v2103 = vmax.f32 %v2101, %v2102
    %v2104 = vrot.slane %v2103, 4
    %v2105 = vmax.f32 %v2103, %v2104
    %v2106 = vrot.slane %v2105, 2
    %v2107 = vmax.f32 %v2105, %v2106
    %v2108 = vrot.slane %v2107, 1
    %v2109 = vmax.f32 %v2107, %v2108
    %v2110 = vsel %vm1900, %v1865, -inf
    %v2111 = vsel %vm1900, %v1866, -inf
    %v2112 = vmax.f32 %v2110, %v2111
    %v2113 = vsel %vm1900, %v1867, -inf
    %v2114 = vmax.f32 %v2112, %v2113
    %v2115 = vsel %vm1900, %v1868, -inf
    %v2116 = vmax.f32 %v2114, %v2115
    %v2117 = vsel %vm1900, %v1869, -inf
    %v2118 = vmax.f32 %v2116, %v2117
    %v2119 = vsel %vm1900, %v1870, -inf
    %v2120 = vmax.f32 %v2118, %v2119
    %v2121 = vsel %vm1900, %v1871, -inf
    %v2122 = vmax.f32 %v2120, %v2121
    %v2123 = vrot.slane %v2122, 4
    %v2124 = vmax.f32 %v2122, %v2123
    %v2125 = vrot.slane %v2124, 2
    %v2126 = vmax.f32 %v2124, %v2125
    %v2127 = vrot.slane %v2126, 1
    %v2128 = vmax.f32 %v2126, %v2127
    %v2129 = vsel %vm1900, %v1872, -inf
    %v2130 = vsel %vm1900, %v1873, -inf
    %v2131 = vmax.f32 %v2129, %v2130
    %v2132 = vsel %vm1900, %v1874, -inf
    %v2133 = vmax.f32 %v2131, %v2132
    %v2134 = vsel %vm1900, %v1875, -inf
    %v2135 = vmax.f32 %v2133, %v2134
    %v2136 = vsel %vm1900, %v1876, -inf
    %v2137 = vmax.f32 %v2135, %v2136
    %v2138 = vsel %vm1900, %v1877, -inf
    %v2139 = vmax.f32 %v2137, %v2138
    %v2140 = vsel %vm1900, %v1878, -inf
    %v2141 = vmax.f32 %v2139, %v2140
    %v2142 = vrot.slane %v2141, 4
    %v2143 = vmax.f32 %v2141, %v2142
    %v2144 = vrot.slane %v2143, 2
    %v2145 = vmax.f32 %v2143, %v2144
    %v2146 = vrot.slane %v2145, 1
    %v2147 = vmax.f32 %v2145, %v2146
    %v2148 = vsel %vm1900, %v1879, -inf
    %v2149 = vsel %vm1900, %v1880, -inf
    %v2150 = vmax.f32 %v2148, %v2149
    %v2151 = vsel %vm1900, %v1881, -inf
    %v2152 = vmax.f32 %v2150, %v2151
    %v2153 = vsel %vm1900, %v1882, -inf
    %v2154 = vmax.f32 %v2152, %v2153
    %v2155 = vsel %vm1900, %v1883, -inf
    %v2156 = vmax.f32 %v2154, %v2155
    %v2157 = vsel %vm1900, %v1884, -inf
    %v2158 = vmax.f32 %v2156, %v2157
    %v2159 = vsel %vm1900, %v1885, -inf
    %v2160 = vmax.f32 %v2158, %v2159
    %v2161 = vrot.slane %v2160, 4
    %v2162 = vmax.f32 %v2160, %v2161
    %v2163 = vrot.slane %v2162, 2
    %v2164 = vmax.f32 %v2162, %v2163
    %v2165 = vrot.slane %v2164, 1
    %v2166 = vmax.f32 %v2164, %v2165
    %v2167 = vsel %vm1900, %v1886, -inf
    %v2168 = vsel %vm1900, %v1887, -inf
    %v2169 = vmax.f32 %v2167, %v2168
    %v2170 = vsel %vm1900, %v1888, -inf
    %v2171 = vmax.f32 %v2169, %v2170
    %v2172 = vsel %vm1900, %v1889, -inf
    %v2173 = vmax.f32 %v2171, %v2172
    %v2174 = vsel %vm1900, %v1890, -inf
    %v2175 = vmax.f32 %v2173, %v2174
    %v2176 = vsel %vm1900, %v1891, -inf
    %v2177 = vmax.f32 %v2175, %v2176
    %v2178 = vsel %vm1900, %v1892, -inf
    %v2179 = vmax.f32 %v2177, %v2178
    %v2180 = vrot.slane %v2179, 4
    %v2181 = vmax.f32 %v2179, %v2180
    %v2182 = vrot.slane %v2181, 2
    %v2183 = vmax.f32 %v2181, %v2182
    %v2184 = vrot.slane %v2183, 1
    %v2185 = vmax.f32 %v2183, %v2184
    %v2186 = vsel %vm1900, %v1893, -inf
    %v2187 = vsel %vm1900, %v1894, -inf
    %v2188 = vmax.f32 %v2186, %v2187
    %v2189 = vsel %vm1900, %v1895, -inf
    %v2190 = vmax.f32 %v2188, %v2189
    %v2191 = vsel %vm1900, %v1896, -inf
    %v2192 = vmax.f32 %v2190, %v2191
    %v2193 = vsel %vm1900, %v1897, -inf
    %v2194 = vmax.f32 %v2192, %v2193
    %v2195 = vsel %vm1900, %v1898, -inf
    %v2196 = vmax.f32 %v2194, %v2195
    %v2197 = vsel %vm1900, %v1899, -inf
    %v2198 = vmax.f32 %v2196, %v2197
    %v2199 = vrot.slane %v2198, 4
    %v2200 = vmax.f32 %v2198, %v2199
    %v2201 = vrot.slane %v2200, 2
    %v2202 = vmax.f32 %v2200, %v2201
    %v2203 = vrot.slane %v2202, 1
    %v2204 = vmax.f32 %v2202, %v2203
    %v2205 = vsub.f32 %v1788, %v1919
    %v2206 = vsub.f32 %v1789, %v1919
    %v2207 = vsub.f32 %v1790, %v1919
    %v2208 = vsub.f32 %v1791, %v1919
    %v2209 = vsub.f32 %v1792, %v1919
    %v2210 = vsub.f32 %v1793, %v1919
    %v2211 = vsub.f32 %v1794, %v1919
    %v2212 = vsub.f32 %v1795, %v1938
    %v2213 = vsub.f32 %v1796, %v1938
    %v2214 = vsub.f32 %v1797, %v1938
    %v2215 = vsub.f32 %v1798, %v1938
    %v2216 = vsub.f32 %v1799, %v1938
    %v2217 = vsub.f32 %v1800, %v1938
    %v2218 = vsub.f32 %v1801, %v1938
    %v2219 = vsub.f32 %v1802, %v1957
    %v2220 = vsub.f32 %v1803, %v1957
    %v2221 = vsub.f32 %v1804, %v1957
    %v2222 = vsub.f32 %v1805, %v1957
    %v2223 = vsub.f32 %v1806, %v1957
    %v2224 = vsub.f32 %v1807, %v1957
    %v2225 = vsub.f32 %v1808, %v1957
    %v2226 = vsub.f32 %v1809, %v1976
    %v2227 = vsub.f32 %v1810, %v1976
    %v2228 = vsub.f32 %v1811, %v1976
    %v2229 = vsub.f32 %v1812, %v1976
    %v2230 = vsub.f32 %v1813, %v1976
    %v2231 = vsub.f32 %v1814, %v1976
    %v2232 = vsub.f32 %v1815, %v1976
    %v2233 = vsub.f32 %v1816, %v1995
    %v2234 = vsub.f32 %v1817, %v1995
    %v2235 = vsub.f32 %v1818, %v1995
    %v2236 = vsub.f32 %v1819, %v1995
    %v2237 = vsub.f32 %v1820, %v1995
    %v2238 = vsub.f32 %v1821, %v1995
    %v2239 = vsub.f32 %v1822, %v1995
    %v2240 = vsub.f32 %v1823, %v2014
    %v2241 = vsub.f32 %v1824, %v2014
    %v2242 = vsub.f32 %v1825, %v2014
    %v2243 = vsub.f32 %v1826, %v2014
    %v2244 = vsub.f32 %v1827, %v2014
    %v2245 = vsub.f32 %v1828, %v2014
    %v2246 = vsub.f32 %v1829, %v2014
    %v2247 = vsub.f32 %v1830, %v2033
    %v2248 = vsub.f32 %v1831, %v2033
    %v2249 = vsub.f32 %v1832, %v2033
    %v2250 = vsub.f32 %v1833, %v2033
    %v2251 = vsub.f32 %v1834, %v2033
    %v2252 = vsub.f32 %v1835, %v2033
    %v2253 = vsub.f32 %v1836, %v2033
    %v2254 = vsub.f32 %v1837, %v2052
    %v2255 = vsub.f32 %v1838, %v2052
    %v2256 = vsub.f32 %v1839, %v2052
    %v2257 = vsub.f32 %v1840, %v2052
    %v2258 = vsub.f32 %v1841, %v2052
    %v2259 = vsub.f32 %v1842, %v2052
    %v2260 = vsub.f32 %v1843, %v2052
    %v2261 = vsub.f32 %v1844, %v2071
    %v2262 = vsub.f32 %v1845, %v2071
    %v2263 = vsub.f32 %v1846, %v2071
    %v2264 = vsub.f32 %v1847, %v2071
    %v2265 = vsub.f32 %v1848, %v2071
    %v2266 = vsub.f32 %v1849, %v2071
    %v2267 = vsub.f32 %v1850, %v2071
    %v2268 = vsub.f32 %v1851, %v2090
    %v2269 = vsub.f32 %v1852, %v2090
    %v2270 = vsub.f32 %v1853, %v2090
    %v2271 = vsub.f32 %v1854, %v2090
    %v2272 = vsub.f32 %v1855, %v2090
    %v2273 = vsub.f32 %v1856, %v2090
    %v2274 = vsub.f32 %v1857, %v2090
    %v2275 = vsub.f32 %v1858, %v2109
    %v2276 = vsub.f32 %v1859, %v2109
    %v2277 = vsub.f32 %v1860, %v2109
    %v2278 = vsub.f32 %v1861, %v2109
    %v2279 = vsub.f32 %v1862, %v2109
    %v2280 = vsub.f32 %v1863, %v2109
    %v2281 = vsub.f32 %v1864, %v2109
    %v2282 = vsub.f32 %v1865, %v2128
    %v2283 = vsub.f32 %v1866, %v2128
    %v2284 = vsub.f32 %v1867, %v2128
    %v2285 = vsub.f32 %v1868, %v2128
    %v2286 = vsub.f32 %v1869, %v2128
    %v2287 = vsub.f32 %v1870, %v2128
    %v2288 = vsub.f32 %v1871, %v2128
    %v2289 = vsub.f32 %v1872, %v2147
    %v2290 = vsub.f32 %v1873, %v2147
    %v2291 = vsub.f32 %v1874, %v2147
    %v2292 = vsub.f32 %v1875, %v2147
    %v2293 = vsub.f32 %v1876, %v2147
    %v2294 = vsub.f32 %v1877, %v2147
    %v2295 = vsub.f32 %v1878, %v2147
    %v2296 = vsub.f32 %v1879, %v2166
    %v2297 = vsub.f32 %v1880, %v2166
    %v2298 = vsub.f32 %v1881, %v2166
    %v2299 = vsub.f32 %v1882, %v2166
    %v2300 = vsub.f32 %v1883, %v2166
    %v2301 = vsub.f32 %v1884, %v2166
    %v2302 = vsub.f32 %v1885, %v2166
    %v2303 = vsub.f32 %v1886, %v2185
    %v2304 = vsub.f32 %v1887, %v2185
    %v2305 = vsub.f32 %v1888, %v2185
    %v2306 = vsub.f32 %v1889, %v2185
    %v2307 = vsub.f32 %v1890, %v2185
    %v2308 = vsub.f32 %v1891, %v2185
    %v2309 = vsub.f32 %v1892, %v2185
    %v2310 = vsub.f32 %v1893, %v2204
    %v2311 = vsub.f32 %v1894, %v2204
    %v2312 = vsub.f32 %v1895, %v2204
    %v2313 = vsub.f32 %v1896, %v2204
    %v2314 = vsub.f32 %v1897, %v2204
    %v2315 = vsub.f32 %v1898, %v2204
    %v2316 = vsub.f32 %v1899, %v2204
    %v2317 = vmul.f32 %v2205, 1.442695
    %v2318 = vpow.pop %v2317
    %v2319 = vmul.f32 %v2206, 1.442695
    %v2320 = vpow.pop %v2319
    %v2321 = vmul.f32 %v2207, 1.442695
    %v2322 = vpow.pop %v2321
    %v2323 = vmul.f32 %v2208, 1.442695
    %v2324 = vpow.pop %v2323
    %v2325 = vmul.f32 %v2209, 1.442695
    %v2326 = vpow.pop %v2325
    %v2327 = vmul.f32 %v2210, 1.442695
    %v2328 = vpow.pop %v2327
    %v2329 = vmul.f32 %v2211, 1.442695
    %v2330 = vpow.pop %v2329
    %v2331 = vmul.f32 %v2212, 1.442695
    %v2332 = vpow.pop %v2331
    %v2333 = vmul.f32 %v2213, 1.442695
    %v2334 = vpow.pop %v2333
    %v2335 = vmul.f32 %v2214, 1.442695
    %v2336 = vpow.pop %v2335
    %v2337 = vmul.f32 %v2215, 1.442695
    %v2338 = vpow.pop %v2337
    %v2339 = vmul.f32 %v2216, 1.442695
    %v2340 = vpow.pop %v2339
    %v2341 = vmul.f32 %v2217, 1.442695
    %v2342 = vpow.pop %v2341
    %v2343 = vmul.f32 %v2218, 1.442695
    %v2344 = vpow.pop %v2343
    %v2345 = vmul.f32 %v2219, 1.442695
    %v2346 = vpow.pop %v2345
    %v2347 = vmul.f32 %v2220, 1.442695
    %v2348 = vpow.pop %v2347
    %v2349 = vmul.f32 %v2221, 1.442695
    %v2350 = vpow.pop %v2349
    %v2351 = vmul.f32 %v2222, 1.442695
    %v2352 = vpow.pop %v2351
    %v2353 = vmul.f32 %v2223, 1.442695
    %v2354 = vpow.pop %v2353
    %v2355 = vmul.f32 %v2224, 1.442695
    %v2356 = vpow.pop %v2355
    %v2357 = vmul.f32 %v2225, 1.442695
    %v2358 = vpow.pop %v2357
    %v2359 = vmul.f32 %v2226, 1.442695
    %v2360 = vpow.pop %v2359
    %v2361 = vmul.f32 %v2227, 1.442695
    %v2362 = vpow.pop %v2361
    %v2363 = vmul.f32 %v2228, 1.442695
    %v2364 = vpow.pop %v2363
    %v2365 = vmul.f32 %v2229, 1.442695
    %v2366 = vpow.pop %v2365
    %v2367 = vmul.f32 %v2230, 1.442695
    %v2368 = vpow.pop %v2367
    %v2369 = vmul.f32 %v2231, 1.442695
    %v2370 = vpow.pop %v2369
    %v2371 = vmul.f32 %v2232, 1.442695
    %v2372 = vpow.pop %v2371
    %v2373 = vmul.f32 %v2233, 1.442695
    %v2374 = vpow.pop %v2373
    %v2375 = vmul.f32 %v2234, 1.442695
    %v2376 = vpow.pop %v2375
    %v2377 = vmul.f32 %v2235, 1.442695
    %v2378 = vpow.pop %v2377
    %v2379 = vmul.f32 %v2236, 1.442695
    %v2380 = vpow.pop %v2379
    %v2381 = vmul.f32 %v2237, 1.442695
    %v2382 = vpow.pop %v2381
    %v2383 = vmul.f32 %v2238, 1.442695
    %v2384 = vpow.pop %v2383
    %v2385 = vmul.f32 %v2239, 1.442695
    %v2386 = vpow.pop %v2385
    %v2387 = vmul.f32 %v2240, 1.442695
    %v2388 = vpow.pop %v2387
    %v2389 = vmul.f32 %v2241, 1.442695
    %v2390 = vpow.pop %v2389
    %v2391 = vmul.f32 %v2242, 1.442695
    %v2392 = vpow.pop %v2391
    %v2393 = vmul.f32 %v2243, 1.442695
    %v2394 = vpow.pop %v2393
    %v2395 = vmul.f32 %v2244, 1.442695
    %v2396 = vpow.pop %v2395
    %v2397 = vmul.f32 %v2245, 1.442695
    %v2398 = vpow.pop %v2397
    %v2399 = vmul.f32 %v2246, 1.442695
    %v2400 = vpow.pop %v2399
    %v2401 = vmul.f32 %v2247, 1.442695
    %v2402 = vpow.pop %v2401
    %v2403 = vmul.f32 %v2248, 1.442695
    %v2404 = vpow.pop %v2403
    %v2405 = vmul.f32 %v2249, 1.442695
    %v2406 = vpow.pop %v2405
    %v2407 = vmul.f32 %v2250, 1.442695
    %v2408 = vpow.pop %v2407
    %v2409 = vmul.f32 %v2251, 1.442695
    %v2410 = vpow.pop %v2409
    %v2411 = vmul.f32 %v2252, 1.442695
    %v2412 = vpow.pop %v2411
    %v2413 = vmul.f32 %v2253, 1.442695
    %v2414 = vpow.pop %v2413
    %v2415 = vmul.f32 %v2254, 1.442695
    %v2416 = vpow.pop %v2415
    %v2417 = vmul.f32 %v2255, 1.442695
    %v2418 = vpow.pop %v2417
    %v2419 = vmul.f32 %v2256, 1.442695
    %v2420 = vpow.pop %v2419
    %v2421 = vmul.f32 %v2257, 1.442695
    %v2422 = vpow.pop %v2421
    %v2423 = vmul.f32 %v2258, 1.442695
    %v2424 = vpow.pop %v2423
    %v2425 = vmul.f32 %v2259, 1.442695
    %v2426 = vpow.pop %v2425
    %v2427 = vmul.f32 %v2260, 1.442695
    %v2428 = vpow.pop %v2427
    %v2429 = vmul.f32 %v2261, 1.442695
    %v2430 = vpow.pop %v2429
    %v2431 = vmul.f32 %v2262, 1.442695
    %v2432 = vpow.pop %v2431
    %v2433 = vmul.f32 %v2263, 1.442695
    %v2434 = vpow.pop %v2433
    %v2435 = vmul.f32 %v2264, 1.442695
    %v2436 = vpow.pop %v2435
    %v2437 = vmul.f32 %v2265, 1.442695
    %v2438 = vpow.pop %v2437
    %v2439 = vmul.f32 %v2266, 1.442695
    %v2440 = vpow.pop %v2439
    %v2441 = vmul.f32 %v2267, 1.442695
    %v2442 = vpow.pop %v2441
    %v2443 = vmul.f32 %v2268, 1.442695
    %v2444 = vpow.pop %v2443
    %v2445 = vmul.f32 %v2269, 1.442695
    %v2446 = vpow.pop %v2445
    %v2447 = vmul.f32 %v2270, 1.442695
    %v2448 = vpow.pop %v2447
    %v2449 = vmul.f32 %v2271, 1.442695
    %v2450 = vpow.pop %v2449
    %v2451 = vmul.f32 %v2272, 1.442695
    %v2452 = vpow.pop %v2451
    %v2453 = vmul.f32 %v2273, 1.442695
    %v2454 = vpow.pop %v2453
    %v2455 = vmul.f32 %v2274, 1.442695
    %v2456 = vpow.pop %v2455
    %v2457 = vmul.f32 %v2275, 1.442695
    %v2458 = vpow.pop %v2457
    %v2459 = vmul.f32 %v2276, 1.442695
    %v2460 = vpow.pop %v2459
    %v2461 = vmul.f32 %v2277, 1.442695
    %v2462 = vpow.pop %v2461
    %v2463 = vmul.f32 %v2278, 1.442695
    %v2464 = vpow.pop %v2463
    %v2465 = vmul.f32 %v2279, 1.442695
    %v2466 = vpow.pop %v2465
    %v2467 = vmul.f32 %v2280, 1.442695
    %v2468 = vpow.pop %v2467
    %v2469 = vmul.f32 %v2281, 1.442695
    %v2470 = vpow.pop %v2469
    %v2471 = vmul.f32 %v2282, 1.442695
    %v2472 = vpow.pop %v2471
    %v2473 = vmul.f32 %v2283, 1.442695
    %v2474 = vpow.pop %v2473
    %v2475 = vmul.f32 %v2284, 1.442695
    %v2476 = vpow.pop %v2475
    %v2477 = vmul.f32 %v2285, 1.442695
    %v2478 = vpow.pop %v2477
    %v2479 = vmul.f32 %v2286, 1.442695
    %v2480 = vpow.pop %v2479
    %v2481 = vmul.f32 %v2287, 1.442695
    %v2482 = vpow.pop %v2481
    %v2483 = vmul.f32 %v2288, 1.442695
    %v2484 = vpow.pop %v2483
    %v2485 = vmul.f32 %v2289, 1.442695
    %v2486 = vpow.pop %v2485
    %v2487 = vmul.f32 %v2290, 1.442695
    %v2488 = vpow.pop %v2487
    %v2489 = vmul.f32 %v2291, 1.442695
    %v2490 = vpow.pop %v2489
    %v2491 = vmul.f32 %v2292, 1.442695
    %v2492 = vpow.pop %v2491
    %v2493 = vmul.f32 %v2293, 1.442695
    %v2494 = vpow.pop %v2493
    %v2495 = vmul.f32 %v2294, 1.442695
    %v2496 = vpow.pop %v2495
    %v2497 = vmul.f32 %v2295, 1.442695
    %v2498 = vpow.pop %v2497
    %v2499 = vmul.f32 %v2296, 1.442695
    %v2500 = vpow.pop %v2499
    %v2501 = vmul.f32 %v2297, 1.442695
    %v2502 = vpow.pop %v2501
    %v2503 = vmul.f32 %v2298, 1.442695
    %v2504 = vpow.pop %v2503
    %v2505 = vmul.f32 %v2299, 1.442695
    %v2506 = vpow.pop %v2505
    %v2507 = vmul.f32 %v2300, 1.442695
    %v2508 = vpow.pop %v2507
    %v2509 = vmul.f32 %v2301, 1.442695
    %v2510 = vpow.pop %v2509
    %v2511 = vmul.f32 %v2302, 1.442695
    %v2512 = vpow.pop %v2511
    %v2513 = vmul.f32 %v2303, 1.442695
    %v2514 = vpow.pop %v2513
    %v2515 = vmul.f32 %v2304, 1.442695
    %v2516 = vpow.pop %v2515
    %v2517 = vmul.f32 %v2305, 1.442695
    %v2518 = vpow.pop %v2517
    %v2519 = vmul.f32 %v2306, 1.442695
    %v2520 = vpow.pop %v2519
    %v2521 = vmul.f32 %v2307, 1.442695
    %v2522 = vpow.pop %v2521
    %v2523 = vmul.f32 %v2308, 1.442695
    %v2524 = vpow.pop %v2523
    %v2525 = vmul.f32 %v2309, 1.442695
    %v2526 = vpow.pop %v2525
    %v2527 = vmul.f32 %v2310, 1.442695
    %v2528 = vpow.pop %v2527
    %v2529 = vmul.f32 %v2311, 1.442695
    %v2530 = vpow.pop %v2529
    %v2531 = vmul.f32 %v2312, 1.442695
    %v2532 = vpow.pop %v2531
    %v2533 = vmul.f32 %v2313, 1.442695
    %v2534 = vpow.pop %v2533
    %v2535 = vmul.f32 %v2314, 1.442695
    %v2536 = vpow.pop %v2535
    %v2537 = vmul.f32 %v2315, 1.442695
    %v2538 = vpow.pop %v2537
    %v2539 = vmul.f32 %v2316, 1.442695
    %v2540 = vpow.pop %v2539
    %v2541 = vsel %vm1900, %v2318, 0.0
    %v2542 = vsel %vm1900, %v2320, 0.0
    %v2543 = vadd.f32 %v2541, %v2542
    %v2544 = vsel %vm1900, %v2322, 0.0
    %v2545 = vadd.f32 %v2543, %v2544
    %v2546 = vsel %vm1900, %v2324, 0.0
    %v2547 = vadd.f32 %v2545, %v2546
    %v2548 = vsel %vm1900, %v2326, 0.0
    %v2549 = vadd.f32 %v2547, %v2548
    %v2550 = vsel %vm1900, %v2328, 0.0
    %v2551 = vadd.f32 %v2549, %v2550
    %v2552 = vsel %vm1900, %v2330, 0.0
    %v2553 = vadd.f32 %v2551, %v2552
    %v2554 = vrot.slane %v2553, 4
    %v2555 = vadd.f32 %v2553, %v2554
    %v2556 = vrot.slane %v2555, 2
    %v2557 = vadd.f32 %v2555, %v2556
    %v2558 = vrot.slane %v2557, 1
    %v2559 = vadd.f32 %v2557, %v2558
    %v2560 = vsel %vm1900, %v2332, 0.0
    %v2561 = vsel %vm1900, %v2334, 0.0
    %v2562 = vadd.f32 %v2560, %v2561
    %v2563 = vsel %vm1900, %v2336, 0.0
    %v2564 = vadd.f32 %v2562, %v2563
    %v2565 = vsel %vm1900, %v2338, 0.0
    %v2566 = vadd.f32 %v2564, %v2565
    %v2567 = vsel %vm1900, %v2340, 0.0
    %v2568 = vadd.f32 %v2566, %v2567
    %v2569 = vsel %vm1900, %v2342, 0.0
    %v2570 = vadd.f32 %v2568, %v2569
    %v2571 = vsel %vm1900, %v2344, 0.0
    %v2572 = vadd.f32 %v2570, %v2571
    %v2573 = vrot.slane %v2572, 4
    %v2574 = vadd.f32 %v2572, %v2573
    %v2575 = vrot.slane %v2574, 2
    %v2576 = vadd.f32 %v2574, %v2575
    %v2577 = vrot.slane %v2576, 1
    %v2578 = vadd.f32 %v2576, %v2577
    %v2579 = vsel %vm1900, %v2346, 0.0
    %v2580 = vsel %vm1900, %v2348, 0.0
    %v2581 = vadd.f32 %v2579, %v2580
    %v2582 = vsel %vm1900, %v2350, 0.0
    %v2583 = vadd.f32 %v2581, %v2582
    %v2584 = vsel %vm1900, %v2352, 0.0
    %v2585 = vadd.f32 %v2583, %v2584
    %v2586 = vsel %vm1900, %v2354, 0.0
    %v2587 = vadd.f32 %v2585, %v2586
    %v2588 = vsel %vm1900, %v2356, 0.0
    %v2589 = vadd.f32 %v2587, %v2588
    %v2590 = vsel %vm1900, %v2358, 0.0
    %v2591 = vadd.f32 %v2589, %v2590
    %v2592 = vrot.slane %v2591, 4
    %v2593 = vadd.f32 %v2591, %v2592
    %v2594 = vrot.slane %v2593, 2
    %v2595 = vadd.f32 %v2593, %v2594
    %v2596 = vrot.slane %v2595, 1
    %v2597 = vadd.f32 %v2595, %v2596
    %v2598 = vsel %vm1900, %v2360, 0.0
    %v2599 = vsel %vm1900, %v2362, 0.0
    %v2600 = vadd.f32 %v2598, %v2599
    %v2601 = vsel %vm1900, %v2364, 0.0
    %v2602 = vadd.f32 %v2600, %v2601
    %v2603 = vsel %vm1900, %v2366, 0.0
    %v2604 = vadd.f32 %v2602, %v2603
    %v2605 = vsel %vm1900, %v2368, 0.0
    %v2606 = vadd.f32 %v2604, %v2605
    %v2607 = vsel %vm1900, %v2370, 0.0
    %v2608 = vadd.f32 %v2606, %v2607
    %v2609 = vsel %vm1900, %v2372, 0.0
    %v2610 = vadd.f32 %v2608, %v2609
    %v2611 = vrot.slane %v2610, 4
    %v2612 = vadd.f32 %v2610, %v2611
    %v2613 = vrot.slane %v2612, 2
    %v2614 = vadd.f32 %v2612, %v2613
    %v2615 = vrot.slane %v2614, 1
    %v2616 = vadd.f32 %v2614, %v2615
    %v2617 = vsel %vm1900, %v2374, 0.0
    %v2618 = vsel %vm1900, %v2376, 0.0
    %v2619 = vadd.f32 %v2617, %v2618
    %v2620 = vsel %vm1900, %v2378, 0.0
    %v2621 = vadd.f32 %v2619, %v2620
    %v2622 = vsel %vm1900, %v2380, 0.0
    %v2623 = vadd.f32 %v2621, %v2622
    %v2624 = vsel %vm1900, %v2382, 0.0
    %v2625 = vadd.f32 %v2623, %v2624
    %v2626 = vsel %vm1900, %v2384, 0.0
    %v2627 = vadd.f32 %v2625, %v2626
    %v2628 = vsel %vm1900, %v2386, 0.0
    %v2629 = vadd.f32 %v2627, %v2628
    %v2630 = vrot.slane %v2629, 4
    %v2631 = vadd.f32 %v2629, %v2630
    %v2632 = vrot.slane %v2631, 2
    %v2633 = vadd.f32 %v2631, %v2632
    %v2634 = vrot.slane %v2633, 1
    %v2635 = vadd.f32 %v2633, %v2634
    %v2636 = vsel %vm1900, %v2388, 0.0
    %v2637 = vsel %vm1900, %v2390, 0.0
    %v2638 = vadd.f32 %v2636, %v2637
    %v2639 = vsel %vm1900, %v2392, 0.0
    %v2640 = vadd.f32 %v2638, %v2639
    %v2641 = vsel %vm1900, %v2394, 0.0
    %v2642 = vadd.f32 %v2640, %v2641
    %v2643 = vsel %vm1900, %v2396, 0.0
    %v2644 = vadd.f32 %v2642, %v2643
    %v2645 = vsel %vm1900, %v2398, 0.0
    %v2646 = vadd.f32 %v2644, %v2645
    %v2647 = vsel %vm1900, %v2400, 0.0
    %v2648 = vadd.f32 %v2646, %v2647
    %v2649 = vrot.slane %v2648, 4
    %v2650 = vadd.f32 %v2648, %v2649
    %v2651 = vrot.slane %v2650, 2
    %v2652 = vadd.f32 %v2650, %v2651
    %v2653 = vrot.slane %v2652, 1
    %v2654 = vadd.f32 %v2652, %v2653
    %v2655 = vsel %vm1900, %v2402, 0.0
    %v2656 = vsel %vm1900, %v2404, 0.0
    %v2657 = vadd.f32 %v2655, %v2656
    %v2658 = vsel %vm1900, %v2406, 0.0
    %v2659 = vadd.f32 %v2657, %v2658
    %v2660 = vsel %vm1900, %v2408, 0.0
    %v2661 = vadd.f32 %v2659, %v2660
    %v2662 = vsel %vm1900, %v2410, 0.0
    %v2663 = vadd.f32 %v2661, %v2662
    %v2664 = vsel %vm1900, %v2412, 0.0
    %v2665 = vadd.f32 %v2663, %v2664
    %v2666 = vsel %vm1900, %v2414, 0.0
    %v2667 = vadd.f32 %v2665, %v2666
    %v2668 = vrot.slane %v2667, 4
    %v2669 = vadd.f32 %v2667, %v2668
    %v2670 = vrot.slane %v2669, 2
    %v2671 = vadd.f32 %v2669, %v2670
    %v2672 = vrot.slane %v2671, 1
    %v2673 = vadd.f32 %v2671, %v2672
    %v2674 = vsel %vm1900, %v2416, 0.0
    %v2675 = vsel %vm1900, %v2418, 0.0
    %v2676 = vadd.f32 %v2674, %v2675
    %v2677 = vsel %vm1900, %v2420, 0.0
    %v2678 = vadd.f32 %v2676, %v2677
    %v2679 = vsel %vm1900, %v2422, 0.0
    %v2680 = vadd.f32 %v2678, %v2679
    %v2681 = vsel %vm1900, %v2424, 0.0
    %v2682 = vadd.f32 %v2680, %v2681
    %v2683 = vsel %vm1900, %v2426, 0.0
    %v2684 = vadd.f32 %v2682, %v2683
    %v2685 = vsel %vm1900, %v2428, 0.0
    %v2686 = vadd.f32 %v2684, %v2685
    %v2687 = vrot.slane %v2686, 4
    %v2688 = vadd.f32 %v2686, %v2687
    %v2689 = vrot.slane %v2688, 2
    %v2690 = vadd.f32 %v2688, %v2689
    %v2691 = vrot.slane %v2690, 1
    %v2692 = vadd.f32 %v2690, %v2691
    %v2693 = vsel %vm1900, %v2430, 0.0
    %v2694 = vsel %vm1900, %v2432, 0.0
    %v2695 = vadd.f32 %v2693, %v2694
    %v2696 = vsel %vm1900, %v2434, 0.0
    %v2697 = vadd.f32 %v2695, %v2696
    %v2698 = vsel %vm1900, %v2436, 0.0
    %v2699 = vadd.f32 %v2697, %v2698
    %v2700 = vsel %vm1900, %v2438, 0.0
    %v2701 = vadd.f32 %v2699, %v2700
    %v2702 = vsel %vm1900, %v2440, 0.0
    %v2703 = vadd.f32 %v2701, %v2702
    %v2704 = vsel %vm1900, %v2442, 0.0
    %v2705 = vadd.f32 %v2703, %v2704
    %v2706 = vrot.slane %v2705, 4
    %v2707 = vadd.f32 %v2705, %v2706
    %v2708 = vrot.slane %v2707, 2
    %v2709 = vadd.f32 %v2707, %v2708
    %v2710 = vrot.slane %v2709, 1
    %v2711 = vadd.f32 %v2709, %v2710
    %v2712 = vsel %vm1900, %v2444, 0.0
    %v2713 = vsel %vm1900, %v2446, 0.0
    %v2714 = vadd.f32 %v2712, %v2713
    %v2715 = vsel %vm1900, %v2448, 0.0
    %v2716 = vadd.f32 %v2714, %v2715
    %v2717 = vsel %vm1900, %v2450, 0.0
    %v2718 = vadd.f32 %v2716, %v2717
    %v2719 = vsel %vm1900, %v2452, 0.0
    %v2720 = vadd.f32 %v2718, %v2719
    %v2721 = vsel %vm1900, %v2454, 0.0
    %v2722 = vadd.f32 %v2720, %v2721
    %v2723 = vsel %vm1900, %v2456, 0.0
    %v2724 = vadd.f32 %v2722, %v2723
    %v2725 = vrot.slane %v2724, 4
    %v2726 = vadd.f32 %v2724, %v2725
    %v2727 = vrot.slane %v2726, 2
    %v2728 = vadd.f32 %v2726, %v2727
    %v2729 = vrot.slane %v2728, 1
    %v2730 = vadd.f32 %v2728, %v2729
    %v2731 = vsel %vm1900, %v2458, 0.0
    %v2732 = vsel %vm1900, %v2460, 0.0
    %v2733 = vadd.f32 %v2731, %v2732
    %v2734 = vsel %vm1900, %v2462, 0.0
    %v2735 = vadd.f32 %v2733, %v2734
    %v2736 = vsel %vm1900, %v2464, 0.0
    %v2737 = vadd.f32 %v2735, %v2736
    %v2738 = vsel %vm1900, %v2466, 0.0
    %v2739 = vadd.f32 %v2737, %v2738
    %v2740 = vsel %vm1900, %v2468, 0.0
    %v2741 = vadd.f32 %v2739, %v2740
    %v2742 = vsel %vm1900, %v2470, 0.0
    %v2743 = vadd.f32 %v2741, %v2742
    %v2744 = vrot.slane %v2743, 4
    %v2745 = vadd.f32 %v2743, %v2744
    %v2746 = vrot.slane %v2745, 2
    %v2747 = vadd.f32 %v2745, %v2746
    %v2748 = vrot.slane %v2747, 1
    %v2749 = vadd.f32 %v2747, %v2748
    %v2750 = vsel %vm1900, %v2472, 0.0
    %v2751 = vsel %vm1900, %v2474, 0.0
    %v2752 = vadd.f32 %v2750, %v2751
    %v2753 = vsel %vm1900, %v2476, 0.0
    %v2754 = vadd.f32 %v2752, %v2753
    %v2755 = vsel %vm1900, %v2478, 0.0
    %v2756 = vadd.f32 %v2754, %v2755
    %v2757 = vsel %vm1900, %v2480, 0.0
    %v2758 = vadd.f32 %v2756, %v2757
    %v2759 = vsel %vm1900, %v2482, 0.0
    %v2760 = vadd.f32 %v2758, %v2759
    %v2761 = vsel %vm1900, %v2484, 0.0
    %v2762 = vadd.f32 %v2760, %v2761
    %v2763 = vrot.slane %v2762, 4
    %v2764 = vadd.f32 %v2762, %v2763
    %v2765 = vrot.slane %v2764, 2
    %v2766 = vadd.f32 %v2764, %v2765
    %v2767 = vrot.slane %v2766, 1
    %v2768 = vadd.f32 %v2766, %v2767
    %v2769 = vsel %vm1900, %v2486, 0.0
    %v2770 = vsel %vm1900, %v2488, 0.0
    %v2771 = vadd.f32 %v2769, %v2770
    %v2772 = vsel %vm1900, %v2490, 0.0
    %v2773 = vadd.f32 %v2771, %v2772
    %v2774 = vsel %vm1900, %v2492, 0.0
    %v2775 = vadd.f32 %v2773, %v2774
    %v2776 = vsel %vm1900, %v2494, 0.0
    %v2777 = vadd.f32 %v2775, %v2776
    %v2778 = vsel %vm1900, %v2496, 0.0
    %v2779 = vadd.f32 %v2777, %v2778
    %v2780 = vsel %vm1900, %v2498, 0.0
    %v2781 = vadd.f32 %v2779, %v2780
    %v2782 = vrot.slane %v2781, 4
    %v2783 = vadd.f32 %v2781, %v2782
    %v2784 = vrot.slane %v2783, 2
    %v2785 = vadd.f32 %v2783, %v2784
    %v2786 = vrot.slane %v2785, 1
    %v2787 = vadd.f32 %v2785, %v2786
    %v2788 = vsel %vm1900, %v2500, 0.0
    %v2789 = vsel %vm1900, %v2502, 0.0
    %v2790 = vadd.f32 %v2788, %v2789
    %v2791 = vsel %vm1900, %v2504, 0.0
    %v2792 = vadd.f32 %v2790, %v2791
    %v2793 = vsel %vm1900, %v2506, 0.0
    %v2794 = vadd.f32 %v2792, %v2793
    %v2795 = vsel %vm1900, %v2508, 0.0
    %v2796 = vadd.f32 %v2794, %v2795
    %v2797 = vsel %vm1900, %v2510, 0.0
    %v2798 = vadd.f32 %v2796, %v2797
    %v2799 = vsel %vm1900, %v2512, 0.0
    %v2800 = vadd.f32 %v2798, %v2799
    %v2801 = vrot.slane %v2800, 4
    %v2802 = vadd.f32 %v2800, %v2801
    %v2803 = vrot.slane %v2802, 2
    %v2804 = vadd.f32 %v2802, %v2803
    %v2805 = vrot.slane %v2804, 1
    %v2806 = vadd.f32 %v2804, %v2805
    %v2807 = vsel %vm1900, %v2514, 0.0
    %v2808 = vsel %vm1900, %v2516, 0.0
    %v2809 = vadd.f32 %v2807, %v2808
    %v2810 = vsel %vm1900, %v2518, 0.0
    %v2811 = vadd.f32 %v2809, %v2810
    %v2812 = vsel %vm1900, %v2520, 0.0
    %v2813 = vadd.f32 %v2811, %v2812
    %v2814 = vsel %vm1900, %v2522, 0.0
    %v2815 = vadd.f32 %v2813, %v2814
    %v2816 = vsel %vm1900, %v2524, 0.0
    %v2817 = vadd.f32 %v2815, %v2816
    %v2818 = vsel %vm1900, %v2526, 0.0
    %v2819 = vadd.f32 %v2817, %v2818
    %v2820 = vrot.slane %v2819, 4
    %v2821 = vadd.f32 %v2819, %v2820
    %v2822 = vrot.slane %v2821, 2
    %v2823 = vadd.f32 %v2821, %v2822
    %v2824 = vrot.slane %v2823, 1
    %v2825 = vadd.f32 %v2823, %v2824
    %v2826 = vsel %vm1900, %v2528, 0.0
    %v2827 = vsel %vm1900, %v2530, 0.0
    %v2828 = vadd.f32 %v2826, %v2827
    %v2829 = vsel %vm1900, %v2532, 0.0
    %v2830 = vadd.f32 %v2828, %v2829
    %v2831 = vsel %vm1900, %v2534, 0.0
    %v2832 = vadd.f32 %v2830, %v2831
    %v2833 = vsel %vm1900, %v2536, 0.0
    %v2834 = vadd.f32 %v2832, %v2833
    %v2835 = vsel %vm1900, %v2538, 0.0
    %v2836 = vadd.f32 %v2834, %v2835
    %v2837 = vsel %vm1900, %v2540, 0.0
    %v2838 = vadd.f32 %v2836, %v2837
    %v2839 = vrot.slane %v2838, 4
    %v2840 = vadd.f32 %v2838, %v2839
    %v2841 = vrot.slane %v2840, 2
    %v2842 = vadd.f32 %v2840, %v2841
    %v2843 = vrot.slane %v2842, 1
    %v2844 = vadd.f32 %v2842, %v2843
    %v2845 = vrcp.pop %v2559
    %v2846 = vrcp.pop %v2578
    %v2847 = vrcp.pop %v2597
    %v2848 = vrcp.pop %v2616
    %v2849 = vrcp.pop %v2635
    %v2850 = vrcp.pop %v2654
    %v2851 = vrcp.pop %v2673
    %v2852 = vrcp.pop %v2692
    %v2853 = vrcp.pop %v2711
    %v2854 = vrcp.pop %v2730
    %v2855 = vrcp.pop %v2749
    %v2856 = vrcp.pop %v2768
    %v2857 = vrcp.pop %v2787
    %v2858 = vrcp.pop %v2806
    %v2859 = vrcp.pop %v2825
    %v2860 = vrcp.pop %v2844
    %v2861 = vmul.f32 %v2318, %v2845
    %v2862 = vmul.f32 %v2320, %v2845
    %v2863 = vmul.f32 %v2322, %v2845
    %v2864 = vmul.f32 %v2324, %v2845
    %v2865 = vmul.f32 %v2326, %v2845
    %v2866 = vmul.f32 %v2328, %v2845
    %v2867 = vmul.f32 %v2330, %v2845
    %v2868 = vmul.f32 %v2332, %v2846
    %v2869 = vmul.f32 %v2334, %v2846
    %v2870 = vmul.f32 %v2336, %v2846
    %v2871 = vmul.f32 %v2338, %v2846
    %v2872 = vmul.f32 %v2340, %v2846
    %v2873 = vmul.f32 %v2342, %v2846
    %v2874 = vmul.f32 %v2344, %v2846
    %v2875 = vmul.f32 %v2346, %v2847
    %v2876 = vmul.f32 %v2348, %v2847
    %v2877 = vmul.f32 %v2350, %v2847
    %v2878 = vmul.f32 %v2352, %v2847
    %v2879 = vmul.f32 %v2354, %v2847
    %v2880 = vmul.f32 %v2356, %v2847
    %v2881 = vmul.f32 %v2358, %v2847
    %v2882 = vmul.f32 %v2360, %v2848
    %v2883 = vmul.f32 %v2362, %v2848
    %v2884 = vmul.f32 %v2364, %v2848
    %v2885 = vmul.f32 %v2366, %v2848
    %v2886 = vmul.f32 %v2368, %v2848
    %v2887 = vmul.f32 %v2370, %v2848
    %v2888 = vmul.f32 %v2372, %v2848
    %v2889 = vmul.f32 %v2374, %v2849
    %v2890 = vmul.f32 %v2376, %v2849
    %v2891 = vmul.f32 %v2378, %v2849
    %v2892 = vmul.f32 %v2380, %v2849
    %v2893 = vmul.f32 %v2382, %v2849
    %v2894 = vmul.f32 %v2384, %v2849
    %v2895 = vmul.f32 %v2386, %v2849
    %v2896 = vmul.f32 %v2388, %v2850
    %v2897 = vmul.f32 %v2390, %v2850
    %v2898 = vmul.f32 %v2392, %v2850
    %v2899 = vmul.f32 %v2394, %v2850
    %v2900 = vmul.f32 %v2396, %v2850
    %v2901 = vmul.f32 %v2398, %v2850
    %v2902 = vmul.f32 %v2400, %v2850
    %v2903 = vmul.f32 %v2402, %v2851
    %v2904 = vmul.f32 %v2404, %v2851
    %v2905 = vmul.f32 %v2406, %v2851
    %v2906 = vmul.f32 %v2408, %v2851
    %v2907 = vmul.f32 %v2410, %v2851
    %v2908 = vmul.f32 %v2412, %v2851
    %v2909 = vmul.f32 %v2414, %v2851
    %v2910 = vmul.f32 %v2416, %v2852
    %v2911 = vmul.f32 %v2418, %v2852
    %v2912 = vmul.f32 %v2420, %v2852
    %v2913 = vmul.f32 %v2422, %v2852
    %v2914 = vmul.f32 %v2424, %v2852
    %v2915 = vmul.f32 %v2426, %v2852
    %v2916 = vmul.f32 %v2428, %v2852
    %v2917 = vmul.f32 %v2430, %v2853
    %v2918 = vmul.f32 %v2432, %v2853
    %v2919 = vmul.f32 %v2434, %v2853
    %v2920 = vmul.f32 %v2436, %v2853
    %v2921 = vmul.f32 %v2438, %v2853
    %v2922 = vmul.f32 %v2440, %v2853
    %v2923 = vmul.f32 %v2442, %v2853
    %v2924 = vmul.f32 %v2444, %v2854
    %v2925 = vmul.f32 %v2446, %v2854
    %v2926 = vmul.f32 %v2448, %v2854
    %v2927 = vmul.f32 %v2450, %v2854
    %v2928 = vmul.f32 %v2452, %v2854
    %v2929 = vmul.f32 %v2454, %v2854
    %v2930 = vmul.f32 %v2456, %v2854
    %v2931 = vmul.f32 %v2458, %v2855
    %v2932 = vmul.f32 %v2460, %v2855
    %v2933 = vmul.f32 %v2462, %v2855
    %v2934 = vmul.f32 %v2464, %v2855
    %v2935 = vmul.f32 %v2466, %v2855
    %v2936 = vmul.f32 %v2468, %v2855
    %v2937 = vmul.f32 %v2470, %v2855
    %v2938 = vmul.f32 %v2472, %v2856
    %v2939 = vmul.f32 %v2474, %v2856
    %v2940 = vmul.f32 %v2476, %v2856
    %v2941 = vmul.f32 %v2478, %v2856
    %v2942 = vmul.f32 %v2480, %v2856
    %v2943 = vmul.f32 %v2482, %v2856
    %v2944 = vmul.f32 %v2484, %v2856
    %v2945 = vmul.f32 %v2486, %v2857
    %v2946 = vmul.f32 %v2488, %v2857
    %v2947 = vmul.f32 %v2490, %v2857
    %v2948 = vmul.f32 %v2492, %v2857
    %v2949 = vmul.f32 %v2494, %v2857
    %v2950 = vmul.f32 %v2496, %v2857
    %v2951 = vmul.f32 %v2498, %v2857
    %v2952 = vmul.f32 %v2500, %v2858
    %v2953 = vmul.f32 %v2502, %v2858
    %v2954 = vmul.f32 %v2504, %v2858
    %v2955 = vmul.f32 %v2506, %v2858
    %v2956 = vmul.f32 %v2508, %v2858
    %v2957 = vmul.f32 %v2510, %v2858
    %v2958 = vmul.f32 %v2512, %v2858
    %v2959 = vmul.f32 %v2514, %v2859
    %v2960 = vmul.f32 %v2516, %v2859
    %v2961 = vmul.f32 %v2518, %v2859
    %v2962 = vmul.f32 %v2520, %v2859
    %v2963 = vmul.f32 %v2522, %v2859
    %v2964 = vmul.f32 %v2524, %v2859
    %v2965 = vmul.f32 %v2526, %v2859
    %v2966 = vmul.f32 %v2528, %v2860
    %v2967 = vmul.f32 %v2530, %v2860
    %v2968 = vmul.f32 %v2532, %v2860
    %v2969 = vmul.f32 %v2534, %v2860
    %v2970 = vmul.f32 %v2536, %v2860
    %v2971 = vmul.f32 %v2538, %v2860
    %v2972 = vmul.f32 %v2540, %v2860
    %2974 = vset.pattern.permute.xlu0 0
    %2975 = vperm.xlu0 %2974, %v2861
    %v2976 = vpop.permute.xlu0 %2975
    %2979 = vset.pattern.permute.xlu0 0
    %2980 = vperm.xlu0 %2979, %v2862
    %v2981 = vpop.permute.xlu0 %2980
    %2984 = vset.pattern.permute.xlu0 0
    %2985 = vperm.xlu0 %2984, %v2863
    %v2986 = vpop.permute.xlu0 %2985
    %2989 = vset.pattern.permute.xlu0 0
    %2990 = vperm.xlu0 %2989, %v2864
    %v2991 = vpop.permute.xlu0 %2990
    %2994 = vset.pattern.permute.xlu0 0
    %2995 = vperm.xlu0 %2994, %v2865
    %v2996 = vpop.permute.xlu0 %2995
    %2999 = vset.pattern.permute.xlu0 0
    %3000 = vperm.xlu0 %2999, %v2866
    %v3001 = vpop.permute.xlu0 %3000
    %3004 = vset.pattern.permute.xlu0 0
    %3005 = vperm.xlu0 %3004, %v2867
    %v3006 = vpop.permute.xlu0 %3005
    %3009 = vset.pattern.permute.xlu0 0
    %3010 = vperm.xlu0 %3009, %v2868
    %v3011 = vpop.permute.xlu0 %3010
    %3014 = vset.pattern.permute.xlu0 0
    %3015 = vperm.xlu0 %3014, %v2869
    %v3016 = vpop.permute.xlu0 %3015
    %3019 = vset.pattern.permute.xlu0 0
    %3020 = vperm.xlu0 %3019, %v2870
    %v3021 = vpop.permute.xlu0 %3020
    %3024 = vset.pattern.permute.xlu0 0
    %3025 = vperm.xlu0 %3024, %v2871
    %v3026 = vpop.permute.xlu0 %3025
    %3029 = vset.pattern.permute.xlu0 0
    %3030 = vperm.xlu0 %3029, %v2872
    %v3031 = vpop.permute.xlu0 %3030
    %3034 = vset.pattern.permute.xlu0 0
    %3035 = vperm.xlu0 %3034, %v2873
    %v3036 = vpop.permute.xlu0 %3035
    %3039 = vset.pattern.permute.xlu0 0
    %3040 = vperm.xlu0 %3039, %v2874
    %v3041 = vpop.permute.xlu0 %3040
    %3044 = vset.pattern.permute.xlu0 0
    %3045 = vperm.xlu0 %3044, %v2875
    %v3046 = vpop.permute.xlu0 %3045
    %3049 = vset.pattern.permute.xlu0 0
    %3050 = vperm.xlu0 %3049, %v2876
    %v3051 = vpop.permute.xlu0 %3050
    %3054 = vset.pattern.permute.xlu0 0
    %3055 = vperm.xlu0 %3054, %v2877
    %v3056 = vpop.permute.xlu0 %3055
    %3059 = vset.pattern.permute.xlu0 0
    %3060 = vperm.xlu0 %3059, %v2878
    %v3061 = vpop.permute.xlu0 %3060
    %3064 = vset.pattern.permute.xlu0 0
    %3065 = vperm.xlu0 %3064, %v2879
    %v3066 = vpop.permute.xlu0 %3065
    %3069 = vset.pattern.permute.xlu0 0
    %3070 = vperm.xlu0 %3069, %v2880
    %v3071 = vpop.permute.xlu0 %3070
    %3074 = vset.pattern.permute.xlu0 0
    %3075 = vperm.xlu0 %3074, %v2881
    %v3076 = vpop.permute.xlu0 %3075
    %3079 = vset.pattern.permute.xlu0 0
    %3080 = vperm.xlu0 %3079, %v2882
    %v3081 = vpop.permute.xlu0 %3080
    %3084 = vset.pattern.permute.xlu0 0
    %3085 = vperm.xlu0 %3084, %v2883
    %v3086 = vpop.permute.xlu0 %3085
    %3089 = vset.pattern.permute.xlu0 0
    %3090 = vperm.xlu0 %3089, %v2884
    %v3091 = vpop.permute.xlu0 %3090
    %3094 = vset.pattern.permute.xlu0 0
    %3095 = vperm.xlu0 %3094, %v2885
    %v3096 = vpop.permute.xlu0 %3095
    %3099 = vset.pattern.permute.xlu0 0
    %3100 = vperm.xlu0 %3099, %v2886
    %v3101 = vpop.permute.xlu0 %3100
    %3104 = vset.pattern.permute.xlu0 0
    %3105 = vperm.xlu0 %3104, %v2887
    %v3106 = vpop.permute.xlu0 %3105
    %3109 = vset.pattern.permute.xlu0 0
    %3110 = vperm.xlu0 %3109, %v2888
    %v3111 = vpop.permute.xlu0 %3110
    %3114 = vset.pattern.permute.xlu0 0
    %3115 = vperm.xlu0 %3114, %v2889
    %v3116 = vpop.permute.xlu0 %3115
    %3119 = vset.pattern.permute.xlu0 0
    %3120 = vperm.xlu0 %3119, %v2890
    %v3121 = vpop.permute.xlu0 %3120
    %3124 = vset.pattern.permute.xlu0 0
    %3125 = vperm.xlu0 %3124, %v2891
    %v3126 = vpop.permute.xlu0 %3125
    %3129 = vset.pattern.permute.xlu0 0
    %3130 = vperm.xlu0 %3129, %v2892
    %v3131 = vpop.permute.xlu0 %3130
    %3134 = vset.pattern.permute.xlu0 0
    %3135 = vperm.xlu0 %3134, %v2893
    %v3136 = vpop.permute.xlu0 %3135
    %3139 = vset.pattern.permute.xlu0 0
    %3140 = vperm.xlu0 %3139, %v2894
    %v3141 = vpop.permute.xlu0 %3140
    %3144 = vset.pattern.permute.xlu0 0
    %3145 = vperm.xlu0 %3144, %v2895
    %v3146 = vpop.permute.xlu0 %3145
    %3149 = vset.pattern.permute.xlu0 0
    %3150 = vperm.xlu0 %3149, %v2896
    %v3151 = vpop.permute.xlu0 %3150
    %3154 = vset.pattern.permute.xlu0 0
    %3155 = vperm.xlu0 %3154, %v2897
    %v3156 = vpop.permute.xlu0 %3155
    %3159 = vset.pattern.permute.xlu0 0
    %3160 = vperm.xlu0 %3159, %v2898
    %v3161 = vpop.permute.xlu0 %3160
    %3164 = vset.pattern.permute.xlu0 0
    %3165 = vperm.xlu0 %3164, %v2899
    %v3166 = vpop.permute.xlu0 %3165
    %3169 = vset.pattern.permute.xlu0 0
    %3170 = vperm.xlu0 %3169, %v2900
    %v3171 = vpop.permute.xlu0 %3170
    %3174 = vset.pattern.permute.xlu0 0
    %3175 = vperm.xlu0 %3174, %v2901
    %v3176 = vpop.permute.xlu0 %3175
    %3179 = vset.pattern.permute.xlu0 0
    %3180 = vperm.xlu0 %3179, %v2902
    %v3181 = vpop.permute.xlu0 %3180
    %3184 = vset.pattern.permute.xlu0 0
    %3185 = vperm.xlu0 %3184, %v2903
    %v3186 = vpop.permute.xlu0 %3185
    %3189 = vset.pattern.permute.xlu0 0
    %3190 = vperm.xlu0 %3189, %v2904
    %v3191 = vpop.permute.xlu0 %3190
    %3194 = vset.pattern.permute.xlu0 0
    %3195 = vperm.xlu0 %3194, %v2905
    %v3196 = vpop.permute.xlu0 %3195
    %3199 = vset.pattern.permute.xlu0 0
    %3200 = vperm.xlu0 %3199, %v2906
    %v3201 = vpop.permute.xlu0 %3200
    %3204 = vset.pattern.permute.xlu0 0
    %3205 = vperm.xlu0 %3204, %v2907
    %v3206 = vpop.permute.xlu0 %3205
    %3209 = vset.pattern.permute.xlu0 0
    %3210 = vperm.xlu0 %3209, %v2908
    %v3211 = vpop.permute.xlu0 %3210
    %3214 = vset.pattern.permute.xlu0 0
    %3215 = vperm.xlu0 %3214, %v2909
    %v3216 = vpop.permute.xlu0 %3215
    %3219 = vset.pattern.permute.xlu0 0
    %3220 = vperm.xlu0 %3219, %v2910
    %v3221 = vpop.permute.xlu0 %3220
    %3224 = vset.pattern.permute.xlu0 0
    %3225 = vperm.xlu0 %3224, %v2911
    %v3226 = vpop.permute.xlu0 %3225
    %3229 = vset.pattern.permute.xlu0 0
    %3230 = vperm.xlu0 %3229, %v2912
    %v3231 = vpop.permute.xlu0 %3230
    %3234 = vset.pattern.permute.xlu0 0
    %3235 = vperm.xlu0 %3234, %v2913
    %v3236 = vpop.permute.xlu0 %3235
    %3239 = vset.pattern.permute.xlu0 0
    %3240 = vperm.xlu0 %3239, %v2914
    %v3241 = vpop.permute.xlu0 %3240
    %3244 = vset.pattern.permute.xlu0 0
    %3245 = vperm.xlu0 %3244, %v2915
    %v3246 = vpop.permute.xlu0 %3245
    %3249 = vset.pattern.permute.xlu0 0
    %3250 = vperm.xlu0 %3249, %v2916
    %v3251 = vpop.permute.xlu0 %3250
    %3254 = vset.pattern.permute.xlu0 0
    %3255 = vperm.xlu0 %3254, %v2917
    %v3256 = vpop.permute.xlu0 %3255
    %3259 = vset.pattern.permute.xlu0 0
    %3260 = vperm.xlu0 %3259, %v2918
    %v3261 = vpop.permute.xlu0 %3260
    %3264 = vset.pattern.permute.xlu0 0
    %3265 = vperm.xlu0 %3264, %v2919
    %v3266 = vpop.permute.xlu0 %3265
    %3269 = vset.pattern.permute.xlu0 0
    %3270 = vperm.xlu0 %3269, %v2920
    %v3271 = vpop.permute.xlu0 %3270
    %3274 = vset.pattern.permute.xlu0 0
    %3275 = vperm.xlu0 %3274, %v2921
    %v3276 = vpop.permute.xlu0 %3275
    %3279 = vset.pattern.permute.xlu0 0
    %3280 = vperm.xlu0 %3279, %v2922
    %v3281 = vpop.permute.xlu0 %3280
    %3284 = vset.pattern.permute.xlu0 0
    %3285 = vperm.xlu0 %3284, %v2923
    %v3286 = vpop.permute.xlu0 %3285
    %3289 = vset.pattern.permute.xlu0 0
    %3290 = vperm.xlu0 %3289, %v2924
    %v3291 = vpop.permute.xlu0 %3290
    %3294 = vset.pattern.permute.xlu0 0
    %3295 = vperm.xlu0 %3294, %v2925
    %v3296 = vpop.permute.xlu0 %3295
    %3299 = vset.pattern.permute.xlu0 0
    %3300 = vperm.xlu0 %3299, %v2926
    %v3301 = vpop.permute.xlu0 %3300
    %3304 = vset.pattern.permute.xlu0 0
    %3305 = vperm.xlu0 %3304, %v2927
    %v3306 = vpop.permute.xlu0 %3305
    %3309 = vset.pattern.permute.xlu0 0
    %3310 = vperm.xlu0 %3309, %v2928
    %v3311 = vpop.permute.xlu0 %3310
    %3314 = vset.pattern.permute.xlu0 0
    %3315 = vperm.xlu0 %3314, %v2929
    %v3316 = vpop.permute.xlu0 %3315
    %3319 = vset.pattern.permute.xlu0 0
    %3320 = vperm.xlu0 %3319, %v2930
    %v3321 = vpop.permute.xlu0 %3320
    %3324 = vset.pattern.permute.xlu0 0
    %3325 = vperm.xlu0 %3324, %v2931
    %v3326 = vpop.permute.xlu0 %3325
    %3329 = vset.pattern.permute.xlu0 0
    %3330 = vperm.xlu0 %3329, %v2932
    %v3331 = vpop.permute.xlu0 %3330
    %3334 = vset.pattern.permute.xlu0 0
    %3335 = vperm.xlu0 %3334, %v2933
    %v3336 = vpop.permute.xlu0 %3335
    %3339 = vset.pattern.permute.xlu0 0
    %3340 = vperm.xlu0 %3339, %v2934
    %v3341 = vpop.permute.xlu0 %3340
    %3344 = vset.pattern.permute.xlu0 0
    %3345 = vperm.xlu0 %3344, %v2935
    %v3346 = vpop.permute.xlu0 %3345
    %3349 = vset.pattern.permute.xlu0 0
    %3350 = vperm.xlu0 %3349, %v2936
    %v3351 = vpop.permute.xlu0 %3350
    %3354 = vset.pattern.permute.xlu0 0
    %3355 = vperm.xlu0 %3354, %v2937
    %v3356 = vpop.permute.xlu0 %3355
    %3359 = vset.pattern.permute.xlu0 0
    %3360 = vperm.xlu0 %3359, %v2938
    %v3361 = vpop.permute.xlu0 %3360
    %3364 = vset.pattern.permute.xlu0 0
    %3365 = vperm.xlu0 %3364, %v2939
    %v3366 = vpop.permute.xlu0 %3365
    %3369 = vset.pattern.permute.xlu0 0
    %3370 = vperm.xlu0 %3369, %v2940
    %v3371 = vpop.permute.xlu0 %3370
    %3374 = vset.pattern.permute.xlu0 0
    %3375 = vperm.xlu0 %3374, %v2941
    %v3376 = vpop.permute.xlu0 %3375
    %3379 = vset.pattern.permute.xlu0 0
    %3380 = vperm.xlu0 %3379, %v2942
    %v3381 = vpop.permute.xlu0 %3380
    %3384 = vset.pattern.permute.xlu0 0
    %3385 = vperm.xlu0 %3384, %v2943
    %v3386 = vpop.permute.xlu0 %3385
    %3389 = vset.pattern.permute.xlu0 0
    %3390 = vperm.xlu0 %3389, %v2944
    %v3391 = vpop.permute.xlu0 %3390
    %3394 = vset.pattern.permute.xlu0 0
    %3395 = vperm.xlu0 %3394, %v2945
    %v3396 = vpop.permute.xlu0 %3395
    %3399 = vset.pattern.permute.xlu0 0
    %3400 = vperm.xlu0 %3399, %v2946
    %v3401 = vpop.permute.xlu0 %3400
    %3404 = vset.pattern.permute.xlu0 0
    %3405 = vperm.xlu0 %3404, %v2947
    %v3406 = vpop.permute.xlu0 %3405
    %3409 = vset.pattern.permute.xlu0 0
    %3410 = vperm.xlu0 %3409, %v2948
    %v3411 = vpop.permute.xlu0 %3410
    %3414 = vset.pattern.permute.xlu0 0
    %3415 = vperm.xlu0 %3414, %v2949
    %v3416 = vpop.permute.xlu0 %3415
    %3419 = vset.pattern.permute.xlu0 0
    %3420 = vperm.xlu0 %3419, %v2950
    %v3421 = vpop.permute.xlu0 %3420
    %3424 = vset.pattern.permute.xlu0 0
    %3425 = vperm.xlu0 %3424, %v2951
    %v3426 = vpop.permute.xlu0 %3425
    %3429 = vset.pattern.permute.xlu0 0
    %3430 = vperm.xlu0 %3429, %v2952
    %v3431 = vpop.permute.xlu0 %3430
    %3434 = vset.pattern.permute.xlu0 0
    %3435 = vperm.xlu0 %3434, %v2953
    %v3436 = vpop.permute.xlu0 %3435
    %3439 = vset.pattern.permute.xlu0 0
    %3440 = vperm.xlu0 %3439, %v2954
    %v3441 = vpop.permute.xlu0 %3440
    %3444 = vset.pattern.permute.xlu0 0
    %3445 = vperm.xlu0 %3444, %v2955
    %v3446 = vpop.permute.xlu0 %3445
    %3449 = vset.pattern.permute.xlu0 0
    %3450 = vperm.xlu0 %3449, %v2956
    %v3451 = vpop.permute.xlu0 %3450
    %3454 = vset.pattern.permute.xlu0 0
    %3455 = vperm.xlu0 %3454, %v2957
    %v3456 = vpop.permute.xlu0 %3455
    %3459 = vset.pattern.permute.xlu0 0
    %3460 = vperm.xlu0 %3459, %v2958
    %v3461 = vpop.permute.xlu0 %3460
    %3464 = vset.pattern.permute.xlu0 0
    %3465 = vperm.xlu0 %3464, %v2959
    %v3466 = vpop.permute.xlu0 %3465
    %3469 = vset.pattern.permute.xlu0 0
    %3470 = vperm.xlu0 %3469, %v2960
    %v3471 = vpop.permute.xlu0 %3470
    %3474 = vset.pattern.permute.xlu0 0
    %3475 = vperm.xlu0 %3474, %v2961
    %v3476 = vpop.permute.xlu0 %3475
    %3479 = vset.pattern.permute.xlu0 0
    %3480 = vperm.xlu0 %3479, %v2962
    %v3481 = vpop.permute.xlu0 %3480
    %3484 = vset.pattern.permute.xlu0 0
    %3485 = vperm.xlu0 %3484, %v2963
    %v3486 = vpop.permute.xlu0 %3485
    %3489 = vset.pattern.permute.xlu0 0
    %3490 = vperm.xlu0 %3489, %v2964
    %v3491 = vpop.permute.xlu0 %3490
    %3494 = vset.pattern.permute.xlu0 0
    %3495 = vperm.xlu0 %3494, %v2965
    %v3496 = vpop.permute.xlu0 %3495
    %3499 = vset.pattern.permute.xlu0 0
    %3500 = vperm.xlu0 %3499, %v2966
    %v3501 = vpop.permute.xlu0 %3500
    %3504 = vset.pattern.permute.xlu0 0
    %3505 = vperm.xlu0 %3504, %v2967
    %v3506 = vpop.permute.xlu0 %3505
    %3509 = vset.pattern.permute.xlu0 0
    %3510 = vperm.xlu0 %3509, %v2968
    %v3511 = vpop.permute.xlu0 %3510
    %3514 = vset.pattern.permute.xlu0 0
    %3515 = vperm.xlu0 %3514, %v2969
    %v3516 = vpop.permute.xlu0 %3515
    %3519 = vset.pattern.permute.xlu0 0
    %3520 = vperm.xlu0 %3519, %v2970
    %v3521 = vpop.permute.xlu0 %3520
    %3524 = vset.pattern.permute.xlu0 0
    %3525 = vperm.xlu0 %3524, %v2971
    %v3526 = vpop.permute.xlu0 %3525
    %3529 = vset.pattern.permute.xlu0 0
    %3530 = vperm.xlu0 %3529, %v2972
    %v3531 = vpop.permute.xlu0 %3530
    %v3533 = vmul.f32 %v2976, %v30
    %v3534 = vmul.f32 %v2981, %v31
    %v3535 = vmul.f32 %v2986, %v32
    %v3536 = vmul.f32 %v2991, %v33
    %v3537 = vmul.f32 %v2996, %v34
    %v3538 = vmul.f32 %v3001, %v35
    %v3539 = vmul.f32 %v3006, %v36
    %v3540 = vmul.f32 %v3011, %v37
    %v3541 = vmul.f32 %v3016, %v38
    %v3542 = vmul.f32 %v3021, %v39
    %v3543 = vmul.f32 %v3026, %v40
    %v3544 = vmul.f32 %v3031, %v41
    %v3545 = vmul.f32 %v3036, %v42
    %v3546 = vmul.f32 %v3041, %v43
    %v3547 = vmul.f32 %v3046, %v44
    %v3548 = vmul.f32 %v3051, %v45
    %v3549 = vmul.f32 %v3056, %v46
    %v3550 = vmul.f32 %v3061, %v47
    %v3551 = vmul.f32 %v3066, %v48
    %v3552 = vmul.f32 %v3071, %v49
    %v3553 = vmul.f32 %v3076, %v50
    %v3554 = vmul.f32 %v3081, %v51
    %v3555 = vmul.f32 %v3086, %v52
    %v3556 = vmul.f32 %v3091, %v53
    %v3557 = vmul.f32 %v3096, %v54
    %v3558 = vmul.f32 %v3101, %v55
    %v3559 = vmul.f32 %v3106, %v56
    %v3560 = vmul.f32 %v3111, %v57
    %v3561 = vmul.f32 %v3116, %v58
    %v3562 = vmul.f32 %v3121, %v59
    %v3563 = vmul.f32 %v3126, %v60
    %v3564 = vmul.f32 %v3131, %v61
    %v3565 = vmul.f32 %v3136, %v62
    %v3566 = vmul.f32 %v3141, %v63
    %v3567 = vmul.f32 %v3146, %v64
    %v3568 = vmul.f32 %v3151, %v65
    %v3569 = vmul.f32 %v3156, %v66
    %v3570 = vmul.f32 %v3161, %v67
    %v3571 = vmul.f32 %v3166, %v68
    %v3572 = vmul.f32 %v3171, %v69
    %v3573 = vmul.f32 %v3176, %v70
    %v3574 = vmul.f32 %v3181, %v71
    %v3575 = vmul.f32 %v3186, %v72
    %v3576 = vmul.f32 %v3191, %v73
    %v3577 = vmul.f32 %v3196, %v74
    %v3578 = vmul.f32 %v3201, %v75
    %v3579 = vmul.f32 %v3206, %v76
    %v3580 = vmul.f32 %v3211, %v77
    %v3581 = vmul.f32 %v3216, %v78
    %v3582 = vmul.f32 %v3221, %v79
    %v3583 = vmul.f32 %v3226, %v80
    %v3584 = vmul.f32 %v3231, %v81
    %v3585 = vmul.f32 %v3236, %v82
    %v3586 = vmul.f32 %v3241, %v83
    %v3587 = vmul.f32 %v3246, %v84
    %v3588 = vmul.f32 %v3251, %v85
    %v3589 = vmul.f32 %v3256, %v86
    %v3590 = vmul.f32 %v3261, %v87
    %v3591 = vmul.f32 %v3266, %v88
    %v3592 = vmul.f32 %v3271, %v89
    %v3593 = vmul.f32 %v3276, %v90
    %v3594 = vmul.f32 %v3281, %v91
    %v3595 = vmul.f32 %v3286, %v92
    %v3596 = vmul.f32 %v3291, %v93
    %v3597 = vmul.f32 %v3296, %v94
    %v3598 = vmul.f32 %v3301, %v95
    %v3599 = vmul.f32 %v3306, %v96
    %v3600 = vmul.f32 %v3311, %v97
    %v3601 = vmul.f32 %v3316, %v98
    %v3602 = vmul.f32 %v3321, %v99
    %v3603 = vmul.f32 %v3326, %v100
    %v3604 = vmul.f32 %v3331, %v101
    %v3605 = vmul.f32 %v3336, %v102
    %v3606 = vmul.f32 %v3341, %v103
    %v3607 = vmul.f32 %v3346, %v104
    %v3608 = vmul.f32 %v3351, %v105
    %v3609 = vmul.f32 %v3356, %v106
    %v3610 = vmul.f32 %v3361, %v107
    %v3611 = vmul.f32 %v3366, %v108
    %v3612 = vmul.f32 %v3371, %v109
    %v3613 = vmul.f32 %v3376, %v110
    %v3614 = vmul.f32 %v3381, %v111
    %v3615 = vmul.f32 %v3386, %v112
    %v3616 = vmul.f32 %v3391, %v113
    %v3617 = vmul.f32 %v3396, %v114
    %v3618 = vmul.f32 %v3401, %v115
    %v3619 = vmul.f32 %v3406, %v116
    %v3620 = vmul.f32 %v3411, %v117
    %v3621 = vmul.f32 %v3416, %v118
    %v3622 = vmul.f32 %v3421, %v119
    %v3623 = vmul.f32 %v3426, %v120
    %v3624 = vmul.f32 %v3431, %v121
    %v3625 = vmul.f32 %v3436, %v122
    %v3626 = vmul.f32 %v3441, %v123
    %v3627 = vmul.f32 %v3446, %v124
    %v3628 = vmul.f32 %v3451, %v125
    %v3629 = vmul.f32 %v3456, %v126
    %v3630 = vmul.f32 %v3461, %v127
    %v3631 = vmul.f32 %v3466, %v128
    %v3632 = vmul.f32 %v3471, %v129
    %v3633 = vmul.f32 %v3476, %v130
    %v3634 = vmul.f32 %v3481, %v131
    %v3635 = vmul.f32 %v3486, %v132
    %v3636 = vmul.f32 %v3491, %v133
    %v3637 = vmul.f32 %v3496, %v134
    %v3638 = vmul.f32 %v3501, %v135
    %v3639 = vmul.f32 %v3506, %v136
    %v3640 = vmul.f32 %v3511, %v137
    %v3641 = vmul.f32 %v3516, %v138
    %v3642 = vmul.f32 %v3521, %v139
    %v3643 = vmul.f32 %v3526, %v140
    %v3644 = vmul.f32 %v3531, %v141
    %v3645 = vsel %vm146, %v3533, 0.0
    %v3646 = vsel %vm146, %v3534, 0.0
    %v3647 = vadd.f32 %v3645, %v3646
    %v3648 = vsel %vm146, %v3535, 0.0
    %v3649 = vadd.f32 %v3647, %v3648
    %v3650 = vsel %vm146, %v3536, 0.0
    %v3651 = vadd.f32 %v3649, %v3650
    %v3652 = vsel %vm146, %v3537, 0.0
    %v3653 = vadd.f32 %v3651, %v3652
    %v3654 = vsel %vm146, %v3538, 0.0
    %v3655 = vadd.f32 %v3653, %v3654
    %v3656 = vsel %vm146, %v3539, 0.0
    %v3657 = vadd.f32 %v3655, %v3656
    %v3658 = vrot.slane %v3657, 4
    %v3659 = vadd.f32 %v3657, %v3658
    %v3660 = vrot.slane %v3659, 2
    %v3661 = vadd.f32 %v3659, %v3660
    %v3662 = vrot.slane %v3661, 1
    %v3663 = vadd.f32 %v3661, %v3662
    %v3664 = vsel %vm146, %v3540, 0.0
    %v3665 = vsel %vm146, %v3541, 0.0
    %v3666 = vadd.f32 %v3664, %v3665
    %v3667 = vsel %vm146, %v3542, 0.0
    %v3668 = vadd.f32 %v3666, %v3667
    %v3669 = vsel %vm146, %v3543, 0.0
    %v3670 = vadd.f32 %v3668, %v3669
    %v3671 = vsel %vm146, %v3544, 0.0
    %v3672 = vadd.f32 %v3670, %v3671
    %v3673 = vsel %vm146, %v3545, 0.0
    %v3674 = vadd.f32 %v3672, %v3673
    %v3675 = vsel %vm146, %v3546, 0.0
    %v3676 = vadd.f32 %v3674, %v3675
    %v3677 = vrot.slane %v3676, 4
    %v3678 = vadd.f32 %v3676, %v3677
    %v3679 = vrot.slane %v3678, 2
    %v3680 = vadd.f32 %v3678, %v3679
    %v3681 = vrot.slane %v3680, 1
    %v3682 = vadd.f32 %v3680, %v3681
    %v3683 = vsel %vm146, %v3547, 0.0
    %v3684 = vsel %vm146, %v3548, 0.0
    %v3685 = vadd.f32 %v3683, %v3684
    %v3686 = vsel %vm146, %v3549, 0.0
    %v3687 = vadd.f32 %v3685, %v3686
    %v3688 = vsel %vm146, %v3550, 0.0
    %v3689 = vadd.f32 %v3687, %v3688
    %v3690 = vsel %vm146, %v3551, 0.0
    %v3691 = vadd.f32 %v3689, %v3690
    %v3692 = vsel %vm146, %v3552, 0.0
    %v3693 = vadd.f32 %v3691, %v3692
    %v3694 = vsel %vm146, %v3553, 0.0
    %v3695 = vadd.f32 %v3693, %v3694
    %v3696 = vrot.slane %v3695, 4
    %v3697 = vadd.f32 %v3695, %v3696
    %v3698 = vrot.slane %v3697, 2
    %v3699 = vadd.f32 %v3697, %v3698
    %v3700 = vrot.slane %v3699, 1
    %v3701 = vadd.f32 %v3699, %v3700
    %v3702 = vsel %vm146, %v3554, 0.0
    %v3703 = vsel %vm146, %v3555, 0.0
    %v3704 = vadd.f32 %v3702, %v3703
    %v3705 = vsel %vm146, %v3556, 0.0
    %v3706 = vadd.f32 %v3704, %v3705
    %v3707 = vsel %vm146, %v3557, 0.0
    %v3708 = vadd.f32 %v3706, %v3707
    %v3709 = vsel %vm146, %v3558, 0.0
    %v3710 = vadd.f32 %v3708, %v3709
    %v3711 = vsel %vm146, %v3559, 0.0
    %v3712 = vadd.f32 %v3710, %v3711
    %v3713 = vsel %vm146, %v3560, 0.0
    %v3714 = vadd.f32 %v3712, %v3713
    %v3715 = vrot.slane %v3714, 4
    %v3716 = vadd.f32 %v3714, %v3715
    %v3717 = vrot.slane %v3716, 2
    %v3718 = vadd.f32 %v3716, %v3717
    %v3719 = vrot.slane %v3718, 1
    %v3720 = vadd.f32 %v3718, %v3719
    %v3721 = vsel %vm146, %v3561, 0.0
    %v3722 = vsel %vm146, %v3562, 0.0
    %v3723 = vadd.f32 %v3721, %v3722
    %v3724 = vsel %vm146, %v3563, 0.0
    %v3725 = vadd.f32 %v3723, %v3724
    %v3726 = vsel %vm146, %v3564, 0.0
    %v3727 = vadd.f32 %v3725, %v3726
    %v3728 = vsel %vm146, %v3565, 0.0
    %v3729 = vadd.f32 %v3727, %v3728
    %v3730 = vsel %vm146, %v3566, 0.0
    %v3731 = vadd.f32 %v3729, %v3730
    %v3732 = vsel %vm146, %v3567, 0.0
    %v3733 = vadd.f32 %v3731, %v3732
    %v3734 = vrot.slane %v3733, 4
    %v3735 = vadd.f32 %v3733, %v3734
    %v3736 = vrot.slane %v3735, 2
    %v3737 = vadd.f32 %v3735, %v3736
    %v3738 = vrot.slane %v3737, 1
    %v3739 = vadd.f32 %v3737, %v3738
    %v3740 = vsel %vm146, %v3568, 0.0
    %v3741 = vsel %vm146, %v3569, 0.0
    %v3742 = vadd.f32 %v3740, %v3741
    %v3743 = vsel %vm146, %v3570, 0.0
    %v3744 = vadd.f32 %v3742, %v3743
    %v3745 = vsel %vm146, %v3571, 0.0
    %v3746 = vadd.f32 %v3744, %v3745
    %v3747 = vsel %vm146, %v3572, 0.0
    %v3748 = vadd.f32 %v3746, %v3747
    %v3749 = vsel %vm146, %v3573, 0.0
    %v3750 = vadd.f32 %v3748, %v3749
    %v3751 = vsel %vm146, %v3574, 0.0
    %v3752 = vadd.f32 %v3750, %v3751
    %v3753 = vrot.slane %v3752, 4
    %v3754 = vadd.f32 %v3752, %v3753
    %v3755 = vrot.slane %v3754, 2
    %v3756 = vadd.f32 %v3754, %v3755
    %v3757 = vrot.slane %v3756, 1
    %v3758 = vadd.f32 %v3756, %v3757
    %v3759 = vsel %vm146, %v3575, 0.0
    %v3760 = vsel %vm146, %v3576, 0.0
    %v3761 = vadd.f32 %v3759, %v3760
    %v3762 = vsel %vm146, %v3577, 0.0
    %v3763 = vadd.f32 %v3761, %v3762
    %v3764 = vsel %vm146, %v3578, 0.0
    %v3765 = vadd.f32 %v3763, %v3764
    %v3766 = vsel %vm146, %v3579, 0.0
    %v3767 = vadd.f32 %v3765, %v3766
    %v3768 = vsel %vm146, %v3580, 0.0
    %v3769 = vadd.f32 %v3767, %v3768
    %v3770 = vsel %vm146, %v3581, 0.0
    %v3771 = vadd.f32 %v3769, %v3770
    %v3772 = vrot.slane %v3771, 4
    %v3773 = vadd.f32 %v3771, %v3772
    %v3774 = vrot.slane %v3773, 2
    %v3775 = vadd.f32 %v3773, %v3774
    %v3776 = vrot.slane %v3775, 1
    %v3777 = vadd.f32 %v3775, %v3776
    %v3778 = vsel %vm146, %v3582, 0.0
    %v3779 = vsel %vm146, %v3583, 0.0
    %v3780 = vadd.f32 %v3778, %v3779
    %v3781 = vsel %vm146, %v3584, 0.0
    %v3782 = vadd.f32 %v3780, %v3781
    %v3783 = vsel %vm146, %v3585, 0.0
    %v3784 = vadd.f32 %v3782, %v3783
    %v3785 = vsel %vm146, %v3586, 0.0
    %v3786 = vadd.f32 %v3784, %v3785
    %v3787 = vsel %vm146, %v3587, 0.0
    %v3788 = vadd.f32 %v3786, %v3787
    %v3789 = vsel %vm146, %v3588, 0.0
    %v3790 = vadd.f32 %v3788, %v3789
    %v3791 = vrot.slane %v3790, 4
    %v3792 = vadd.f32 %v3790, %v3791
    %v3793 = vrot.slane %v3792, 2
    %v3794 = vadd.f32 %v3792, %v3793
    %v3795 = vrot.slane %v3794, 1
    %v3796 = vadd.f32 %v3794, %v3795
    %v3797 = vsel %vm146, %v3589, 0.0
    %v3798 = vsel %vm146, %v3590, 0.0
    %v3799 = vadd.f32 %v3797, %v3798
    %v3800 = vsel %vm146, %v3591, 0.0
    %v3801 = vadd.f32 %v3799, %v3800
    %v3802 = vsel %vm146, %v3592, 0.0
    %v3803 = vadd.f32 %v3801, %v3802
    %v3804 = vsel %vm146, %v3593, 0.0
    %v3805 = vadd.f32 %v3803, %v3804
    %v3806 = vsel %vm146, %v3594, 0.0
    %v3807 = vadd.f32 %v3805, %v3806
    %v3808 = vsel %vm146, %v3595, 0.0
    %v3809 = vadd.f32 %v3807, %v3808
    %v3810 = vrot.slane %v3809, 4
    %v3811 = vadd.f32 %v3809, %v3810
    %v3812 = vrot.slane %v3811, 2
    %v3813 = vadd.f32 %v3811, %v3812
    %v3814 = vrot.slane %v3813, 1
    %v3815 = vadd.f32 %v3813, %v3814
    %v3816 = vsel %vm146, %v3596, 0.0
    %v3817 = vsel %vm146, %v3597, 0.0
    %v3818 = vadd.f32 %v3816, %v3817
    %v3819 = vsel %vm146, %v3598, 0.0
    %v3820 = vadd.f32 %v3818, %v3819
    %v3821 = vsel %vm146, %v3599, 0.0
    %v3822 = vadd.f32 %v3820, %v3821
    %v3823 = vsel %vm146, %v3600, 0.0
    %v3824 = vadd.f32 %v3822, %v3823
    %v3825 = vsel %vm146, %v3601, 0.0
    %v3826 = vadd.f32 %v3824, %v3825
    %v3827 = vsel %vm146, %v3602, 0.0
    %v3828 = vadd.f32 %v3826, %v3827
    %v3829 = vrot.slane %v3828, 4
    %v3830 = vadd.f32 %v3828, %v3829
    %v3831 = vrot.slane %v3830, 2
    %v3832 = vadd.f32 %v3830, %v3831
    %v3833 = vrot.slane %v3832, 1
    %v3834 = vadd.f32 %v3832, %v3833
    %v3835 = vsel %vm146, %v3603, 0.0
    %v3836 = vsel %vm146, %v3604, 0.0
    %v3837 = vadd.f32 %v3835, %v3836
    %v3838 = vsel %vm146, %v3605, 0.0
    %v3839 = vadd.f32 %v3837, %v3838
    %v3840 = vsel %vm146, %v3606, 0.0
    %v3841 = vadd.f32 %v3839, %v3840
    %v3842 = vsel %vm146, %v3607, 0.0
    %v3843 = vadd.f32 %v3841, %v3842
    %v3844 = vsel %vm146, %v3608, 0.0
    %v3845 = vadd.f32 %v3843, %v3844
    %v3846 = vsel %vm146, %v3609, 0.0
    %v3847 = vadd.f32 %v3845, %v3846
    %v3848 = vrot.slane %v3847, 4
    %v3849 = vadd.f32 %v3847, %v3848
    %v3850 = vrot.slane %v3849, 2
    %v3851 = vadd.f32 %v3849, %v3850
    %v3852 = vrot.slane %v3851, 1
    %v3853 = vadd.f32 %v3851, %v3852
    %v3854 = vsel %vm146, %v3610, 0.0
    %v3855 = vsel %vm146, %v3611, 0.0
    %v3856 = vadd.f32 %v3854, %v3855
    %v3857 = vsel %vm146, %v3612, 0.0
    %v3858 = vadd.f32 %v3856, %v3857
    %v3859 = vsel %vm146, %v3613, 0.0
    %v3860 = vadd.f32 %v3858, %v3859
    %v3861 = vsel %vm146, %v3614, 0.0
    %v3862 = vadd.f32 %v3860, %v3861
    %v3863 = vsel %vm146, %v3615, 0.0
    %v3864 = vadd.f32 %v3862, %v3863
    %v3865 = vsel %vm146, %v3616, 0.0
    %v3866 = vadd.f32 %v3864, %v3865
    %v3867 = vrot.slane %v3866, 4
    %v3868 = vadd.f32 %v3866, %v3867
    %v3869 = vrot.slane %v3868, 2
    %v3870 = vadd.f32 %v3868, %v3869
    %v3871 = vrot.slane %v3870, 1
    %v3872 = vadd.f32 %v3870, %v3871
    %v3873 = vsel %vm146, %v3617, 0.0
    %v3874 = vsel %vm146, %v3618, 0.0
    %v3875 = vadd.f32 %v3873, %v3874
    %v3876 = vsel %vm146, %v3619, 0.0
    %v3877 = vadd.f32 %v3875, %v3876
    %v3878 = vsel %vm146, %v3620, 0.0
    %v3879 = vadd.f32 %v3877, %v3878
    %v3880 = vsel %vm146, %v3621, 0.0
    %v3881 = vadd.f32 %v3879, %v3880
    %v3882 = vsel %vm146, %v3622, 0.0
    %v3883 = vadd.f32 %v3881, %v3882
    %v3884 = vsel %vm146, %v3623, 0.0
    %v3885 = vadd.f32 %v3883, %v3884
    %v3886 = vrot.slane %v3885, 4
    %v3887 = vadd.f32 %v3885, %v3886
    %v3888 = vrot.slane %v3887, 2
    %v3889 = vadd.f32 %v3887, %v3888
    %v3890 = vrot.slane %v3889, 1
    %v3891 = vadd.f32 %v3889, %v3890
    %v3892 = vsel %vm146, %v3624, 0.0
    %v3893 = vsel %vm146, %v3625, 0.0
    %v3894 = vadd.f32 %v3892, %v3893
    %v3895 = vsel %vm146, %v3626, 0.0
    %v3896 = vadd.f32 %v3894, %v3895
    %v3897 = vsel %vm146, %v3627, 0.0
    %v3898 = vadd.f32 %v3896, %v3897
    %v3899 = vsel %vm146, %v3628, 0.0
    %v3900 = vadd.f32 %v3898, %v3899
    %v3901 = vsel %vm146, %v3629, 0.0
    %v3902 = vadd.f32 %v3900, %v3901
    %v3903 = vsel %vm146, %v3630, 0.0
    %v3904 = vadd.f32 %v3902, %v3903
    %v3905 = vrot.slane %v3904, 4
    %v3906 = vadd.f32 %v3904, %v3905
    %v3907 = vrot.slane %v3906, 2
    %v3908 = vadd.f32 %v3906, %v3907
    %v3909 = vrot.slane %v3908, 1
    %v3910 = vadd.f32 %v3908, %v3909
    %v3911 = vsel %vm146, %v3631, 0.0
    %v3912 = vsel %vm146, %v3632, 0.0
    %v3913 = vadd.f32 %v3911, %v3912
    %v3914 = vsel %vm146, %v3633, 0.0
    %v3915 = vadd.f32 %v3913, %v3914
    %v3916 = vsel %vm146, %v3634, 0.0
    %v3917 = vadd.f32 %v3915, %v3916
    %v3918 = vsel %vm146, %v3635, 0.0
    %v3919 = vadd.f32 %v3917, %v3918
    %v3920 = vsel %vm146, %v3636, 0.0
    %v3921 = vadd.f32 %v3919, %v3920
    %v3922 = vsel %vm146, %v3637, 0.0
    %v3923 = vadd.f32 %v3921, %v3922
    %v3924 = vrot.slane %v3923, 4
    %v3925 = vadd.f32 %v3923, %v3924
    %v3926 = vrot.slane %v3925, 2
    %v3927 = vadd.f32 %v3925, %v3926
    %v3928 = vrot.slane %v3927, 1
    %v3929 = vadd.f32 %v3927, %v3928
    %v3930 = vsel %vm146, %v3638, 0.0
    %v3931 = vsel %vm146, %v3639, 0.0
    %v3932 = vadd.f32 %v3930, %v3931
    %v3933 = vsel %vm146, %v3640, 0.0
    %v3934 = vadd.f32 %v3932, %v3933
    %v3935 = vsel %vm146, %v3641, 0.0
    %v3936 = vadd.f32 %v3934, %v3935
    %v3937 = vsel %vm146, %v3642, 0.0
    %v3938 = vadd.f32 %v3936, %v3937
    %v3939 = vsel %vm146, %v3643, 0.0
    %v3940 = vadd.f32 %v3938, %v3939
    %v3941 = vsel %vm146, %v3644, 0.0
    %v3942 = vadd.f32 %v3940, %v3941
    %v3943 = vrot.slane %v3942, 4
    %v3944 = vadd.f32 %v3942, %v3943
    %v3945 = vrot.slane %v3944, 2
    %v3946 = vadd.f32 %v3944, %v3945
    %v3947 = vrot.slane %v3946, 1
    %v3948 = vadd.f32 %v3946, %v3947
    %v3949 = vld [vmem:[%s5] sm:$0xff]
    %v3950 = vld [vmem:[%s5 + $0x8] sm:$0xff]
    %v3951 = vld [vmem:[%s5 + $0x10] sm:$0xff]
    %v3952 = vld [vmem:[%s5 + $0x18] sm:$0xff]
    %v3953 = vld [vmem:[%s1] sm:$0xff]
    %v3954 = vld [vmem:[%s1 + $0x8] sm:$0xff]
    %v3955 = vld [vmem:[%s6] sm:$0xff]
    %v3956 = vld [vmem:[%s6 + $0x8] sm:$0xff]
    %v3957 = vld [vmem:[%s6 + $0x10] sm:$0xff]
    %v3958 = vld [vmem:[%s6 + $0x18] sm:$0xff]
    %v3960 = vsel %vm146, %v3953, 0
    %v3963 = vsel %vm146, %v3954, 0
    %3965 = vmatprep.subr.mxu0 0.0
    %3966 = vmatpush1.msra.mxu0 %v3955
    %3967 = vmatprep.subr.mxu0 0.0
    %3968 = vmatpush1.msra.mxu0 %v3956
    %3969 = vmatprep.subr.mxu0 0.0
    %3970 = vmatpush1.msra.mxu0 %v3957
    %3971 = vmatprep.subr.mxu0 0.0
    %3972 = vmatpush1.msra.mxu0 %v3958
    %3973 = vmatprep.subr.mxu0 0.0
    %3974 = vmatpush1.msra.mxu0 0.0
    %3975 = vmatprep.subr.mxu0 0.0
    %3976 = vmatpush1.msra.mxu0 0.0
    %3977 = vmatprep.subr.mxu0 0.0
    %3978 = vmatpush1.msra.mxu0 0.0
    %3979 = vmatprep.subr.mxu0 0.0
    %3980 = vmatpush1.msra.mxu0 0.0
    %3981 = vmatprep.subr.mxu0 0.0
    %3982 = vmatpush1.msra.mxu0 0.0
    %3983 = vmatprep.subr.mxu0 0.0
    %3984 = vmatpush1.msra.mxu0 0.0
    %3985 = vmatprep.subr.mxu0 0.0
    %3986 = vmatpush1.msra.mxu0 0.0
    %3987 = vmatprep.subr.mxu0 0.0
    %3988 = vmatpush1.msra.mxu0 0.0
    %3989 = vmatprep.subr.mxu0 0.0
    %3990 = vmatpush1.msra.mxu0 0.0
    %3991 = vmatprep.subr.mxu0 0.0
    %3992 = vmatpush1.msra.mxu0 0.0
    %3993 = vmatprep.subr.mxu0 0.0
    %3994 = vmatpush1.msra.mxu0 0.0
    %3995 = vmatprep.subr.mxu0 0.0
    %3996 = vmatpush1.msra.mxu0 0.0
    %3997 = vmatprep.subr.mxu0 0.0
    %3998 = vmatpush1.msra.mxu0 0.0
    %3999 = vmatprep.subr.mxu0 0.0
    %4000 = vmatpush1.msra.mxu0 0.0
    %4001 = vmatprep.subr.mxu0 0.0
    %4002 = vmatpush1.msra.mxu0 0.0
    %4003 = vmatprep.subr.mxu0 0.0
    %4004 = vmatpush1.msra.mxu0 0.0
    %4005 = vmatprep.subr.mxu0 0.0
    %4006 = vmatpush1.msra.mxu0 0.0
    %4007 = vmatprep.subr.mxu0 0.0
    %4008 = vmatpush1.msra.mxu0 0.0
    %4009 = vmatprep.subr.mxu0 0.0
    %4010 = vmatpush1.msra.mxu0 0.0
    %4011 = vmatprep.subr.mxu0 0.0
    %4012 = vmatpush1.msra.mxu0 0.0
    %4013 = vmatprep.subr.mxu0 0.0
    %4014 = vmatpush1.msra.mxu0 0.0
    %4015 = vmatprep.subr.mxu0 0.0
    %4016 = vmatpush1.msra.mxu0 0.0
    %4017 = vmatprep.subr.mxu0 0.0
    %4018 = vmatpush1.msra.mxu0 0.0
    %4019 = vmatprep.subr.mxu0 0.0
    %4020 = vmatpush1.msra.mxu0 0.0
    %4021 = vmatprep.subr.mxu0 0.0
    %4022 = vmatpush1.msra.mxu0 0.0
    %4023 = vmatprep.subr.mxu0 0.0
    %4024 = vmatpush1.msra.mxu0 0.0
    %4025 = vmatprep.subr.mxu0 0.0
    %4026 = vmatpush1.msra.mxu0 0.0
    %4027 = vmatprep.subr.mxu0 0.0
    %4028 = vmatpush1.msra.mxu0 0.0
    %4029 = vmatprep.mubr.f32.mxu0 0.0
    %4030 = vmatmul.mubr.f32.gmra.mrb[0].mxu0 %v3960
    %v4031 = vpop.f32.mrb[0].mxu0
    %v4032 = vadd.f32 0.0, %v4031
    %v4033 = vpop.f32.mrb[0].mxu0
    %4034 = vmatprep.mubr.f32.mxu0 0.0
    %4035 = vmatmul.mubr.f32.gmra.mrb[0].mxu0 %v3963
    %v4036 = vpop.f32.mrb[0].mxu0
    %v4037 = vadd.f32 0.0, %v4036
    %v4038 = vpop.f32.mrb[0].mxu0
    %4039 = vdwg.mxu0
    %vm4056 = vcmask 1041409
    %v4057 = vsel %vm4056, %v3682, %v3663
    %vm4058 = vcmask 1042434
    %v4059 = vsel %vm4058, %v3701, %v4057
    %vm4060 = vcmask 1043459
    %v4061 = vsel %vm4060, %v3720, %v4059
    %vm4062 = vcmask 1044484
    %v4063 = vsel %vm4062, %v3739, %v4061
    %vm4064 = vcmask 1045509
    %v4065 = vsel %vm4064, %v3758, %v4063
    %vm4066 = vcmask 1046534
    %v4067 = vsel %vm4066, %v3777, %v4065
    %vm4068 = vcmask 1047559
    %v4069 = vsel %vm4068, %v3796, %v4067
    %v4070 = vsel %vm4056, %v3834, %v3815
    %v4071 = vsel %vm4058, %v3853, %v4070
    %v4072 = vsel %vm4060, %v3872, %v4071
    %v4073 = vsel %vm4062, %v3891, %v4072
    %v4074 = vsel %vm4064, %v3910, %v4073
    %v4075 = vsel %vm4066, %v3929, %v4074
    %v4076 = vsel %vm4068, %v3948, %v4075
    %v4077 = vsel %vm146, %v4069, 0
    %v4079 = vsel %vm146, %v4076, 0
    %4081 = vmatprep.subr.mxu0 0.0
    %4082 = vmatpush1.msra.mxu0 %v3949
    %4083 = vmatprep.subr.mxu0 0.0
    %4084 = vmatpush1.msra.mxu0 %v3950
    %4085 = vmatprep.subr.mxu0 0.0
    %4086 = vmatpush1.msra.mxu0 %v3951
    %4087 = vmatprep.subr.mxu0 0.0
    %4088 = vmatpush1.msra.mxu0 %v3952
    %4089 = vmatprep.subr.mxu0 0.0
    %4090 = vmatpush1.msra.mxu0 0.0
    %4091 = vmatprep.subr.mxu0 0.0
    %4092 = vmatpush1.msra.mxu0 0.0
    %4093 = vmatprep.subr.mxu0 0.0
    %4094 = vmatpush1.msra.mxu0 0.0
    %4095 = vmatprep.subr.mxu0 0.0
    %4096 = vmatpush1.msra.mxu0 0.0
    %4097 = vmatprep.subr.mxu0 0.0
    %4098 = vmatpush1.msra.mxu0 0.0
    %4099 = vmatprep.subr.mxu0 0.0
    %4100 = vmatpush1.msra.mxu0 0.0
    %4101 = vmatprep.subr.mxu0 0.0
    %4102 = vmatpush1.msra.mxu0 0.0
    %4103 = vmatprep.subr.mxu0 0.0
    %4104 = vmatpush1.msra.mxu0 0.0
    %4105 = vmatprep.subr.mxu0 0.0
    %4106 = vmatpush1.msra.mxu0 0.0
    %4107 = vmatprep.subr.mxu0 0.0
    %4108 = vmatpush1.msra.mxu0 0.0
    %4109 = vmatprep.subr.mxu0 0.0
    %4110 = vmatpush1.msra.mxu0 0.0
    %4111 = vmatprep.subr.mxu0 0.0
    %4112 = vmatpush1.msra.mxu0 0.0
    %4113 = vmatprep.subr.mxu0 0.0
    %4114 = vmatpush1.msra.mxu0 0.0
    %4115 = vmatprep.subr.mxu0 0.0
    %4116 = vmatpush1.msra.mxu0 0.0
    %4117 = vmatprep.subr.mxu0 0.0
    %4118 = vmatpush1.msra.mxu0 0.0
    %4119 = vmatprep.subr.mxu0 0.0
    %4120 = vmatpush1.msra.mxu0 0.0
    %4121 = vmatprep.subr.mxu0 0.0
    %4122 = vmatpush1.msra.mxu0 0.0
    %4123 = vmatprep.subr.mxu0 0.0
    %4124 = vmatpush1.msra.mxu0 0.0
    %4125 = vmatprep.subr.mxu0 0.0
    %4126 = vmatpush1.msra.mxu0 0.0
    %4127 = vmatprep.subr.mxu0 0.0
    %4128 = vmatpush1.msra.mxu0 0.0
    %4129 = vmatprep.subr.mxu0 0.0
    %4130 = vmatpush1.msra.mxu0 0.0
    %4131 = vmatprep.subr.mxu0 0.0
    %4132 = vmatpush1.msra.mxu0 0.0
    %4133 = vmatprep.subr.mxu0 0.0
    %4134 = vmatpush1.msra.mxu0 0.0
    %4135 = vmatprep.subr.mxu0 0.0
    %4136 = vmatpush1.msra.mxu0 0.0
    %4137 = vmatprep.subr.mxu0 0.0
    %4138 = vmatpush1.msra.mxu0 0.0
    %4139 = vmatprep.subr.mxu0 0.0
    %4140 = vmatpush1.msra.mxu0 0.0
    %4141 = vmatprep.subr.mxu0 0.0
    %4142 = vmatpush1.msra.mxu0 0.0
    %4143 = vmatprep.subr.mxu0 0.0
    %4144 = vmatpush1.msra.mxu0 0.0
    %4145 = vmatprep.mubr.f32.mxu0 0.0
    %4146 = vmatmul.mubr.f32.gmra.mrb[0].mxu0 %v4077
    %v4147 = vpop.f32.mrb[0].mxu0
    %v4148 = vadd.f32 %v4032, %v4147
    %v4149 = vpop.f32.mrb[0].mxu0
    %4150 = vmatprep.mubr.f32.mxu0 0.0
    %4151 = vmatmul.mubr.f32.gmra.mrb[0].mxu0 %v4079
    %v4152 = vpop.f32.mrb[0].mxu0
    %v4153 = vadd.f32 %v4037, %v4152
    %v4154 = vpop.f32.mrb[0].mxu0
    %4155 = vdwg.mxu0
    %v4156 = vld [vmem:[%s7] sm:$0x1]
    %v4158 = vlaneseq
    %v4159 = vshrl.u32 %v4158, 7
    %v4160 = vsub.s32 0, %v4159
    %v4161 = vrot.slane %v4156, %v4160
    %v4163 = vadd.f32 %v4148, %v4161
    %v4164 = vadd.f32 %v4153, %v4161
    %4165 = vst [vmem:[#allocation2] sm:$0xff] %v4163
    %4166 = vst [vmem:[#allocation2 + $0x8] sm:$0xff] %v4164
    // Predicated region
    $region34: #{tpu_custom_call.1} parent=1 // pred_check
      _
    $region35: #{tpu_custom_call.1} parent=1 // pred_check_branch
      %4168 = sbr.rel (0) target = $region37
    $region36: #{tpu_custom_call.1} parent=1 // pred_region
      %s4170 = ssub.s32 256, 256
      %4171 = vsyncadd [#allocation3], %s4170
      %s4172 = sshll.u32 [#allocation2], 4
      %s4173 = int_to_ptr.vmem [resolvable:$true] %s4172
      %4178 = dma.vmem_to_hbm [thread:$0]  %s4173, 256, %s8, [#allocation3], 128, 128, 8
    $region37: #{tpu_custom_call.1} parent=1 // pred_fallthru
      _
    // Predicated region
    $region38: #{tpu_custom_call.1} parent=1 // pred_check
      _
    $region39: #{tpu_custom_call.1} parent=1 // pred_check_branch
      %4180 = sbr.rel (0) target = $region41
    $region40: #{tpu_custom_call.1} parent=1 // pred_region
      %4181 = dma.done [#allocation3], 256
    $region41: #{tpu_custom_call.1} parent=1 // pred_fallthru
      _
    %4182 = vsyncpa [#allocation3], 1

</llo_original>
